<compile_context>
chip_gen: v5e
topology: v5e:2x2
jax: 0.10.0
libtpu: 0.0.40
codegen_flags: <defaults>
</compile_context>

<pallas_src>
import jax
import jax.numpy as jnp
from jax import lax
from jax.experimental import pallas as pl
from jax.experimental.pallas import tpu as pltpu


def _round_up(x, m):
    return (x + m - 1) // m * m


def _im2col(x):
    """x: (TB, H, W, Cin) -> (TB*H*W, 9*Cin) value; 3x3 taps, 'SAME' zero padding.

    Built entirely in vregs: pad via concat with zeros, 9 static slices,
    one lane-concat, one leading-dim collapse (minor dim unchanged).
    """
    TB, H, W, Cin = x.shape
    zr = jnp.zeros((TB, 1, W, Cin), x.dtype)
    xp = jnp.concatenate([zr, x, zr], axis=1)                      # pad H
    zc = jnp.zeros((TB, H + 2, 1, Cin), x.dtype)
    xp = jnp.concatenate([zc, xp, zc], axis=2)                     # pad W
    taps = [xp[:, dy:dy + H, dx:dx + W, :]
            for dy in range(3) for dx in range(3)]
    col = jnp.concatenate(taps, axis=-1)                           # (TB,H,W,9*Cin)
    return col.reshape(TB * H * W, 9 * Cin)


def dqn_kernel(board_ref, w1_ref, b1_ref, w2_ref, b2_ref,
               fw1_ref, fb1_ref, fw2_ref, fb2_ref, out_ref):
    # board_ref: (TB, H, W) int32          values in [0, grid_size]
    # w1_ref:    (9*C,  C1) bf16           C = grid_size + 1, C1 = 32
    # w2_ref:    (9*C1, C2) bf16           C2 = 64
    # fw1_ref:   (H*W*C2, F1) bf16         fc1 weight in NHWC flatten order
    # fw2_ref:   (F1, A_pad) bf16          fc2 weight, N padded to 128 lanes
    # biases:    (1, N) f32
    TB, H, W = board_ref.shape
    C1 = w1_ref.shape[1]
    C = w1_ref.shape[0] // 9
    C2 = w2_ref.shape[1]

    # ---- one-hot encode along the channel (lane) axis (replaces torch scatter_) ----
    # compare/select in f32 (v5e-safe); emit bf16 since it only feeds the MXU.
    board = board_ref[...]                                          # (TB, H, W) int32
    cls = lax.broadcasted_iota(jnp.int32, (TB, H, W, C), 3)
    one_hot = jnp.where(board[..., None] == cls, 1.0, 0.0).astype(jnp.bfloat16)

    # ---- conv1: ONE (TB*H*W, 9*C) @ (9*C, C1) matmul; bias + ReLU in f32 ----
    col1 = _im2col(one_hot)
    x1 = jnp.dot(col1, w1_ref[...], preferred_element_type=jnp.float32)
    x1 = jnp.maximum(x1 + b1_ref[...], 0.0)                         # (TB*H*W, C1) f32

    # ---- conv2: ONE (TB*H*W, 9*C1) @ (9*C1, C2) matmul ----
    col2 = _im2col(x1.astype(jnp.bfloat16).reshape(TB, H, W, C1))
    x2 = jnp.dot(col2, w2_ref[...], preferred_element_type=jnp.float32)
    x2 = jnp.maximum(x2 + b2_ref[...], 0.0)                         # (TB*H*W, C2) f32

    # ---- NHWC flatten as a lane-dense value (no scratch, no masked stores) ----
    x2r = x2.astype(jnp.bfloat16).reshape(TB, H * W, C2)
    flat = jnp.concatenate([x2r[:, p, :] for p in range(H * W)], axis=-1)  # (TB, H*W*C2)

    # ---- fc1: ONE (TB, H*W*C2) @ (H*W*C2, F1) matmul + bias + ReLU ----
    h1 = jnp.dot(flat, fw1_ref[...], preferred_element_type=jnp.float32)
    h1 = jnp.maximum(h1 + fb1_ref[...], 0.0)

    # ---- fc2 -> q values (N padded to 128 lanes; sliced in the wrapper) ----
    out_ref[...] = jnp.dot(h1.astype(jnp.bfloat16), fw2_ref[...],
                           preferred_element_type=jnp.float32) + fb2_ref[...]


def dqn_forward(board, w1, b1, w2, b2, fw1, fb1, fw2, fb2, *, num_actions):
    """board: (B, H, W) int (or (H, W)).  Returns q_values (B, num_actions) f32."""
    if board.ndim == 2:
        board = board[None]
    board = board.astype(jnp.int32)
    B, H, W = board.shape
    C = w1.shape[0] // 9
    C1 = w1.shape[1]
    C2 = w2.shape[1]
    F1 = fw1.shape[1]
    A_pad = fw2.shape[1]

    # Batch tile: TB*H*W >= 128 fills the MXU M-dim for the conv matmuls; at
    # large B several "parallel" grid steps let v7x's two TensorCores split the
    # batch.  Per-block VMEM stays well under the scoped default even at TB=128.
    TB = 128 if B >= 128 else _round_up(B, 8)
    B_pad = _round_up(B, TB)
    if B_pad != B:
        board = jnp.concatenate(
            [board, jnp.zeros((B_pad - B, H, W), jnp.int32)], axis=0)

    def const2d(shape):
        return pl.BlockSpec(shape, lambda i: (0, 0))   # VMEM-resident across tiles

    q = pl.pallas_call(
        dqn_kernel,
        out_shape=jax.ShapeDtypeStruct((B_pad, A_pad), jnp.float32),
        grid=(B_pad // TB,),
        in_specs=[
            pl.BlockSpec((TB, H, W), lambda i: (i, 0, 0)),   # board: batch-blocked
            const2d((9 * C, C1)), const2d((1, C1)),          # conv1 w/b
            const2d((9 * C1, C2)), const2d((1, C2)),         # conv2 w/b
            const2d((H * W * C2, F1)), const2d((1, F1)),     # fc1 w/b
            const2d((F1, A_pad)), const2d((1, A_pad)),       # fc2 w/b (128-lane padded)
        ],
        out_specs=pl.BlockSpec((TB, A_pad), lambda i: (i, 0)),
        compiler_params=pltpu.CompilerParams(
            dimension_semantics=("parallel",)),
    )(board, w1, b1, w2, b2, fw1, fb1, fw2, fb2)
    return q[:B, :num_actions]


def prepare_params(conv1_w, conv1_b, conv2_w, conv2_b,
                   fc1_w, fc1_b, fc2_w, fc2_b, H, W):
    """PyTorch layouts -> kernel layouts (bf16 weights, f32 biases, padded fc2)."""
    C1 = conv1_w.shape[0]
    C = conv1_w.shape[1]
    C2 = conv2_w.shape[0]
    F1 = fc1_w.shape[0]
    A = fc2_w.shape[0]
    A_pad = _round_up(A, 128)

    # conv weights (O,I,kH,kW) -> (kH,kW,I,O) -> (9*I, O) to match im2col rows.
    w1 = jnp.transpose(conv1_w, (2, 3, 1, 0)).reshape(9 * C, C1).astype(jnp.bfloat16)
    w2 = jnp.transpose(conv2_w, (2, 3, 1, 0)).reshape(9 * C1, C2).astype(jnp.bfloat16)
    # fc1 weight: (F1, C2*H*W) in (c,h,w) order -> (H*W*C2, F1) for NHWC flatten.
    fw1 = jnp.transpose(fc1_w.reshape(F1, C2, H, W),
                        (2, 3, 1, 0)).reshape(H * W * C2, F1).astype(jnp.bfloat16)
    # fc2 weight/bias padded to 128 output lanes (sliced back in the wrapper).
    fw2 = jnp.zeros((F1, A_pad), jnp.bfloat16).at[:, :A].set(
        fc2_w.T.astype(jnp.bfloat16))
    b1 = conv1_b.reshape(1, -1).astype(jnp.float32)
    b2 = conv2_b.reshape(1, -1).astype(jnp.float32)
    fb1 = fc1_b.reshape(1, -1).astype(jnp.float32)
    fb2 = jnp.zeros((1, A_pad), jnp.float32).at[:, :A].set(fc2_b.astype(jnp.float32))
    return w1, b1, w2, b2, fw1, fb1, fw2, fb2


def reference_forward(board, conv1_w, conv1_b, conv2_w, conv2_b,
                      fc1_w, fc1_b, fc2_w, fc2_b):
    """Pure-JAX reference mirroring the PyTorch forward (NCHW, full f32)."""
    if board.ndim == 2:
        board = board[None]
    C = conv1_w.shape[1]
    one_hot = jax.nn.one_hot(board, C, axis=1, dtype=jnp.float32)        # (B,C,H,W)
    dn1 = lax.conv_dimension_numbers(one_hot.shape, conv1_w.shape,
                                     ('NCHW', 'OIHW', 'NCHW'))
    x = lax.conv_general_dilated(one_hot, conv1_w, (1, 1), 'SAME',
                                 dimension_numbers=dn1) + conv1_b[None, :, None, None]
    x = jax.nn.relu(x)
    dn2 = lax.conv_dimension_numbers(x.shape, conv2_w.shape,
                                     ('NCHW', 'OIHW', 'NCHW'))
    x = lax.conv_general_dilated(x, conv2_w, (1, 1), 'SAME',
                                 dimension_numbers=dn2) + conv2_b[None, :, None, None]
    x = jax.nn.relu(x)
    x = x.reshape(x.shape[0], -1)                                        # NCHW flatten
    x = jax.nn.relu(x @ fc1_w.T + fc1_b)
    return x @ fc2_w.T + fc2_b


if __name__ == "__main__":
    grid_size = 4
    num_actions = grid_size * grid_size * grid_size   # 64 (row, col, digit)
    B, H, W = 2, grid_size, grid_size
    C = grid_size + 1                                  # 5 input channels

    key = jax.random.PRNGKey(0)
    ks = jax.random.split(key, 9)

    # Deterministic synthetic parameters, in PyTorch layouts.
    conv1_w = jax.random.normal(ks[0], (32, C, 3, 3), jnp.float32) * 0.1   # (O,I,kH,kW)
    conv1_b = jax.random.normal(ks[1], (32,), jnp.float32) * 0.1
    conv2_w = jax.random.normal(ks[2], (64, 32, 3, 3), jnp.float32) * 0.05
    conv2_b = jax.random.normal(ks[3], (64,), jnp.float32) * 0.1
    fc1_w = jax.random.normal(ks[4], (256, 64 * H * W), jnp.float32) * 0.02  # (out,in)
    fc1_b = jax.random.normal(ks[5], (256,), jnp.float32) * 0.1
    fc2_w = jax.random.normal(ks[6], (num_actions, 256), jnp.float32) * 0.05
    fc2_b = jax.random.normal(ks[7], (num_actions,), jnp.float32) * 0.1

    # Example board: integers in [0, grid_size] (0 = empty cell).
    board = jax.random.randint(ks[8], (B, H, W), 0, grid_size + 1, dtype=jnp.int32)

    params = prepare_params(conv1_w, conv1_b, conv2_w, conv2_b,
                            fc1_w, fc1_b, fc2_w, fc2_b, H, W)
    q = dqn_forward(board, *params, num_actions=num_actions)
    q = jax.block_until_ready(q)

    q_ref = reference_forward(board, conv1_w, conv1_b, conv2_w, conv2_b,
                              fc1_w, fc1_b, fc2_w, fc2_b)
    assert q.shape == (B, num_actions)
    assert jnp.allclose(q, q_ref, rtol=1e-2, atol=1e-2), "mismatch vs reference"

    print("KERNEL_OK")
</pallas_src>

<mosaic_0001>
module attributes {stable_mosaic.version = 11 : i64} {
  func.func @dqn_kernel(%arg0: i32, %arg1: memref<8x4x4xi32, #tpu.memory_space<vmem>>, %arg2: memref<45x32xbf16, #tpu.memory_space<vmem>>, %arg3: memref<1x32xf32, #tpu.memory_space<vmem>>, %arg4: memref<288x64xbf16, #tpu.memory_space<vmem>>, %arg5: memref<1x64xf32, #tpu.memory_space<vmem>>, %arg6: memref<1024x256xbf16, #tpu.memory_space<vmem>>, %arg7: memref<1x256xf32, #tpu.memory_space<vmem>>, %arg8: memref<256x128xbf16, #tpu.memory_space<vmem>>, %arg9: memref<1x128xf32, #tpu.memory_space<vmem>>, %arg10: memref<8x128xf32, #tpu.memory_space<vmem>>) attributes {dimension_semantics = [#tpu.dimension_semantics<parallel>], iteration_bounds = array<i64: 1>, scalar_prefetch = 0 : i64, scratch_operands = 0 : i64, tpu.core_type = #tpu.core_type<tc>, window_params = [{transform_indices = @transform_0, window_bounds = array<i64: 8, 4, 4>}, {pipeline_mode = #tpu.pipeline_mode<synchronous>, transform_indices = @transform_1, window_bounds = array<i64: 45, 32>}, {pipeline_mode = #tpu.pipeline_mode<synchronous>, transform_indices = @transform_2, window_bounds = array<i64: 1, 32>}, {pipeline_mode = #tpu.pipeline_mode<synchronous>, transform_indices = @transform_3, window_bounds = array<i64: 288, 64>}, {pipeline_mode = #tpu.pipeline_mode<synchronous>, transform_indices = @transform_4, window_bounds = array<i64: 1, 64>}, {pipeline_mode = #tpu.pipeline_mode<synchronous>, transform_indices = @transform_5, window_bounds = array<i64: 1024, 256>}, {pipeline_mode = #tpu.pipeline_mode<synchronous>, transform_indices = @transform_6, window_bounds = array<i64: 1, 256>}, {pipeline_mode = #tpu.pipeline_mode<synchronous>, transform_indices = @transform_7, window_bounds = array<i64: 256, 128>}, {pipeline_mode = #tpu.pipeline_mode<synchronous>, transform_indices = @transform_8, window_bounds = array<i64: 1, 128>}, {transform_indices = @transform_9, window_bounds = array<i64: 8, 128>}]} {
    %c0 = arith.constant 0 : index
    %c0_0 = arith.constant 0 : index
    %c0_1 = arith.constant 0 : index
    %0 = vector.load %arg1[%c0, %c0_0, %c0_1] : memref<8x4x4xi32, #tpu.memory_space<vmem>>, vector<8x4x4xi32>
    %1 = tpu.iota {dimensions = array<i32: 3>} : vector<8x4x4x5xi32>
    %2 = vector.shape_cast %0 : vector<8x4x4xi32> to vector<8x4x4x1xi32>
    %3 = vector.broadcast %2 : vector<8x4x4x1xi32> to vector<8x4x4x5xi32>
    %4 = arith.cmpi eq, %3, %1 : vector<8x4x4x5xi32>
    %cst = arith.constant 1.000000e+00 : f32
    %cst_2 = arith.constant 0.000000e+00 : f32
    %5 = vector.broadcast %cst : f32 to vector<8x4x4x5xf32>
    %6 = vector.broadcast %cst_2 : f32 to vector<8x4x4x5xf32>
    %7 = arith.select %4, %5, %6 : vector<8x4x4x5xi1>, vector<8x4x4x5xf32>
    %8 = arith.truncf %7 : vector<8x4x4x5xf32> to vector<8x4x4x5xbf16>
    %cst_3 = arith.constant 0.000000e+00 : bf16
    %9 = vector.broadcast %cst_3 : bf16 to vector<8x1x4x5xbf16>
    %10 = tpu.concatenate %9, %8, %9 in 1 : vector<8x1x4x5xbf16>, vector<8x4x4x5xbf16>, vector<8x1x4x5xbf16> -> vector<8x6x4x5xbf16>
    %cst_4 = arith.constant 0.000000e+00 : bf16
    %11 = vector.broadcast %cst_4 : bf16 to vector<8x6x1x5xbf16>
    %12 = tpu.concatenate %11, %10, %11 in 2 : vector<8x6x1x5xbf16>, vector<8x6x4x5xbf16>, vector<8x6x1x5xbf16> -> vector<8x6x6x5xbf16>
    %13 = vector.extract_strided_slice %12 {offsets = [0, 0, 0, 0], sizes = [8, 4, 4, 5], strides = [1, 1, 1, 1]} : vector<8x6x6x5xbf16> to vector<8x4x4x5xbf16>
    %14 = vector.extract_strided_slice %12 {offsets = [0, 0, 1, 0], sizes = [8, 4, 4, 5], strides = [1, 1, 1, 1]} : vector<8x6x6x5xbf16> to vector<8x4x4x5xbf16>
    %15 = vector.extract_strided_slice %12 {offsets = [0, 0, 2, 0], sizes = [8, 4, 4, 5], strides = [1, 1, 1, 1]} : vector<8x6x6x5xbf16> to vector<8x4x4x5xbf16>
    %16 = vector.extract_strided_slice %12 {offsets = [0, 1, 0, 0], sizes = [8, 4, 4, 5], strides = [1, 1, 1, 1]} : vector<8x6x6x5xbf16> to vector<8x4x4x5xbf16>
    %17 = vector.extract_strided_slice %12 {offsets = [0, 1, 1, 0], sizes = [8, 4, 4, 5], strides = [1, 1, 1, 1]} : vector<8x6x6x5xbf16> to vector<8x4x4x5xbf16>
    %18 = vector.extract_strided_slice %12 {offsets = [0, 1, 2, 0], sizes = [8, 4, 4, 5], strides = [1, 1, 1, 1]} : vector<8x6x6x5xbf16> to vector<8x4x4x5xbf16>
    %19 = vector.extract_strided_slice %12 {offsets = [0, 2, 0, 0], sizes = [8, 4, 4, 5], strides = [1, 1, 1, 1]} : vector<8x6x6x5xbf16> to vector<8x4x4x5xbf16>
    %20 = vector.extract_strided_slice %12 {offsets = [0, 2, 1, 0], sizes = [8, 4, 4, 5], strides = [1, 1, 1, 1]} : vector<8x6x6x5xbf16> to vector<8x4x4x5xbf16>
    %21 = vector.extract_strided_slice %12 {offsets = [0, 2, 2, 0], sizes = [8, 4, 4, 5], strides = [1, 1, 1, 1]} : vector<8x6x6x5xbf16> to vector<8x4x4x5xbf16>
    %22 = tpu.concatenate %13, %14, %15, %16, %17, %18, %19, %20, %21 in 3 : vector<8x4x4x5xbf16>, vector<8x4x4x5xbf16>, vector<8x4x4x5xbf16>, vector<8x4x4x5xbf16>, vector<8x4x4x5xbf16>, vector<8x4x4x5xbf16>, vector<8x4x4x5xbf16>, vector<8x4x4x5xbf16>, vector<8x4x4x5xbf16> -> vector<8x4x4x45xbf16>
    %23 = vector.shape_cast %22 : vector<8x4x4x45xbf16> to vector<128x45xbf16>
    %c0_5 = arith.constant 0 : index
    %c0_6 = arith.constant 0 : index
    %24 = vector.load %arg2[%c0_5, %c0_6] : memref<45x32xbf16, #tpu.memory_space<vmem>>, vector<45x32xbf16>
    %cst_7 = arith.constant dense<0.000000e+00> : vector<128x32xf32>
    %25 = tpu.matmul %23, %24, %cst_7 {dimension_numbers = #tpu.dot_dimension_numbers<[1], [0], [0], [1], [0, 0, 1, 1], [], []>} : vector<128x45xbf16>, vector<45x32xbf16>, vector<128x32xf32> -> vector<128x32xf32>
    %c0_8 = arith.constant 0 : index
    %c0_9 = arith.constant 0 : index
    %26 = vector.load %arg3[%c0_8, %c0_9] : memref<1x32xf32, #tpu.memory_space<vmem>>, vector<1x32xf32>
    %27 = vector.broadcast %26 : vector<1x32xf32> to vector<128x32xf32>
    %28 = arith.addf %25, %27 : vector<128x32xf32>
    %cst_10 = arith.constant 0.000000e+00 : f32
    %29 = vector.broadcast %cst_10 : f32 to vector<128x32xf32>
    %30 = arith.maximumf %28, %29 : vector<128x32xf32>
    %31 = arith.truncf %30 : vector<128x32xf32> to vector<128x32xbf16>
    %32 = vector.shape_cast %31 : vector<128x32xbf16> to vector<8x4x4x32xbf16>
    %cst_11 = arith.constant 0.000000e+00 : bf16
    %33 = vector.broadcast %cst_11 : bf16 to vector<8x1x4x32xbf16>
    %34 = tpu.concatenate %33, %32, %33 in 1 : vector<8x1x4x32xbf16>, vector<8x4x4x32xbf16>, vector<8x1x4x32xbf16> -> vector<8x6x4x32xbf16>
    %cst_12 = arith.constant 0.000000e+00 : bf16
    %35 = vector.broadcast %cst_12 : bf16 to vector<8x6x1x32xbf16>
    %36 = tpu.concatenate %35, %34, %35 in 2 : vector<8x6x1x32xbf16>, vector<8x6x4x32xbf16>, vector<8x6x1x32xbf16> -> vector<8x6x6x32xbf16>
    %37 = vector.extract_strided_slice %36 {offsets = [0, 0, 0, 0], sizes = [8, 4, 4, 32], strides = [1, 1, 1, 1]} : vector<8x6x6x32xbf16> to vector<8x4x4x32xbf16>
    %38 = vector.extract_strided_slice %36 {offsets = [0, 0, 1, 0], sizes = [8, 4, 4, 32], strides = [1, 1, 1, 1]} : vector<8x6x6x32xbf16> to vector<8x4x4x32xbf16>
    %39 = vector.extract_strided_slice %36 {offsets = [0, 0, 2, 0], sizes = [8, 4, 4, 32], strides = [1, 1, 1, 1]} : vector<8x6x6x32xbf16> to vector<8x4x4x32xbf16>
    %40 = vector.extract_strided_slice %36 {offsets = [0, 1, 0, 0], sizes = [8, 4, 4, 32], strides = [1, 1, 1, 1]} : vector<8x6x6x32xbf16> to vector<8x4x4x32xbf16>
    %41 = vector.extract_strided_slice %36 {offsets = [0, 1, 1, 0], sizes = [8, 4, 4, 32], strides = [1, 1, 1, 1]} : vector<8x6x6x32xbf16> to vector<8x4x4x32xbf16>
    %42 = vector.extract_strided_slice %36 {offsets = [0, 1, 2, 0], sizes = [8, 4, 4, 32], strides = [1, 1, 1, 1]} : vector<8x6x6x32xbf16> to vector<8x4x4x32xbf16>
    %43 = vector.extract_strided_slice %36 {offsets = [0, 2, 0, 0], sizes = [8, 4, 4, 32], strides = [1, 1, 1, 1]} : vector<8x6x6x32xbf16> to vector<8x4x4x32xbf16>
    %44 = vector.extract_strided_slice %36 {offsets = [0, 2, 1, 0], sizes = [8, 4, 4, 32], strides = [1, 1, 1, 1]} : vector<8x6x6x32xbf16> to vector<8x4x4x32xbf16>
    %45 = vector.extract_strided_slice %36 {offsets = [0, 2, 2, 0], sizes = [8, 4, 4, 32], strides = [1, 1, 1, 1]} : vector<8x6x6x32xbf16> to vector<8x4x4x32xbf16>
    %46 = tpu.concatenate %37, %38, %39, %40, %41, %42, %43, %44, %45 in 3 : vector<8x4x4x32xbf16>, vector<8x4x4x32xbf16>, vector<8x4x4x32xbf16>, vector<8x4x4x32xbf16>, vector<8x4x4x32xbf16>, vector<8x4x4x32xbf16>, vector<8x4x4x32xbf16>, vector<8x4x4x32xbf16>, vector<8x4x4x32xbf16> -> vector<8x4x4x288xbf16>
    %47 = vector.shape_cast %46 : vector<8x4x4x288xbf16> to vector<128x288xbf16>
    %c0_13 = arith.constant 0 : index
    %c0_14 = arith.constant 0 : index
    %48 = vector.load %arg4[%c0_13, %c0_14] : memref<288x64xbf16, #tpu.memory_space<vmem>>, vector<288x64xbf16>
    %cst_15 = arith.constant dense<0.000000e+00> : vector<128x64xf32>
    %49 = tpu.matmul %47, %48, %cst_15 {dimension_numbers = #tpu.dot_dimension_numbers<[1], [0], [0], [1], [0, 0, 1, 1], [], []>} : vector<128x288xbf16>, vector<288x64xbf16>, vector<128x64xf32> -> vector<128x64xf32>
    %c0_16 = arith.constant 0 : index
    %c0_17 = arith.constant 0 : index
    %50 = vector.load %arg5[%c0_16, %c0_17] : memref<1x64xf32, #tpu.memory_space<vmem>>, vector<1x64xf32>
    %51 = vector.broadcast %50 : vector<1x64xf32> to vector<128x64xf32>
    %52 = arith.addf %49, %51 : vector<128x64xf32>
    %cst_18 = arith.constant 0.000000e+00 : f32
    %53 = vector.broadcast %cst_18 : f32 to vector<128x64xf32>
    %54 = arith.maximumf %52, %53 : vector<128x64xf32>
    %55 = arith.truncf %54 : vector<128x64xf32> to vector<128x64xbf16>
    %56 = vector.shape_cast %55 : vector<128x64xbf16> to vector<8x16x64xbf16>
    %57 = vector.extract_strided_slice %56 {offsets = [0, 0, 0], sizes = [8, 1, 64], strides = [1, 1, 1]} : vector<8x16x64xbf16> to vector<8x1x64xbf16>
    %58 = vector.shape_cast %57 : vector<8x1x64xbf16> to vector<8x64xbf16>
    %59 = vector.extract_strided_slice %56 {offsets = [0, 1, 0], sizes = [8, 1, 64], strides = [1, 1, 1]} : vector<8x16x64xbf16> to vector<8x1x64xbf16>
    %60 = vector.shape_cast %59 : vector<8x1x64xbf16> to vector<8x64xbf16>
    %61 = vector.extract_strided_slice %56 {offsets = [0, 2, 0], sizes = [8, 1, 64], strides = [1, 1, 1]} : vector<8x16x64xbf16> to vector<8x1x64xbf16>
    %62 = vector.shape_cast %61 : vector<8x1x64xbf16> to vector<8x64xbf16>
    %63 = vector.extract_strided_slice %56 {offsets = [0, 3, 0], sizes = [8, 1, 64], strides = [1, 1, 1]} : vector<8x16x64xbf16> to vector<8x1x64xbf16>
    %64 = vector.shape_cast %63 : vector<8x1x64xbf16> to vector<8x64xbf16>
    %65 = vector.extract_strided_slice %56 {offsets = [0, 4, 0], sizes = [8, 1, 64], strides = [1, 1, 1]} : vector<8x16x64xbf16> to vector<8x1x64xbf16>
    %66 = vector.shape_cast %65 : vector<8x1x64xbf16> to vector<8x64xbf16>
    %67 = vector.extract_strided_slice %56 {offsets = [0, 5, 0], sizes = [8, 1, 64], strides = [1, 1, 1]} : vector<8x16x64xbf16> to vector<8x1x64xbf16>
    %68 = vector.shape_cast %67 : vector<8x1x64xbf16> to vector<8x64xbf16>
    %69 = vector.extract_strided_slice %56 {offsets = [0, 6, 0], sizes = [8, 1, 64], strides = [1, 1, 1]} : vector<8x16x64xbf16> to vector<8x1x64xbf16>
    %70 = vector.shape_cast %69 : vector<8x1x64xbf16> to vector<8x64xbf16>
    %71 = vector.extract_strided_slice %56 {offsets = [0, 7, 0], sizes = [8, 1, 64], strides = [1, 1, 1]} : vector<8x16x64xbf16> to vector<8x1x64xbf16>
    %72 = vector.shape_cast %71 : vector<8x1x64xbf16> to vector<8x64xbf16>
    %73 = vector.extract_strided_slice %56 {offsets = [0, 8, 0], sizes = [8, 1, 64], strides = [1, 1, 1]} : vector<8x16x64xbf16> to vector<8x1x64xbf16>
    %74 = vector.shape_cast %73 : vector<8x1x64xbf16> to vector<8x64xbf16>
    %75 = vector.extract_strided_slice %56 {offsets = [0, 9, 0], sizes = [8, 1, 64], strides = [1, 1, 1]} : vector<8x16x64xbf16> to vector<8x1x64xbf16>
    %76 = vector.shape_cast %75 : vector<8x1x64xbf16> to vector<8x64xbf16>
    %77 = vector.extract_strided_slice %56 {offsets = [0, 10, 0], sizes = [8, 1, 64], strides = [1, 1, 1]} : vector<8x16x64xbf16> to vector<8x1x64xbf16>
    %78 = vector.shape_cast %77 : vector<8x1x64xbf16> to vector<8x64xbf16>
    %79 = vector.extract_strided_slice %56 {offsets = [0, 11, 0], sizes = [8, 1, 64], strides = [1, 1, 1]} : vector<8x16x64xbf16> to vector<8x1x64xbf16>
    %80 = vector.shape_cast %79 : vector<8x1x64xbf16> to vector<8x64xbf16>
    %81 = vector.extract_strided_slice %56 {offsets = [0, 12, 0], sizes = [8, 1, 64], strides = [1, 1, 1]} : vector<8x16x64xbf16> to vector<8x1x64xbf16>
    %82 = vector.shape_cast %81 : vector<8x1x64xbf16> to vector<8x64xbf16>
    %83 = vector.extract_strided_slice %56 {offsets = [0, 13, 0], sizes = [8, 1, 64], strides = [1, 1, 1]} : vector<8x16x64xbf16> to vector<8x1x64xbf16>
    %84 = vector.shape_cast %83 : vector<8x1x64xbf16> to vector<8x64xbf16>
    %85 = vector.extract_strided_slice %56 {offsets = [0, 14, 0], sizes = [8, 1, 64], strides = [1, 1, 1]} : vector<8x16x64xbf16> to vector<8x1x64xbf16>
    %86 = vector.shape_cast %85 : vector<8x1x64xbf16> to vector<8x64xbf16>
    %87 = vector.extract_strided_slice %56 {offsets = [0, 15, 0], sizes = [8, 1, 64], strides = [1, 1, 1]} : vector<8x16x64xbf16> to vector<8x1x64xbf16>
    %88 = vector.shape_cast %87 : vector<8x1x64xbf16> to vector<8x64xbf16>
    %89 = tpu.concatenate %58, %60, %62, %64, %66, %68, %70, %72, %74, %76, %78, %80, %82, %84, %86, %88 in 1 : vector<8x64xbf16>, vector<8x64xbf16>, vector<8x64xbf16>, vector<8x64xbf16>, vector<8x64xbf16>, vector<8x64xbf16>, vector<8x64xbf16>, vector<8x64xbf16>, vector<8x64xbf16>, vector<8x64xbf16>, vector<8x64xbf16>, vector<8x64xbf16>, vector<8x64xbf16>, vector<8x64xbf16>, vector<8x64xbf16>, vector<8x64xbf16> -> vector<8x1024xbf16>
    %c0_19 = arith.constant 0 : index
    %c0_20 = arith.constant 0 : index
    %90 = vector.load %arg6[%c0_19, %c0_20] : memref<1024x256xbf16, #tpu.memory_space<vmem>>, vector<1024x256xbf16>
    %cst_21 = arith.constant dense<0.000000e+00> : vector<8x256xf32>
    %91 = tpu.matmul %89, %90, %cst_21 {dimension_numbers = #tpu.dot_dimension_numbers<[1], [0], [0], [1], [0, 0, 1, 1], [], []>} : vector<8x1024xbf16>, vector<1024x256xbf16>, vector<8x256xf32> -> vector<8x256xf32>
    %c0_22 = arith.constant 0 : index
    %c0_23 = arith.constant 0 : index
    %92 = vector.load %arg7[%c0_22, %c0_23] : memref<1x256xf32, #tpu.memory_space<vmem>>, vector<1x256xf32>
    %93 = vector.broadcast %92 : vector<1x256xf32> to vector<8x256xf32>
    %94 = arith.addf %91, %93 : vector<8x256xf32>
    %cst_24 = arith.constant 0.000000e+00 : f32
    %95 = vector.broadcast %cst_24 : f32 to vector<8x256xf32>
    %96 = arith.maximumf %94, %95 : vector<8x256xf32>
    %97 = arith.truncf %96 : vector<8x256xf32> to vector<8x256xbf16>
    %c0_25 = arith.constant 0 : index
    %c0_26 = arith.constant 0 : index
    %98 = vector.load %arg8[%c0_25, %c0_26] : memref<256x128xbf16, #tpu.memory_space<vmem>>, vector<256x128xbf16>
    %cst_27 = arith.constant dense<0.000000e+00> : vector<8x128xf32>
    %99 = tpu.matmul %97, %98, %cst_27 {dimension_numbers = #tpu.dot_dimension_numbers<[1], [0], [0], [1], [0, 0, 1, 1], [], []>} : vector<8x256xbf16>, vector<256x128xbf16>, vector<8x128xf32> -> vector<8x128xf32>
    %c0_28 = arith.constant 0 : index
    %c0_29 = arith.constant 0 : index
    %100 = vector.load %arg9[%c0_28, %c0_29] : memref<1x128xf32, #tpu.memory_space<vmem>>, vector<1x128xf32>
    %101 = vector.broadcast %100 : vector<1x128xf32> to vector<8x128xf32>
    %102 = arith.addf %99, %101 : vector<8x128xf32>
    %c0_30 = arith.constant 0 : index
    %c0_31 = arith.constant 0 : index
    %103 = vector.load %arg10[%c0_30, %c0_31] : memref<8x128xf32, #tpu.memory_space<vmem>>, vector<8x128xf32>
    tpu.vector_store %arg10[%c0_30, %c0_31], %102 {strides = array<i32>} : memref<8x128xf32, #tpu.memory_space<vmem>>, vector<8x128xf32>,
    return
  }
  func.func @transform_0(%arg0: i32) -> (i32, i32, i32) {
    %c0_i32 = arith.constant 0 : i32
    %c0_i32_0 = arith.constant 0 : i32
    %c0_i32_1 = arith.constant 0 : i32
    return %arg0, %c0_i32, %c0_i32_0 : i32, i32, i32
  }
  func.func @transform_1(%arg0: i32) -> (i32, i32) {
    %c0_i32 = arith.constant 0 : i32
    %c0_i32_0 = arith.constant 0 : i32
    %c0_i32_1 = arith.constant 0 : i32
    return %c0_i32, %c0_i32_0 : i32, i32
  }
  func.func @transform_2(%arg0: i32) -> (i32, i32) {
    %c0_i32 = arith.constant 0 : i32
    %c0_i32_0 = arith.constant 0 : i32
    %c0_i32_1 = arith.constant 0 : i32
    return %c0_i32, %c0_i32_0 : i32, i32
  }
  func.func @transform_3(%arg0: i32) -> (i32, i32) {
    %c0_i32 = arith.constant 0 : i32
    %c0_i32_0 = arith.constant 0 : i32
    %c0_i32_1 = arith.constant 0 : i32
    return %c0_i32, %c0_i32_0 : i32, i32
  }
  func.func @transform_4(%arg0: i32) -> (i32, i32) {
    %c0_i32 = arith.constant 0 : i32
    %c0_i32_0 = arith.constant 0 : i32
    %c0_i32_1 = arith.constant 0 : i32
    return %c0_i32, %c0_i32_0 : i32, i32
  }
  func.func @transform_5(%arg0: i32) -> (i32, i32) {
    %c0_i32 = arith.constant 0 : i32
    %c0_i32_0 = arith.constant 0 : i32
    %c0_i32_1 = arith.constant 0 : i32
    return %c0_i32, %c0_i32_0 : i32, i32
  }
  func.func @transform_6(%arg0: i32) -> (i32, i32) {
    %c0_i32 = arith.constant 0 : i32
    %c0_i32_0 = arith.constant 0 : i32
    %c0_i32_1 = arith.constant 0 : i32
    return %c0_i32, %c0_i32_0 : i32, i32
  }
  func.func @transform_7(%arg0: i32) -> (i32, i32) {
    %c0_i32 = arith.constant 0 : i32
    %c0_i32_0 = arith.constant 0 : i32
    %c0_i32_1 = arith.constant 0 : i32
    return %c0_i32, %c0_i32_0 : i32, i32
  }
  func.func @transform_8(%arg0: i32) -> (i32, i32) {
    %c0_i32 = arith.constant 0 : i32
    %c0_i32_0 = arith.constant 0 : i32
    %c0_i32_1 = arith.constant 0 : i32
    return %c0_i32, %c0_i32_0 : i32, i32
  }
  func.func @transform_9(%arg0: i32) -> (i32, i32) {
    %c0_i32 = arith.constant 0 : i32
    %c0_i32_0 = arith.constant 0 : i32
    return %arg0, %c0_i32 : i32, i32
  }
}

</mosaic_0001>

<llo_original>
// kernel: tpu_custom_call.1
$region0: #{tpu_custom_call.1}
  #allocation0 [shape = 'u32[]', space=smem, size = 0x4, offset = 0x4, fixed_abs, tag = 'smem constant byte address 0x4 - core index']
  #allocation1 [shape = 'u32[72,128]{1,0:T(1,128)}', space=vmem, size = 0x9000, scoped, tag = 'internal scratch']
  %s0 = inlined_call_operand.vmem [shape: s32[8,4,4], index: 0, kind: input, shape index: {}]
  %s1 = inlined_call_operand.vmem [shape: bf16[45,32], index: 1, kind: input, shape index: {}]
  %s2 = inlined_call_operand.vmem [shape: f32[1,32], index: 2, kind: input, shape index: {}]
  %s3 = inlined_call_operand.vmem [shape: bf16[288,64], index: 3, kind: input, shape index: {}]
  %s4 = inlined_call_operand.vmem [shape: f32[1,64], index: 4, kind: input, shape index: {}]
  %s5 = inlined_call_operand.hbm [shape: bf16[1024,256], index: 5, kind: input, shape index: {}]
  %s6 = inlined_call_operand.vmem [shape: f32[1,256], index: 6, kind: input, shape index: {}]
  %s7 = inlined_call_operand.vmem [shape: bf16[256,128], index: 7, kind: input, shape index: {}]
  %s8 = inlined_call_operand.vmem [shape: f32[1,128], index: 8, kind: input, shape index: {}]
  %s9 = inlined_call_operand.hbm [shape: f32[8,128], index: 9, kind: output, shape index: {}]
  %s10 = sld [smem:[#allocation0]]
  $region50: #{tpu_custom_call.1} parent=0
    _
  %s12 = ssub.s32 1, %s10
  %s13 = scalar_select 0, %s12, %s10
  $region1: #{tpu_custom_call.1} parent=0
    #allocation2 [shape = 'u8[524288]{0}', space=vmem, size = 0x80000, scoped, tag = 'input window, operand 5, single buffered']
    #allocation3 [shape = 's32[1]{0}', space=sflag, size = 0x4, scoped, tag = 'scoped memory for tpu_custom_call.1']
    #allocation4 [shape = 's32[1]{0}', space=sflag, size = 0x4, scoped, tag = 'scoped memory for tpu_custom_call.1']
    #allocation5 [shape = 'u8[4096]{0}', space=vmem, size = 0x1000, scoped, tag = 'output window, operand 0, single buffered']
    %14 = vsyncpa [#allocation3], 0
    %15 = vsyncpa [#allocation4], 0
    // Predicated region
    $region2: #{tpu_custom_call.1} parent=1 // pred_check
      _
    $region3: #{tpu_custom_call.1} parent=1 // pred_check_branch
      %17 = sbr.rel (0) target = $region5
    $region4: #{tpu_custom_call.1} parent=1 // pred_region
      _
    $region5: #{tpu_custom_call.1} parent=1 // pred_fallthru
      _
    // Predicated region
    $region6: #{tpu_custom_call.1} parent=1 // pred_check
      _
    $region7: #{tpu_custom_call.1} parent=1 // pred_check_branch
      %19 = sbr.rel (0) target = $region9
    $region8: #{tpu_custom_call.1} parent=1 // pred_region
      _
    $region9: #{tpu_custom_call.1} parent=1 // pred_fallthru
      _
    // Predicated region
    $region10: #{tpu_custom_call.1} parent=1 // pred_check
      _
    $region11: #{tpu_custom_call.1} parent=1 // pred_check_branch
      %21 = sbr.rel (0) target = $region13
    $region12: #{tpu_custom_call.1} parent=1 // pred_region
      _
    $region13: #{tpu_custom_call.1} parent=1 // pred_fallthru
      _
    // Predicated region
    $region14: #{tpu_custom_call.1} parent=1 // pred_check
      _
    $region15: #{tpu_custom_call.1} parent=1 // pred_check_branch
      %23 = sbr.rel (0) target = $region17
    $region16: #{tpu_custom_call.1} parent=1 // pred_region
      _
    $region17: #{tpu_custom_call.1} parent=1 // pred_fallthru
      _
    // Predicated region
    $region18: #{tpu_custom_call.1} parent=1 // pred_check
      _
    $region19: #{tpu_custom_call.1} parent=1 // pred_check_branch
      %25 = sbr.rel (0) target = $region21
    $region20: #{tpu_custom_call.1} parent=1 // pred_region
      _
    $region21: #{tpu_custom_call.1} parent=1 // pred_fallthru
      _
    // Predicated region
    $region22: #{tpu_custom_call.1} parent=1 // pred_check
      _
    $region23: #{tpu_custom_call.1} parent=1 // pred_check_branch
      %27 = sbr.rel (0) target = $region25
    $region24: #{tpu_custom_call.1} parent=1 // pred_region
      %29 = vsyncadd [#allocation3], 0
      %s30 = sshll.u32 %s5, 4
      %s31 = int_to_ptr.hbm [resolvable:$true] %s30
      %s32 = sshll.u32 [#allocation2], 4
      %s33 = int_to_ptr.vmem [resolvable:$true] %s32
      %38 = dma.hbm_to_vmem [thread:$0]  %s31, 16384, %s33, [#allocation3], 128, 128, 8
    $region25: #{tpu_custom_call.1} parent=1 // pred_fallthru
      _
    // Predicated region
    $region26: #{tpu_custom_call.1} parent=1 // pred_check
      _
    $region27: #{tpu_custom_call.1} parent=1 // pred_check_branch
      %40 = sbr.rel (0) target = $region29
    $region28: #{tpu_custom_call.1} parent=1 // pred_region
      _
    $region29: #{tpu_custom_call.1} parent=1 // pred_fallthru
      _
    // Predicated region
    $region30: #{tpu_custom_call.1} parent=1 // pred_check
      _
    $region31: #{tpu_custom_call.1} parent=1 // pred_check_branch
      %42 = sbr.rel (0) target = $region33
    $region32: #{tpu_custom_call.1} parent=1 // pred_region
      _
    $region33: #{tpu_custom_call.1} parent=1 // pred_fallthru
      _
    // Predicated region
    $region34: #{tpu_custom_call.1} parent=1 // pred_check
      _
    $region35: #{tpu_custom_call.1} parent=1 // pred_check_branch
      %44 = sbr.rel (0) target = $region37
    $region36: #{tpu_custom_call.1} parent=1 // pred_region
      _
    $region37: #{tpu_custom_call.1} parent=1 // pred_fallthru
      _
    // Predicated region
    $region38: #{tpu_custom_call.1} parent=1 // pred_check
      _
    $region39: #{tpu_custom_call.1} parent=1 // pred_check_branch
      %46 = sbr.rel (0) target = $region41
    $region40: #{tpu_custom_call.1} parent=1 // pred_region
      %48 = dma.done [#allocation3], 16384
    $region41: #{tpu_custom_call.1} parent=1 // pred_fallthru
      _
    %v50 = vld [vmem:[%s0] sm:$0xf]
    %v51 = vld [vmem:[%s0 + $0x4] sm:$0xf]
    %v52 = vld [vmem:[%s0 + $0x8] sm:$0xf]
    %v53 = vld [vmem:[%s0 + $0xc] sm:$0xf]
    %v54 = vld [vmem:[%s0 + $0x10] sm:$0xf]
    %v55 = vld [vmem:[%s0 + $0x14] sm:$0xf]
    %v56 = vld [vmem:[%s0 + $0x18] sm:$0xf]
    %v57 = vld [vmem:[%s0 + $0x1c] sm:$0xf]
    %v58 = vlaneseq
    %v59 = vand.u32 %v58, 127
    %v60 = vperm.slane %v50, 0
    %v61 = vlaneseq
    %v62 = vshrl.u32 %v61, 7
    %64 = vset.pattern.permute.xlu0 %v62
    %65 = vperm.xlu0 %64, %v60
    %v66 = vpop.permute.xlu0 %65
    %v67 = vperm.slane %v50, 1
    %v68 = vlaneseq
    %v69 = vshrl.u32 %v68, 7
    %71 = vset.pattern.permute.xlu0 %v69
    %72 = vperm.xlu0 %71, %v67
    %v73 = vpop.permute.xlu0 %72
    %v74 = vperm.slane %v50, 2
    %v75 = vlaneseq
    %v76 = vshrl.u32 %v75, 7
    %78 = vset.pattern.permute.xlu0 %v76
    %79 = vperm.xlu0 %78, %v74
    %v80 = vpop.permute.xlu0 %79
    %v81 = vperm.slane %v50, 3
    %v82 = vlaneseq
    %v83 = vshrl.u32 %v82, 7
    %85 = vset.pattern.permute.xlu0 %v83
    %86 = vperm.xlu0 %85, %v81
    %v87 = vpop.permute.xlu0 %86
    %v88 = vperm.slane %v51, 0
    %v89 = vlaneseq
    %v90 = vshrl.u32 %v89, 7
    %92 = vset.pattern.permute.xlu0 %v90
    %93 = vperm.xlu0 %92, %v88
    %v94 = vpop.permute.xlu0 %93
    %v95 = vperm.slane %v51, 1
    %v96 = vlaneseq
    %v97 = vshrl.u32 %v96, 7
    %99 = vset.pattern.permute.xlu0 %v97
    %100 = vperm.xlu0 %99, %v95
    %v101 = vpop.permute.xlu0 %100
    %v102 = vperm.slane %v51, 2
    %v103 = vlaneseq
    %v104 = vshrl.u32 %v103, 7
    %106 = vset.pattern.permute.xlu0 %v104
    %107 = vperm.xlu0 %106, %v102
    %v108 = vpop.permute.xlu0 %107
    %v109 = vperm.slane %v51, 3
    %v110 = vlaneseq
    %v111 = vshrl.u32 %v110, 7
    %113 = vset.pattern.permute.xlu0 %v111
    %114 = vperm.xlu0 %113, %v109
    %v115 = vpop.permute.xlu0 %114
    %v116 = vperm.slane %v52, 0
    %v117 = vlaneseq
    %v118 = vshrl.u32 %v117, 7
    %120 = vset.pattern.permute.xlu0 %v118
    %121 = vperm.xlu0 %120, %v116
    %v122 = vpop.permute.xlu0 %121
    %v123 = vperm.slane %v52, 1
    %v124 = vlaneseq
    %v125 = vshrl.u32 %v124, 7
    %127 = vset.pattern.permute.xlu0 %v125
    %128 = vperm.xlu0 %127, %v123
    %v129 = vpop.permute.xlu0 %128
    %v130 = vperm.slane %v52, 2
    %v131 = vlaneseq
    %v132 = vshrl.u32 %v131, 7
    %134 = vset.pattern.permute.xlu0 %v132
    %135 = vperm.xlu0 %134, %v130
    %v136 = vpop.permute.xlu0 %135
    %v137 = vperm.slane %v52, 3
    %v138 = vlaneseq
    %v139 = vshrl.u32 %v138, 7
    %141 = vset.pattern.permute.xlu0 %v139
    %142 = vperm.xlu0 %141, %v137
    %v143 = vpop.permute.xlu0 %142
    %v144 = vperm.slane %v53, 0
    %v145 = vlaneseq
    %v146 = vshrl.u32 %v145, 7
    %148 = vset.pattern.permute.xlu0 %v146
    %149 = vperm.xlu0 %148, %v144
    %v150 = vpop.permute.xlu0 %149
    %v151 = vperm.slane %v53, 1
    %v152 = vlaneseq
    %v153 = vshrl.u32 %v152, 7
    %155 = vset.pattern.permute.xlu0 %v153
    %156 = vperm.xlu0 %155, %v151
    %v157 = vpop.permute.xlu0 %156
    %v158 = vperm.slane %v53, 2
    %v159 = vlaneseq
    %v160 = vshrl.u32 %v159, 7
    %162 = vset.pattern.permute.xlu0 %v160
    %163 = vperm.xlu0 %162, %v158
    %v164 = vpop.permute.xlu0 %163
    %v165 = vperm.slane %v53, 3
    %v166 = vlaneseq
    %v167 = vshrl.u32 %v166, 7
    %169 = vset.pattern.permute.xlu0 %v167
    %170 = vperm.xlu0 %169, %v165
    %v171 = vpop.permute.xlu0 %170
    %v172 = vperm.slane %v54, 0
    %v173 = vlaneseq
    %v174 = vshrl.u32 %v173, 7
    %176 = vset.pattern.permute.xlu0 %v174
    %177 = vperm.xlu0 %176, %v172
    %v178 = vpop.permute.xlu0 %177
    %v179 = vperm.slane %v54, 1
    %v180 = vlaneseq
    %v181 = vshrl.u32 %v180, 7
    %183 = vset.pattern.permute.xlu0 %v181
    %184 = vperm.xlu0 %183, %v179
    %v185 = vpop.permute.xlu0 %184
    %v186 = vperm.slane %v54, 2
    %v187 = vlaneseq
    %v188 = vshrl.u32 %v187, 7
    %190 = vset.pattern.permute.xlu0 %v188
    %191 = vperm.xlu0 %190, %v186
    %v192 = vpop.permute.xlu0 %191
    %v193 = vperm.slane %v54, 3
    %v194 = vlaneseq
    %v195 = vshrl.u32 %v194, 7
    %197 = vset.pattern.permute.xlu0 %v195
    %198 = vperm.xlu0 %197, %v193
    %v199 = vpop.permute.xlu0 %198
    %v200 = vperm.slane %v55, 0
    %v201 = vlaneseq
    %v202 = vshrl.u32 %v201, 7
    %204 = vset.pattern.permute.xlu0 %v202
    %205 = vperm.xlu0 %204, %v200
    %v206 = vpop.permute.xlu0 %205
    %v207 = vperm.slane %v55, 1
    %v208 = vlaneseq
    %v209 = vshrl.u32 %v208, 7
    %211 = vset.pattern.permute.xlu0 %v209
    %212 = vperm.xlu0 %211, %v207
    %v213 = vpop.permute.xlu0 %212
    %v214 = vperm.slane %v55, 2
    %v215 = vlaneseq
    %v216 = vshrl.u32 %v215, 7
    %218 = vset.pattern.permute.xlu0 %v216
    %219 = vperm.xlu0 %218, %v214
    %v220 = vpop.permute.xlu0 %219
    %v221 = vperm.slane %v55, 3
    %v222 = vlaneseq
    %v223 = vshrl.u32 %v222, 7
    %225 = vset.pattern.permute.xlu0 %v223
    %226 = vperm.xlu0 %225, %v221
    %v227 = vpop.permute.xlu0 %226
    %v228 = vperm.slane %v56, 0
    %v229 = vlaneseq
    %v230 = vshrl.u32 %v229, 7
    %232 = vset.pattern.permute.xlu0 %v230
    %233 = vperm.xlu0 %232, %v228
    %v234 = vpop.permute.xlu0 %233
    %v235 = vperm.slane %v56, 1
    %v236 = vlaneseq
    %v237 = vshrl.u32 %v236, 7
    %239 = vset.pattern.permute.xlu0 %v237
    %240 = vperm.xlu0 %239, %v235
    %v241 = vpop.permute.xlu0 %240
    %v242 = vperm.slane %v56, 2
    %v243 = vlaneseq
    %v244 = vshrl.u32 %v243, 7
    %246 = vset.pattern.permute.xlu0 %v244
    %247 = vperm.xlu0 %246, %v242
    %v248 = vpop.permute.xlu0 %247
    %v249 = vperm.slane %v56, 3
    %v250 = vlaneseq
    %v251 = vshrl.u32 %v250, 7
    %253 = vset.pattern.permute.xlu0 %v251
    %254 = vperm.xlu0 %253, %v249
    %v255 = vpop.permute.xlu0 %254
    %v256 = vperm.slane %v57, 0
    %v257 = vlaneseq
    %v258 = vshrl.u32 %v257, 7
    %260 = vset.pattern.permute.xlu0 %v258
    %261 = vperm.xlu0 %260, %v256
    %v262 = vpop.permute.xlu0 %261
    %v263 = vperm.slane %v57, 1
    %v264 = vlaneseq
    %v265 = vshrl.u32 %v264, 7
    %267 = vset.pattern.permute.xlu0 %v265
    %268 = vperm.xlu0 %267, %v263
    %v269 = vpop.permute.xlu0 %268
    %v270 = vperm.slane %v57, 2
    %v271 = vlaneseq
    %v272 = vshrl.u32 %v271, 7
    %274 = vset.pattern.permute.xlu0 %v272
    %275 = vperm.xlu0 %274, %v270
    %v276 = vpop.permute.xlu0 %275
    %v277 = vperm.slane %v57, 3
    %v278 = vlaneseq
    %v279 = vshrl.u32 %v278, 7
    %281 = vset.pattern.permute.xlu0 %v279
    %282 = vperm.xlu0 %281, %v277
    %v283 = vpop.permute.xlu0 %282
    %vm284 = vcmp.eq.s32.totalorder %v66, %v59
    %vm285 = vcmp.eq.s32.totalorder %v73, %v59
    %vm286 = vcmp.eq.s32.totalorder %v80, %v59
    %vm287 = vcmp.eq.s32.totalorder %v87, %v59
    %vm288 = vcmp.eq.s32.totalorder %v94, %v59
    %vm289 = vcmp.eq.s32.totalorder %v101, %v59
    %vm290 = vcmp.eq.s32.totalorder %v108, %v59
    %vm291 = vcmp.eq.s32.totalorder %v115, %v59
    %vm292 = vcmp.eq.s32.totalorder %v122, %v59
    %vm293 = vcmp.eq.s32.totalorder %v129, %v59
    %vm294 = vcmp.eq.s32.totalorder %v136, %v59
    %vm295 = vcmp.eq.s32.totalorder %v143, %v59
    %vm296 = vcmp.eq.s32.totalorder %v150, %v59
    %vm297 = vcmp.eq.s32.totalorder %v157, %v59
    %vm298 = vcmp.eq.s32.totalorder %v164, %v59
    %vm299 = vcmp.eq.s32.totalorder %v171, %v59
    %vm300 = vcmp.eq.s32.totalorder %v178, %v59
    %vm301 = vcmp.eq.s32.totalorder %v185, %v59
    %vm302 = vcmp.eq.s32.totalorder %v192, %v59
    %vm303 = vcmp.eq.s32.totalorder %v199, %v59
    %vm304 = vcmp.eq.s32.totalorder %v206, %v59
    %vm305 = vcmp.eq.s32.totalorder %v213, %v59
    %vm306 = vcmp.eq.s32.totalorder %v220, %v59
    %vm307 = vcmp.eq.s32.totalorder %v227, %v59
    %vm308 = vcmp.eq.s32.totalorder %v234, %v59
    %vm309 = vcmp.eq.s32.totalorder %v241, %v59
    %vm310 = vcmp.eq.s32.totalorder %v248, %v59
    %vm311 = vcmp.eq.s32.totalorder %v255, %v59
    %vm312 = vcmp.eq.s32.totalorder %v262, %v59
    %vm313 = vcmp.eq.s32.totalorder %v269, %v59
    %vm314 = vcmp.eq.s32.totalorder %v276, %v59
    %vm315 = vcmp.eq.s32.totalorder %v283, %v59
    %v316 = vsel %vm284, 1.0, 0.0
    %v317 = vsel %vm285, 1.0, 0.0
    %v318 = vsel %vm286, 1.0, 0.0
    %v319 = vsel %vm287, 1.0, 0.0
    %v320 = vsel %vm288, 1.0, 0.0
    %v321 = vsel %vm289, 1.0, 0.0
    %v322 = vsel %vm290, 1.0, 0.0
    %v323 = vsel %vm291, 1.0, 0.0
    %v324 = vsel %vm292, 1.0, 0.0
    %v325 = vsel %vm293, 1.0, 0.0
    %v326 = vsel %vm294, 1.0, 0.0
    %v327 = vsel %vm295, 1.0, 0.0
    %v328 = vsel %vm296, 1.0, 0.0
    %v329 = vsel %vm297, 1.0, 0.0
    %v330 = vsel %vm298, 1.0, 0.0
    %v331 = vsel %vm299, 1.0, 0.0
    %v332 = vsel %vm300, 1.0, 0.0
    %v333 = vsel %vm301, 1.0, 0.0
    %v334 = vsel %vm302, 1.0, 0.0
    %v335 = vsel %vm303, 1.0, 0.0
    %v336 = vsel %vm304, 1.0, 0.0
    %v337 = vsel %vm305, 1.0, 0.0
    %v338 = vsel %vm306, 1.0, 0.0
    %v339 = vsel %vm307, 1.0, 0.0
    %v340 = vsel %vm308, 1.0, 0.0
    %v341 = vsel %vm309, 1.0, 0.0
    %v342 = vsel %vm310, 1.0, 0.0
    %v343 = vsel %vm311, 1.0, 0.0
    %v344 = vsel %vm312, 1.0, 0.0
    %v345 = vsel %vm313, 1.0, 0.0
    %v346 = vsel %vm314, 1.0, 0.0
    %v347 = vsel %vm315, 1.0, 0.0
    %v348 = vpack.c.bf16 %v316, %v316
    %v349 = vpack.c.bf16 %v317, %v317
    %v350 = vpack.c.bf16 %v318, %v318
    %v351 = vpack.c.bf16 %v319, %v319
    %v352 = vpack.c.bf16 %v320, %v320
    %v353 = vpack.c.bf16 %v321, %v321
    %v354 = vpack.c.bf16 %v322, %v322
    %v355 = vpack.c.bf16 %v323, %v323
    %v356 = vpack.c.bf16 %v324, %v324
    %v357 = vpack.c.bf16 %v325, %v325
    %v358 = vpack.c.bf16 %v326, %v326
    %v359 = vpack.c.bf16 %v327, %v327
    %v360 = vpack.c.bf16 %v328, %v328
    %v361 = vpack.c.bf16 %v329, %v329
    %v362 = vpack.c.bf16 %v330, %v330
    %v363 = vpack.c.bf16 %v331, %v331
    %v364 = vpack.c.bf16 %v332, %v332
    %v365 = vpack.c.bf16 %v333, %v333
    %v366 = vpack.c.bf16 %v334, %v334
    %v367 = vpack.c.bf16 %v335, %v335
    %v368 = vpack.c.bf16 %v336, %v336
    %v369 = vpack.c.bf16 %v337, %v337
    %v370 = vpack.c.bf16 %v338, %v338
    %v371 = vpack.c.bf16 %v339, %v339
    %v372 = vpack.c.bf16 %v340, %v340
    %v373 = vpack.c.bf16 %v341, %v341
    %v374 = vpack.c.bf16 %v342, %v342
    %v375 = vpack.c.bf16 %v343, %v343
    %v376 = vpack.c.bf16 %v344, %v344
    %v377 = vpack.c.bf16 %v345, %v345
    %v378 = vpack.c.bf16 %v346, %v346
    %v379 = vpack.c.bf16 %v347, %v347
    %v381 = vshrl.u32 0, 16
    %v383 = vrot.slane %v381, 7
    %v384 = vshll.u32 0, 16
    %v386 = vor.u32 %v383, %v384
    %v388 = vshrl.u32 %v348, 16
    %v390 = vrot.slane %v388, 7
    %v391 = vshll.u32 %v348, 16
    %v393 = vor.u32 %v390, %v391
    %v395 = vshrl.u32 %v349, 16
    %v397 = vrot.slane %v395, 7
    %v398 = vshll.u32 %v349, 16
    %v400 = vor.u32 %v397, %v398
    %v402 = vshrl.u32 %v350, 16
    %v404 = vrot.slane %v402, 7
    %v405 = vshll.u32 %v350, 16
    %v407 = vor.u32 %v404, %v405
    %v409 = vshrl.u32 %v351, 16
    %v411 = vrot.slane %v409, 7
    %v412 = vshll.u32 %v351, 16
    %v414 = vor.u32 %v411, %v412
    %v416 = vshrl.u32 %v352, 16
    %v418 = vrot.slane %v416, 7
    %v419 = vshll.u32 %v352, 16
    %v421 = vor.u32 %v418, %v419
    %v423 = vshrl.u32 %v353, 16
    %v425 = vrot.slane %v423, 7
    %v426 = vshll.u32 %v353, 16
    %v428 = vor.u32 %v425, %v426
    %v430 = vshrl.u32 %v354, 16
    %v432 = vrot.slane %v430, 7
    %v433 = vshll.u32 %v354, 16
    %v435 = vor.u32 %v432, %v433
    %v437 = vshrl.u32 %v355, 16
    %v439 = vrot.slane %v437, 7
    %v440 = vshll.u32 %v355, 16
    %v442 = vor.u32 %v439, %v440
    %v444 = vshrl.u32 %v356, 16
    %v446 = vrot.slane %v444, 7
    %v447 = vshll.u32 %v356, 16
    %v449 = vor.u32 %v446, %v447
    %v451 = vshrl.u32 %v357, 16
    %v453 = vrot.slane %v451, 7
    %v454 = vshll.u32 %v357, 16
    %v456 = vor.u32 %v453, %v454
    %v458 = vshrl.u32 %v358, 16
    %v460 = vrot.slane %v458, 7
    %v461 = vshll.u32 %v358, 16
    %v463 = vor.u32 %v460, %v461
    %v465 = vshrl.u32 %v359, 16
    %v467 = vrot.slane %v465, 7
    %v468 = vshll.u32 %v359, 16
    %v470 = vor.u32 %v467, %v468
    %v472 = vshrl.u32 %v360, 16
    %v474 = vrot.slane %v472, 7
    %v475 = vshll.u32 %v360, 16
    %v477 = vor.u32 %v474, %v475
    %v479 = vshrl.u32 %v361, 16
    %v481 = vrot.slane %v479, 7
    %v482 = vshll.u32 %v361, 16
    %v484 = vor.u32 %v481, %v482
    %v486 = vshrl.u32 %v362, 16
    %v488 = vrot.slane %v486, 7
    %v489 = vshll.u32 %v362, 16
    %v491 = vor.u32 %v488, %v489
    %v493 = vshrl.u32 %v363, 16
    %v495 = vrot.slane %v493, 7
    %v496 = vshll.u32 %v363, 16
    %v498 = vor.u32 %v495, %v496
    %v500 = vshrl.u32 %v364, 16
    %v502 = vrot.slane %v500, 7
    %v503 = vshll.u32 %v364, 16
    %v505 = vor.u32 %v502, %v503
    %v507 = vshrl.u32 %v365, 16
    %v509 = vrot.slane %v507, 7
    %v510 = vshll.u32 %v365, 16
    %v512 = vor.u32 %v509, %v510
    %v514 = vshrl.u32 %v366, 16
    %v516 = vrot.slane %v514, 7
    %v517 = vshll.u32 %v366, 16
    %v519 = vor.u32 %v516, %v517
    %v521 = vshrl.u32 %v367, 16
    %v523 = vrot.slane %v521, 7
    %v524 = vshll.u32 %v367, 16
    %v526 = vor.u32 %v523, %v524
    %v528 = vshrl.u32 %v368, 16
    %v530 = vrot.slane %v528, 7
    %v531 = vshll.u32 %v368, 16
    %v533 = vor.u32 %v530, %v531
    %v535 = vshrl.u32 %v369, 16
    %v537 = vrot.slane %v535, 7
    %v538 = vshll.u32 %v369, 16
    %v540 = vor.u32 %v537, %v538
    %v542 = vshrl.u32 %v370, 16
    %v544 = vrot.slane %v542, 7
    %v545 = vshll.u32 %v370, 16
    %v547 = vor.u32 %v544, %v545
    %v549 = vshrl.u32 %v371, 16
    %v551 = vrot.slane %v549, 7
    %v552 = vshll.u32 %v371, 16
    %v554 = vor.u32 %v551, %v552
    %v556 = vshrl.u32 %v372, 16
    %v558 = vrot.slane %v556, 7
    %v559 = vshll.u32 %v372, 16
    %v561 = vor.u32 %v558, %v559
    %v563 = vshrl.u32 %v373, 16
    %v565 = vrot.slane %v563, 7
    %v566 = vshll.u32 %v373, 16
    %v568 = vor.u32 %v565, %v566
    %v570 = vshrl.u32 %v374, 16
    %v572 = vrot.slane %v570, 7
    %v573 = vshll.u32 %v374, 16
    %v575 = vor.u32 %v572, %v573
    %v577 = vshrl.u32 %v375, 16
    %v579 = vrot.slane %v577, 7
    %v580 = vshll.u32 %v375, 16
    %v582 = vor.u32 %v579, %v580
    %v584 = vshrl.u32 %v376, 16
    %v586 = vrot.slane %v584, 7
    %v587 = vshll.u32 %v376, 16
    %v589 = vor.u32 %v586, %v587
    %v591 = vshrl.u32 %v377, 16
    %v593 = vrot.slane %v591, 7
    %v594 = vshll.u32 %v377, 16
    %v596 = vor.u32 %v593, %v594
    %v598 = vshrl.u32 %v378, 16
    %v600 = vrot.slane %v598, 7
    %v601 = vshll.u32 %v378, 16
    %v603 = vor.u32 %v600, %v601
    %v605 = vshrl.u32 %v379, 16
    %v607 = vrot.slane %v605, 7
    %v608 = vshll.u32 %v379, 16
    %v610 = vor.u32 %v607, %v608
    %vm644 = vcmask 1040384
    %vm645 = vsmask.f32 256
    %vm646 = vmand %vm644, %vm645
    %v647 = vsel %vm646, 0, %v386
    %v648 = vsel %vm646, 0, %v393
    %v649 = vsel %vm646, 0, %v400
    %v650 = vsel %vm646, 0, %v407
    %v651 = vsel %vm646, 0, %v414
    %v652 = vsel %vm646, 0, %v421
    %v653 = vsel %vm646, 0, %v428
    %v654 = vsel %vm646, 0, %v435
    %v655 = vsel %vm646, 0, %v442
    %v656 = vsel %vm646, 0, %v449
    %v657 = vsel %vm646, 0, %v456
    %v658 = vsel %vm646, 0, %v463
    %v659 = vsel %vm646, 0, %v470
    %v660 = vsel %vm646, 0, %v477
    %v661 = vsel %vm646, 0, %v484
    %v662 = vsel %vm646, 0, %v491
    %v663 = vsel %vm646, 0, %v498
    %v664 = vsel %vm646, 0, %v505
    %v665 = vsel %vm646, 0, %v512
    %v666 = vsel %vm646, 0, %v519
    %v667 = vsel %vm646, 0, %v526
    %v668 = vsel %vm646, 0, %v533
    %v669 = vsel %vm646, 0, %v540
    %v670 = vsel %vm646, 0, %v547
    %v671 = vsel %vm646, 0, %v554
    %v672 = vsel %vm646, 0, %v561
    %v673 = vsel %vm646, 0, %v568
    %v674 = vsel %vm646, 0, %v575
    %v675 = vsel %vm646, 0, %v582
    %v676 = vsel %vm646, 0, %v589
    %v677 = vsel %vm646, 0, %v596
    %v678 = vsel %vm646, 0, %v603
    %v679 = vsel %vm646, 0, %v610
    %vm680 = vcmask 1042432
    %vm681 = vsmask.f32 2304
    %vm682 = vmand %vm680, %vm681
    %v683 = vsel %vm682, %v647, 0
    %v684 = vsel %vm682, %v648, 0
    %v685 = vsel %vm682, %v649, 0
    %v686 = vsel %vm682, %v650, 0
    %v687 = vsel %vm682, %v651, 0
    %v688 = vsel %vm682, %v652, 0
    %v689 = vsel %vm682, %v653, 0
    %v690 = vsel %vm682, %v654, 0
    %v691 = vsel %vm682, %v655, 0
    %v692 = vsel %vm682, %v656, 0
    %v693 = vsel %vm682, %v657, 0
    %v694 = vsel %vm682, %v658, 0
    %v695 = vsel %vm682, %v659, 0
    %v696 = vsel %vm682, %v660, 0
    %v697 = vsel %vm682, %v661, 0
    %v698 = vsel %vm682, %v662, 0
    %v699 = vsel %vm682, %v663, 0
    %v700 = vsel %vm682, %v664, 0
    %v701 = vsel %vm682, %v665, 0
    %v702 = vsel %vm682, %v666, 0
    %v703 = vsel %vm682, %v667, 0
    %v704 = vsel %vm682, %v668, 0
    %v705 = vsel %vm682, %v669, 0
    %v706 = vsel %vm682, %v670, 0
    %v707 = vsel %vm682, %v671, 0
    %v708 = vsel %vm682, %v672, 0
    %v709 = vsel %vm682, %v673, 0
    %v710 = vsel %vm682, %v674, 0
    %v711 = vsel %vm682, %v675, 0
    %v712 = vsel %vm682, %v676, 0
    %v713 = vsel %vm682, %v677, 0
    %v714 = vsel %vm682, %v678, 0
    %v715 = vsel %vm682, %v679, 0
    %v717 = vshrl.u32 %v683, 16
    %v719 = vshll.u32 %v683, 16
    %v721 = vrot.slane %v719, 1
    %v722 = vor.u32 %v717, %v721
    %v724 = vshrl.u32 %v684, 16
    %v726 = vshll.u32 %v684, 16
    %v728 = vrot.slane %v726, 1
    %v729 = vor.u32 %v724, %v728
    %v731 = vshrl.u32 %v685, 16
    %v733 = vshll.u32 %v685, 16
    %v735 = vrot.slane %v733, 1
    %v736 = vor.u32 %v731, %v735
    %v738 = vshrl.u32 %v686, 16
    %v740 = vshll.u32 %v686, 16
    %v742 = vrot.slane %v740, 1
    %v743 = vor.u32 %v738, %v742
    %v745 = vshrl.u32 %v688, 16
    %v747 = vshll.u32 %v688, 16
    %v749 = vrot.slane %v747, 1
    %v750 = vor.u32 %v745, %v749
    %v752 = vshrl.u32 %v689, 16
    %v754 = vshll.u32 %v689, 16
    %v756 = vrot.slane %v754, 1
    %v757 = vor.u32 %v752, %v756
    %v759 = vshrl.u32 %v690, 16
    %v761 = vshll.u32 %v690, 16
    %v763 = vrot.slane %v761, 1
    %v764 = vor.u32 %v759, %v763
    %v766 = vshrl.u32 %v692, 16
    %v768 = vshll.u32 %v692, 16
    %v770 = vrot.slane %v768, 1
    %v771 = vor.u32 %v766, %v770
    %v773 = vshrl.u32 %v693, 16
    %v775 = vshll.u32 %v693, 16
    %v777 = vrot.slane %v775, 1
    %v778 = vor.u32 %v773, %v777
    %v780 = vshrl.u32 %v694, 16
    %v782 = vshll.u32 %v694, 16
    %v784 = vrot.slane %v782, 1
    %v785 = vor.u32 %v780, %v784
    %v787 = vshrl.u32 %v696, 16
    %v789 = vshll.u32 %v696, 16
    %v791 = vrot.slane %v789, 1
    %v792 = vor.u32 %v787, %v791
    %v794 = vshrl.u32 %v697, 16
    %v796 = vshll.u32 %v697, 16
    %v798 = vrot.slane %v796, 1
    %v799 = vor.u32 %v794, %v798
    %v801 = vshrl.u32 %v698, 16
    %v803 = vshll.u32 %v698, 16
    %v805 = vrot.slane %v803, 1
    %v806 = vor.u32 %v801, %v805
    %v808 = vshrl.u32 %v700, 16
    %v810 = vshll.u32 %v700, 16
    %v812 = vrot.slane %v810, 1
    %v813 = vor.u32 %v808, %v812
    %v815 = vshrl.u32 %v701, 16
    %v817 = vshll.u32 %v701, 16
    %v819 = vrot.slane %v817, 1
    %v820 = vor.u32 %v815, %v819
    %v822 = vshrl.u32 %v702, 16
    %v824 = vshll.u32 %v702, 16
    %v826 = vrot.slane %v824, 1
    %v827 = vor.u32 %v822, %v826
    %v829 = vshrl.u32 %v704, 16
    %v831 = vshll.u32 %v704, 16
    %v833 = vrot.slane %v831, 1
    %v834 = vor.u32 %v829, %v833
    %v836 = vshrl.u32 %v705, 16
    %v838 = vshll.u32 %v705, 16
    %v840 = vrot.slane %v838, 1
    %v841 = vor.u32 %v836, %v840
    %v843 = vshrl.u32 %v706, 16
    %v845 = vshll.u32 %v706, 16
    %v847 = vrot.slane %v845, 1
    %v848 = vor.u32 %v843, %v847
    %v850 = vshrl.u32 %v708, 16
    %v852 = vshll.u32 %v708, 16
    %v854 = vrot.slane %v852, 1
    %v855 = vor.u32 %v850, %v854
    %v857 = vshrl.u32 %v709, 16
    %v859 = vshll.u32 %v709, 16
    %v861 = vrot.slane %v859, 1
    %v862 = vor.u32 %v857, %v861
    %v864 = vshrl.u32 %v710, 16
    %v866 = vshll.u32 %v710, 16
    %v868 = vrot.slane %v866, 1
    %v869 = vor.u32 %v864, %v868
    %v871 = vshrl.u32 %v712, 16
    %v873 = vshll.u32 %v712, 16
    %v875 = vrot.slane %v873, 1
    %v876 = vor.u32 %v871, %v875
    %v878 = vshrl.u32 %v713, 16
    %v880 = vshll.u32 %v713, 16
    %v882 = vrot.slane %v880, 1
    %v883 = vor.u32 %v878, %v882
    %v885 = vshrl.u32 %v714, 16
    %v887 = vshll.u32 %v714, 16
    %v889 = vrot.slane %v887, 1
    %v890 = vor.u32 %v885, %v889
    %891 = vrot.lane.b32.xlu0 %v722, 5
    %v892 = vpop.permute.xlu0 %891
    %893 = vrot.lane.b32.xlu0 %v729, 5
    %v894 = vpop.permute.xlu0 %893
    %895 = vrot.lane.b32.xlu0 %v736, 5
    %v896 = vpop.permute.xlu0 %895
    %897 = vrot.lane.b32.xlu0 %v743, 5
    %v898 = vpop.permute.xlu0 %897
    %899 = vrot.lane.b32.xlu0 %v750, 5
    %v900 = vpop.permute.xlu0 %899
    %901 = vrot.lane.b32.xlu0 %v757, 5
    %v902 = vpop.permute.xlu0 %901
    %903 = vrot.lane.b32.xlu0 %v764, 5
    %v904 = vpop.permute.xlu0 %903
    %905 = vrot.lane.b32.xlu0 %v771, 5
    %v906 = vpop.permute.xlu0 %905
    %907 = vrot.lane.b32.xlu0 %v778, 5
    %v908 = vpop.permute.xlu0 %907
    %909 = vrot.lane.b32.xlu0 %v785, 5
    %v910 = vpop.permute.xlu0 %909
    %911 = vrot.lane.b32.xlu0 %v792, 5
    %v912 = vpop.permute.xlu0 %911
    %913 = vrot.lane.b32.xlu0 %v799, 5
    %v914 = vpop.permute.xlu0 %913
    %915 = vrot.lane.b32.xlu0 %v806, 5
    %v916 = vpop.permute.xlu0 %915
    %917 = vrot.lane.b32.xlu0 %v813, 5
    %v918 = vpop.permute.xlu0 %917
    %919 = vrot.lane.b32.xlu0 %v820, 5
    %v920 = vpop.permute.xlu0 %919
    %921 = vrot.lane.b32.xlu0 %v827, 5
    %v922 = vpop.permute.xlu0 %921
    %923 = vrot.lane.b32.xlu0 %v834, 5
    %v924 = vpop.permute.xlu0 %923
    %925 = vrot.lane.b32.xlu0 %v841, 5
    %v926 = vpop.permute.xlu0 %925
    %927 = vrot.lane.b32.xlu0 %v848, 5
    %v928 = vpop.permute.xlu0 %927
    %929 = vrot.lane.b32.xlu0 %v855, 5
    %v930 = vpop.permute.xlu0 %929
    %931 = vrot.lane.b32.xlu0 %v862, 5
    %v932 = vpop.permute.xlu0 %931
    %933 = vrot.lane.b32.xlu0 %v869, 5
    %v934 = vpop.permute.xlu0 %933
    %935 = vrot.lane.b32.xlu0 %v876, 5
    %v936 = vpop.permute.xlu0 %935
    %937 = vrot.lane.b32.xlu0 %v883, 5
    %v938 = vpop.permute.xlu0 %937
    %939 = vrot.lane.b32.xlu0 %v890, 5
    %v940 = vpop.permute.xlu0 %939
    %v966 = vrot.slane %v683, 1
    %v967 = vrot.slane %v684, 1
    %v968 = vrot.slane %v685, 1
    %v969 = vrot.slane %v686, 1
    %v970 = vrot.slane %v688, 1
    %v971 = vrot.slane %v689, 1
    %v972 = vrot.slane %v690, 1
    %v973 = vrot.slane %v692, 1
    %v974 = vrot.slane %v693, 1
    %v975 = vrot.slane %v694, 1
    %v976 = vrot.slane %v696, 1
    %v977 = vrot.slane %v697, 1
    %v978 = vrot.slane %v698, 1
    %v979 = vrot.slane %v700, 1
    %v980 = vrot.slane %v701, 1
    %v981 = vrot.slane %v702, 1
    %v982 = vrot.slane %v704, 1
    %v983 = vrot.slane %v705, 1
    %v984 = vrot.slane %v706, 1
    %v985 = vrot.slane %v708, 1
    %v986 = vrot.slane %v709, 1
    %v987 = vrot.slane %v710, 1
    %v988 = vrot.slane %v712, 1
    %v989 = vrot.slane %v713, 1
    %v990 = vrot.slane %v714, 1
    %991 = vrot.lane.b32.xlu0 %v966, 10
    %v992 = vpop.permute.xlu0 %991
    %993 = vrot.lane.b32.xlu0 %v967, 10
    %v994 = vpop.permute.xlu0 %993
    %995 = vrot.lane.b32.xlu0 %v968, 10
    %v996 = vpop.permute.xlu0 %995
    %997 = vrot.lane.b32.xlu0 %v969, 10
    %v998 = vpop.permute.xlu0 %997
    %999 = vrot.lane.b32.xlu0 %v970, 10
    %v1000 = vpop.permute.xlu0 %999
    %1001 = vrot.lane.b32.xlu0 %v971, 10
    %v1002 = vpop.permute.xlu0 %1001
    %1003 = vrot.lane.b32.xlu0 %v972, 10
    %v1004 = vpop.permute.xlu0 %1003
    %1005 = vrot.lane.b32.xlu0 %v973, 10
    %v1006 = vpop.permute.xlu0 %1005
    %1007 = vrot.lane.b32.xlu0 %v974, 10
    %v1008 = vpop.permute.xlu0 %1007
    %1009 = vrot.lane.b32.xlu0 %v975, 10
    %v1010 = vpop.permute.xlu0 %1009
    %1011 = vrot.lane.b32.xlu0 %v976, 10
    %v1012 = vpop.permute.xlu0 %1011
    %1013 = vrot.lane.b32.xlu0 %v977, 10
    %v1014 = vpop.permute.xlu0 %1013
    %1015 = vrot.lane.b32.xlu0 %v978, 10
    %v1016 = vpop.permute.xlu0 %1015
    %1017 = vrot.lane.b32.xlu0 %v979, 10
    %v1018 = vpop.permute.xlu0 %1017
    %1019 = vrot.lane.b32.xlu0 %v980, 10
    %v1020 = vpop.permute.xlu0 %1019
    %1021 = vrot.lane.b32.xlu0 %v981, 10
    %v1022 = vpop.permute.xlu0 %1021
    %1023 = vrot.lane.b32.xlu0 %v982, 10
    %v1024 = vpop.permute.xlu0 %1023
    %1025 = vrot.lane.b32.xlu0 %v983, 10
    %v1026 = vpop.permute.xlu0 %1025
    %1027 = vrot.lane.b32.xlu0 %v984, 10
    %v1028 = vpop.permute.xlu0 %1027
    %1029 = vrot.lane.b32.xlu0 %v985, 10
    %v1030 = vpop.permute.xlu0 %1029
    %1031 = vrot.lane.b32.xlu0 %v986, 10
    %v1032 = vpop.permute.xlu0 %1031
    %1033 = vrot.lane.b32.xlu0 %v987, 10
    %v1034 = vpop.permute.xlu0 %1033
    %1035 = vrot.lane.b32.xlu0 %v988, 10
    %v1036 = vpop.permute.xlu0 %1035
    %1037 = vrot.lane.b32.xlu0 %v989, 10
    %v1038 = vpop.permute.xlu0 %1037
    %1039 = vrot.lane.b32.xlu0 %v990, 10
    %v1040 = vpop.permute.xlu0 %1039
    %1049 = vrot.lane.b32.xlu0 %v684, 15
    %v1050 = vpop.permute.xlu0 %1049
    %1051 = vrot.lane.b32.xlu0 %v685, 15
    %v1052 = vpop.permute.xlu0 %1051
    %1053 = vrot.lane.b32.xlu0 %v686, 15
    %v1054 = vpop.permute.xlu0 %1053
    %1055 = vrot.lane.b32.xlu0 %v687, 15
    %v1056 = vpop.permute.xlu0 %1055
    %1057 = vrot.lane.b32.xlu0 %v688, 15
    %v1058 = vpop.permute.xlu0 %1057
    %1059 = vrot.lane.b32.xlu0 %v689, 15
    %v1060 = vpop.permute.xlu0 %1059
    %1061 = vrot.lane.b32.xlu0 %v690, 15
    %v1062 = vpop.permute.xlu0 %1061
    %1063 = vrot.lane.b32.xlu0 %v691, 15
    %v1064 = vpop.permute.xlu0 %1063
    %1065 = vrot.lane.b32.xlu0 %v692, 15
    %v1066 = vpop.permute.xlu0 %1065
    %1067 = vrot.lane.b32.xlu0 %v693, 15
    %v1068 = vpop.permute.xlu0 %1067
    %1069 = vrot.lane.b32.xlu0 %v694, 15
    %v1070 = vpop.permute.xlu0 %1069
    %1071 = vrot.lane.b32.xlu0 %v695, 15
    %v1072 = vpop.permute.xlu0 %1071
    %1073 = vrot.lane.b32.xlu0 %v696, 15
    %v1074 = vpop.permute.xlu0 %1073
    %1075 = vrot.lane.b32.xlu0 %v697, 15
    %v1076 = vpop.permute.xlu0 %1075
    %1077 = vrot.lane.b32.xlu0 %v698, 15
    %v1078 = vpop.permute.xlu0 %1077
    %1079 = vrot.lane.b32.xlu0 %v699, 15
    %v1080 = vpop.permute.xlu0 %1079
    %1081 = vrot.lane.b32.xlu0 %v700, 15
    %v1082 = vpop.permute.xlu0 %1081
    %1083 = vrot.lane.b32.xlu0 %v701, 15
    %v1084 = vpop.permute.xlu0 %1083
    %1085 = vrot.lane.b32.xlu0 %v702, 15
    %v1086 = vpop.permute.xlu0 %1085
    %1087 = vrot.lane.b32.xlu0 %v703, 15
    %v1088 = vpop.permute.xlu0 %1087
    %1089 = vrot.lane.b32.xlu0 %v704, 15
    %v1090 = vpop.permute.xlu0 %1089
    %1091 = vrot.lane.b32.xlu0 %v705, 15
    %v1092 = vpop.permute.xlu0 %1091
    %1093 = vrot.lane.b32.xlu0 %v706, 15
    %v1094 = vpop.permute.xlu0 %1093
    %1095 = vrot.lane.b32.xlu0 %v707, 15
    %v1096 = vpop.permute.xlu0 %1095
    %1097 = vrot.lane.b32.xlu0 %v708, 15
    %v1098 = vpop.permute.xlu0 %1097
    %1099 = vrot.lane.b32.xlu0 %v709, 15
    %v1100 = vpop.permute.xlu0 %1099
    %1101 = vrot.lane.b32.xlu0 %v710, 15
    %v1102 = vpop.permute.xlu0 %1101
    %1103 = vrot.lane.b32.xlu0 %v711, 15
    %v1104 = vpop.permute.xlu0 %1103
    %1105 = vrot.lane.b32.xlu0 %v712, 15
    %v1106 = vpop.permute.xlu0 %1105
    %1107 = vrot.lane.b32.xlu0 %v713, 15
    %v1108 = vpop.permute.xlu0 %1107
    %1109 = vrot.lane.b32.xlu0 %v714, 15
    %v1110 = vpop.permute.xlu0 %1109
    %1111 = vrot.lane.b32.xlu0 %v715, 15
    %v1112 = vpop.permute.xlu0 %1111
    %v1114 = vshrl.u32 %v687, 16
    %v1116 = vshll.u32 %v687, 16
    %v1118 = vrot.slane %v1116, 1
    %v1119 = vor.u32 %v1114, %v1118
    %v1121 = vshrl.u32 %v691, 16
    %v1123 = vshll.u32 %v691, 16
    %v1125 = vrot.slane %v1123, 1
    %v1126 = vor.u32 %v1121, %v1125
    %v1128 = vshrl.u32 %v695, 16
    %v1130 = vshll.u32 %v695, 16
    %v1132 = vrot.slane %v1130, 1
    %v1133 = vor.u32 %v1128, %v1132
    %v1135 = vshrl.u32 %v699, 16
    %v1137 = vshll.u32 %v699, 16
    %v1139 = vrot.slane %v1137, 1
    %v1140 = vor.u32 %v1135, %v1139
    %v1142 = vshrl.u32 %v703, 16
    %v1144 = vshll.u32 %v703, 16
    %v1146 = vrot.slane %v1144, 1
    %v1147 = vor.u32 %v1142, %v1146
    %v1149 = vshrl.u32 %v707, 16
    %v1151 = vshll.u32 %v707, 16
    %v1153 = vrot.slane %v1151, 1
    %v1154 = vor.u32 %v1149, %v1153
    %v1156 = vshrl.u32 %v711, 16
    %v1158 = vshll.u32 %v711, 16
    %v1160 = vrot.slane %v1158, 1
    %v1161 = vor.u32 %v1156, %v1160
    %v1163 = vshrl.u32 %v715, 16
    %v1165 = vshll.u32 %v715, 16
    %v1167 = vrot.slane %v1165, 1
    %v1168 = vor.u32 %v1163, %v1167
    %1169 = vrot.lane.b32.xlu0 %v729, 20
    %v1170 = vpop.permute.xlu0 %1169
    %1171 = vrot.lane.b32.xlu0 %v736, 20
    %v1172 = vpop.permute.xlu0 %1171
    %1173 = vrot.lane.b32.xlu0 %v743, 20
    %v1174 = vpop.permute.xlu0 %1173
    %1175 = vrot.lane.b32.xlu0 %v1119, 20
    %v1176 = vpop.permute.xlu0 %1175
    %1177 = vrot.lane.b32.xlu0 %v750, 20
    %v1178 = vpop.permute.xlu0 %1177
    %1179 = vrot.lane.b32.xlu0 %v757, 20
    %v1180 = vpop.permute.xlu0 %1179
    %1181 = vrot.lane.b32.xlu0 %v764, 20
    %v1182 = vpop.permute.xlu0 %1181
    %1183 = vrot.lane.b32.xlu0 %v1126, 20
    %v1184 = vpop.permute.xlu0 %1183
    %1185 = vrot.lane.b32.xlu0 %v771, 20
    %v1186 = vpop.permute.xlu0 %1185
    %1187 = vrot.lane.b32.xlu0 %v778, 20
    %v1188 = vpop.permute.xlu0 %1187
    %1189 = vrot.lane.b32.xlu0 %v785, 20
    %v1190 = vpop.permute.xlu0 %1189
    %1191 = vrot.lane.b32.xlu0 %v1133, 20
    %v1192 = vpop.permute.xlu0 %1191
    %1193 = vrot.lane.b32.xlu0 %v792, 20
    %v1194 = vpop.permute.xlu0 %1193
    %1195 = vrot.lane.b32.xlu0 %v799, 20
    %v1196 = vpop.permute.xlu0 %1195
    %1197 = vrot.lane.b32.xlu0 %v806, 20
    %v1198 = vpop.permute.xlu0 %1197
    %1199 = vrot.lane.b32.xlu0 %v1140, 20
    %v1200 = vpop.permute.xlu0 %1199
    %1201 = vrot.lane.b32.xlu0 %v813, 20
    %v1202 = vpop.permute.xlu0 %1201
    %1203 = vrot.lane.b32.xlu0 %v820, 20
    %v1204 = vpop.permute.xlu0 %1203
    %1205 = vrot.lane.b32.xlu0 %v827, 20
    %v1206 = vpop.permute.xlu0 %1205
    %1207 = vrot.lane.b32.xlu0 %v1147, 20
    %v1208 = vpop.permute.xlu0 %1207
    %1209 = vrot.lane.b32.xlu0 %v834, 20
    %v1210 = vpop.permute.xlu0 %1209
    %1211 = vrot.lane.b32.xlu0 %v841, 20
    %v1212 = vpop.permute.xlu0 %1211
    %1213 = vrot.lane.b32.xlu0 %v848, 20
    %v1214 = vpop.permute.xlu0 %1213
    %1215 = vrot.lane.b32.xlu0 %v1154, 20
    %v1216 = vpop.permute.xlu0 %1215
    %1217 = vrot.lane.b32.xlu0 %v855, 20
    %v1218 = vpop.permute.xlu0 %1217
    %1219 = vrot.lane.b32.xlu0 %v862, 20
    %v1220 = vpop.permute.xlu0 %1219
    %1221 = vrot.lane.b32.xlu0 %v869, 20
    %v1222 = vpop.permute.xlu0 %1221
    %1223 = vrot.lane.b32.xlu0 %v1161, 20
    %v1224 = vpop.permute.xlu0 %1223
    %1225 = vrot.lane.b32.xlu0 %v876, 20
    %v1226 = vpop.permute.xlu0 %1225
    %1227 = vrot.lane.b32.xlu0 %v883, 20
    %v1228 = vpop.permute.xlu0 %1227
    %1229 = vrot.lane.b32.xlu0 %v890, 20
    %v1230 = vpop.permute.xlu0 %1229
    %1231 = vrot.lane.b32.xlu0 %v1168, 20
    %v1232 = vpop.permute.xlu0 %1231
    %v1233 = vrot.slane %v687, 1
    %v1234 = vrot.slane %v691, 1
    %v1235 = vrot.slane %v695, 1
    %v1236 = vrot.slane %v699, 1
    %v1237 = vrot.slane %v703, 1
    %v1238 = vrot.slane %v707, 1
    %v1239 = vrot.slane %v711, 1
    %v1240 = vrot.slane %v715, 1
    %1241 = vrot.lane.b32.xlu0 %v967, 25
    %v1242 = vpop.permute.xlu0 %1241
    %1243 = vrot.lane.b32.xlu0 %v968, 25
    %v1244 = vpop.permute.xlu0 %1243
    %1245 = vrot.lane.b32.xlu0 %v969, 25
    %v1246 = vpop.permute.xlu0 %1245
    %1247 = vrot.lane.b32.xlu0 %v1233, 25
    %v1248 = vpop.permute.xlu0 %1247
    %1249 = vrot.lane.b32.xlu0 %v970, 25
    %v1250 = vpop.permute.xlu0 %1249
    %1251 = vrot.lane.b32.xlu0 %v971, 25
    %v1252 = vpop.permute.xlu0 %1251
    %1253 = vrot.lane.b32.xlu0 %v972, 25
    %v1254 = vpop.permute.xlu0 %1253
    %1255 = vrot.lane.b32.xlu0 %v1234, 25
    %v1256 = vpop.permute.xlu0 %1255
    %1257 = vrot.lane.b32.xlu0 %v973, 25
    %v1258 = vpop.permute.xlu0 %1257
    %1259 = vrot.lane.b32.xlu0 %v974, 25
    %v1260 = vpop.permute.xlu0 %1259
    %1261 = vrot.lane.b32.xlu0 %v975, 25
    %v1262 = vpop.permute.xlu0 %1261
    %1263 = vrot.lane.b32.xlu0 %v1235, 25
    %v1264 = vpop.permute.xlu0 %1263
    %1265 = vrot.lane.b32.xlu0 %v976, 25
    %v1266 = vpop.permute.xlu0 %1265
    %1267 = vrot.lane.b32.xlu0 %v977, 25
    %v1268 = vpop.permute.xlu0 %1267
    %1269 = vrot.lane.b32.xlu0 %v978, 25
    %v1270 = vpop.permute.xlu0 %1269
    %1271 = vrot.lane.b32.xlu0 %v1236, 25
    %v1272 = vpop.permute.xlu0 %1271
    %1273 = vrot.lane.b32.xlu0 %v979, 25
    %v1274 = vpop.permute.xlu0 %1273
    %1275 = vrot.lane.b32.xlu0 %v980, 25
    %v1276 = vpop.permute.xlu0 %1275
    %1277 = vrot.lane.b32.xlu0 %v981, 25
    %v1278 = vpop.permute.xlu0 %1277
    %1279 = vrot.lane.b32.xlu0 %v1237, 25
    %v1280 = vpop.permute.xlu0 %1279
    %1281 = vrot.lane.b32.xlu0 %v982, 25
    %v1282 = vpop.permute.xlu0 %1281
    %1283 = vrot.lane.b32.xlu0 %v983, 25
    %v1284 = vpop.permute.xlu0 %1283
    %1285 = vrot.lane.b32.xlu0 %v984, 25
    %v1286 = vpop.permute.xlu0 %1285
    %1287 = vrot.lane.b32.xlu0 %v1238, 25
    %v1288 = vpop.permute.xlu0 %1287
    %1289 = vrot.lane.b32.xlu0 %v985, 25
    %v1290 = vpop.permute.xlu0 %1289
    %1291 = vrot.lane.b32.xlu0 %v986, 25
    %v1292 = vpop.permute.xlu0 %1291
    %1293 = vrot.lane.b32.xlu0 %v987, 25
    %v1294 = vpop.permute.xlu0 %1293
    %1295 = vrot.lane.b32.xlu0 %v1239, 25
    %v1296 = vpop.permute.xlu0 %1295
    %1297 = vrot.lane.b32.xlu0 %v988, 25
    %v1298 = vpop.permute.xlu0 %1297
    %1299 = vrot.lane.b32.xlu0 %v989, 25
    %v1300 = vpop.permute.xlu0 %1299
    %1301 = vrot.lane.b32.xlu0 %v990, 25
    %v1302 = vpop.permute.xlu0 %1301
    %1303 = vrot.lane.b32.xlu0 %v1240, 25
    %v1304 = vpop.permute.xlu0 %1303
    %1305 = vrot.lane.b32.xlu0 %v685, 30
    %v1306 = vpop.permute.xlu0 %1305
    %1307 = vrot.lane.b32.xlu0 %v686, 30
    %v1308 = vpop.permute.xlu0 %1307
    %1309 = vrot.lane.b32.xlu0 %v687, 30
    %v1310 = vpop.permute.xlu0 %1309
    %1311 = vrot.lane.b32.xlu0 %v683, 30
    %v1312 = vpop.permute.xlu0 %1311
    %1313 = vrot.lane.b32.xlu0 %v689, 30
    %v1314 = vpop.permute.xlu0 %1313
    %1315 = vrot.lane.b32.xlu0 %v690, 30
    %v1316 = vpop.permute.xlu0 %1315
    %1317 = vrot.lane.b32.xlu0 %v691, 30
    %v1318 = vpop.permute.xlu0 %1317
    %1319 = vrot.lane.b32.xlu0 %v693, 30
    %v1320 = vpop.permute.xlu0 %1319
    %1321 = vrot.lane.b32.xlu0 %v694, 30
    %v1322 = vpop.permute.xlu0 %1321
    %1323 = vrot.lane.b32.xlu0 %v695, 30
    %v1324 = vpop.permute.xlu0 %1323
    %1325 = vrot.lane.b32.xlu0 %v697, 30
    %v1326 = vpop.permute.xlu0 %1325
    %1327 = vrot.lane.b32.xlu0 %v698, 30
    %v1328 = vpop.permute.xlu0 %1327
    %1329 = vrot.lane.b32.xlu0 %v699, 30
    %v1330 = vpop.permute.xlu0 %1329
    %1331 = vrot.lane.b32.xlu0 %v701, 30
    %v1332 = vpop.permute.xlu0 %1331
    %1333 = vrot.lane.b32.xlu0 %v702, 30
    %v1334 = vpop.permute.xlu0 %1333
    %1335 = vrot.lane.b32.xlu0 %v703, 30
    %v1336 = vpop.permute.xlu0 %1335
    %1337 = vrot.lane.b32.xlu0 %v705, 30
    %v1338 = vpop.permute.xlu0 %1337
    %1339 = vrot.lane.b32.xlu0 %v706, 30
    %v1340 = vpop.permute.xlu0 %1339
    %1341 = vrot.lane.b32.xlu0 %v707, 30
    %v1342 = vpop.permute.xlu0 %1341
    %1343 = vrot.lane.b32.xlu0 %v709, 30
    %v1344 = vpop.permute.xlu0 %1343
    %1345 = vrot.lane.b32.xlu0 %v710, 30
    %v1346 = vpop.permute.xlu0 %1345
    %1347 = vrot.lane.b32.xlu0 %v711, 30
    %v1348 = vpop.permute.xlu0 %1347
    %1349 = vrot.lane.b32.xlu0 %v713, 30
    %v1350 = vpop.permute.xlu0 %1349
    %1351 = vrot.lane.b32.xlu0 %v714, 30
    %v1352 = vpop.permute.xlu0 %1351
    %1353 = vrot.lane.b32.xlu0 %v715, 30
    %v1354 = vpop.permute.xlu0 %1353
    %1355 = vrot.lane.b32.xlu0 %v736, 35
    %v1356 = vpop.permute.xlu0 %1355
    %1357 = vrot.lane.b32.xlu0 %v743, 35
    %v1358 = vpop.permute.xlu0 %1357
    %1359 = vrot.lane.b32.xlu0 %v1119, 35
    %v1360 = vpop.permute.xlu0 %1359
    %1361 = vrot.lane.b32.xlu0 %v722, 35
    %v1362 = vpop.permute.xlu0 %1361
    %1363 = vrot.lane.b32.xlu0 %v757, 35
    %v1364 = vpop.permute.xlu0 %1363
    %1365 = vrot.lane.b32.xlu0 %v764, 35
    %v1366 = vpop.permute.xlu0 %1365
    %1367 = vrot.lane.b32.xlu0 %v1126, 35
    %v1368 = vpop.permute.xlu0 %1367
    %1369 = vrot.lane.b32.xlu0 %v778, 35
    %v1370 = vpop.permute.xlu0 %1369
    %1371 = vrot.lane.b32.xlu0 %v785, 35
    %v1372 = vpop.permute.xlu0 %1371
    %1373 = vrot.lane.b32.xlu0 %v1133, 35
    %v1374 = vpop.permute.xlu0 %1373
    %1375 = vrot.lane.b32.xlu0 %v799, 35
    %v1376 = vpop.permute.xlu0 %1375
    %1377 = vrot.lane.b32.xlu0 %v806, 35
    %v1378 = vpop.permute.xlu0 %1377
    %1379 = vrot.lane.b32.xlu0 %v1140, 35
    %v1380 = vpop.permute.xlu0 %1379
    %1381 = vrot.lane.b32.xlu0 %v820, 35
    %v1382 = vpop.permute.xlu0 %1381
    %1383 = vrot.lane.b32.xlu0 %v827, 35
    %v1384 = vpop.permute.xlu0 %1383
    %1385 = vrot.lane.b32.xlu0 %v1147, 35
    %v1386 = vpop.permute.xlu0 %1385
    %1387 = vrot.lane.b32.xlu0 %v841, 35
    %v1388 = vpop.permute.xlu0 %1387
    %1389 = vrot.lane.b32.xlu0 %v848, 35
    %v1390 = vpop.permute.xlu0 %1389
    %1391 = vrot.lane.b32.xlu0 %v1154, 35
    %v1392 = vpop.permute.xlu0 %1391
    %1393 = vrot.lane.b32.xlu0 %v862, 35
    %v1394 = vpop.permute.xlu0 %1393
    %1395 = vrot.lane.b32.xlu0 %v869, 35
    %v1396 = vpop.permute.xlu0 %1395
    %1397 = vrot.lane.b32.xlu0 %v1161, 35
    %v1398 = vpop.permute.xlu0 %1397
    %1399 = vrot.lane.b32.xlu0 %v883, 35
    %v1400 = vpop.permute.xlu0 %1399
    %1401 = vrot.lane.b32.xlu0 %v890, 35
    %v1402 = vpop.permute.xlu0 %1401
    %1403 = vrot.lane.b32.xlu0 %v1168, 35
    %v1404 = vpop.permute.xlu0 %1403
    %1405 = vrot.lane.b32.xlu0 %v968, 40
    %v1406 = vpop.permute.xlu0 %1405
    %1407 = vrot.lane.b32.xlu0 %v969, 40
    %v1408 = vpop.permute.xlu0 %1407
    %1409 = vrot.lane.b32.xlu0 %v1233, 40
    %v1410 = vpop.permute.xlu0 %1409
    %1411 = vrot.lane.b32.xlu0 %v966, 40
    %v1412 = vpop.permute.xlu0 %1411
    %1413 = vrot.lane.b32.xlu0 %v971, 40
    %v1414 = vpop.permute.xlu0 %1413
    %1415 = vrot.lane.b32.xlu0 %v972, 40
    %v1416 = vpop.permute.xlu0 %1415
    %1417 = vrot.lane.b32.xlu0 %v1234, 40
    %v1418 = vpop.permute.xlu0 %1417
    %1419 = vrot.lane.b32.xlu0 %v974, 40
    %v1420 = vpop.permute.xlu0 %1419
    %1421 = vrot.lane.b32.xlu0 %v975, 40
    %v1422 = vpop.permute.xlu0 %1421
    %1423 = vrot.lane.b32.xlu0 %v1235, 40
    %v1424 = vpop.permute.xlu0 %1423
    %1425 = vrot.lane.b32.xlu0 %v977, 40
    %v1426 = vpop.permute.xlu0 %1425
    %1427 = vrot.lane.b32.xlu0 %v978, 40
    %v1428 = vpop.permute.xlu0 %1427
    %1429 = vrot.lane.b32.xlu0 %v1236, 40
    %v1430 = vpop.permute.xlu0 %1429
    %1431 = vrot.lane.b32.xlu0 %v980, 40
    %v1432 = vpop.permute.xlu0 %1431
    %1433 = vrot.lane.b32.xlu0 %v981, 40
    %v1434 = vpop.permute.xlu0 %1433
    %1435 = vrot.lane.b32.xlu0 %v1237, 40
    %v1436 = vpop.permute.xlu0 %1435
    %1437 = vrot.lane.b32.xlu0 %v983, 40
    %v1438 = vpop.permute.xlu0 %1437
    %1439 = vrot.lane.b32.xlu0 %v984, 40
    %v1440 = vpop.permute.xlu0 %1439
    %1441 = vrot.lane.b32.xlu0 %v1238, 40
    %v1442 = vpop.permute.xlu0 %1441
    %1443 = vrot.lane.b32.xlu0 %v986, 40
    %v1444 = vpop.permute.xlu0 %1443
    %1445 = vrot.lane.b32.xlu0 %v987, 40
    %v1446 = vpop.permute.xlu0 %1445
    %1447 = vrot.lane.b32.xlu0 %v1239, 40
    %v1448 = vpop.permute.xlu0 %1447
    %1449 = vrot.lane.b32.xlu0 %v989, 40
    %v1450 = vpop.permute.xlu0 %1449
    %1451 = vrot.lane.b32.xlu0 %v990, 40
    %v1452 = vpop.permute.xlu0 %1451
    %1453 = vrot.lane.b32.xlu0 %v1240, 40
    %v1454 = vpop.permute.xlu0 %1453
    %vm1455 = vcmask 39936
    %v1457 = vsel %vm1455, %v683, %v892
    %v1459 = vsel %vm1455, %v684, %v894
    %v1461 = vsel %vm1455, %v685, %v896
    %v1463 = vsel %vm1455, %v686, %v898
    %v1465 = vsel %vm1455, %v688, %v900
    %v1467 = vsel %vm1455, %v689, %v902
    %v1469 = vsel %vm1455, %v690, %v904
    %v1471 = vsel %vm1455, %v692, %v906
    %v1473 = vsel %vm1455, %v693, %v908
    %v1475 = vsel %vm1455, %v694, %v910
    %v1477 = vsel %vm1455, %v696, %v912
    %v1479 = vsel %vm1455, %v697, %v914
    %v1481 = vsel %vm1455, %v698, %v916
    %v1483 = vsel %vm1455, %v700, %v918
    %v1485 = vsel %vm1455, %v701, %v920
    %v1487 = vsel %vm1455, %v702, %v922
    %v1489 = vsel %vm1455, %v704, %v924
    %v1491 = vsel %vm1455, %v705, %v926
    %v1493 = vsel %vm1455, %v706, %v928
    %v1495 = vsel %vm1455, %v708, %v930
    %v1497 = vsel %vm1455, %v709, %v932
    %v1499 = vsel %vm1455, %v710, %v934
    %v1501 = vsel %vm1455, %v712, %v936
    %v1503 = vsel %vm1455, %v713, %v938
    %v1505 = vsel %vm1455, %v714, %v940
    %vm1506 = vcmask 80896
    %v1508 = vsel %vm1506, %v1457, %v992
    %v1510 = vsel %vm1506, %v1459, %v994
    %v1512 = vsel %vm1506, %v1461, %v996
    %v1514 = vsel %vm1506, %v1463, %v998
    %v1516 = vsel %vm1506, %v1465, %v1000
    %v1518 = vsel %vm1506, %v1467, %v1002
    %v1520 = vsel %vm1506, %v1469, %v1004
    %v1522 = vsel %vm1506, %v1471, %v1006
    %v1524 = vsel %vm1506, %v1473, %v1008
    %v1526 = vsel %vm1506, %v1475, %v1010
    %v1528 = vsel %vm1506, %v1477, %v1012
    %v1530 = vsel %vm1506, %v1479, %v1014
    %v1532 = vsel %vm1506, %v1481, %v1016
    %v1534 = vsel %vm1506, %v1483, %v1018
    %v1536 = vsel %vm1506, %v1485, %v1020
    %v1538 = vsel %vm1506, %v1487, %v1022
    %v1540 = vsel %vm1506, %v1489, %v1024
    %v1542 = vsel %vm1506, %v1491, %v1026
    %v1544 = vsel %vm1506, %v1493, %v1028
    %v1546 = vsel %vm1506, %v1495, %v1030
    %v1548 = vsel %vm1506, %v1497, %v1032
    %v1550 = vsel %vm1506, %v1499, %v1034
    %v1552 = vsel %vm1506, %v1501, %v1036
    %v1554 = vsel %vm1506, %v1503, %v1038
    %v1556 = vsel %vm1506, %v1505, %v1040
    %vm1557 = vcmask 121856
    %v1559 = vsel %vm1557, %v1508, %v1050
    %v1561 = vsel %vm1557, %v1510, %v1052
    %v1563 = vsel %vm1557, %v1512, %v1054
    %v1565 = vsel %vm1557, %v1514, %v1056
    %v1567 = vsel %vm1557, %v1508, %v1058
    %v1569 = vsel %vm1557, %v1516, %v1060
    %v1571 = vsel %vm1557, %v1518, %v1062
    %v1573 = vsel %vm1557, %v1520, %v1064
    %v1575 = vsel %vm1557, %v1508, %v1066
    %v1577 = vsel %vm1557, %v1522, %v1068
    %v1579 = vsel %vm1557, %v1524, %v1070
    %v1581 = vsel %vm1557, %v1526, %v1072
    %v1583 = vsel %vm1557, %v1508, %v1074
    %v1585 = vsel %vm1557, %v1528, %v1076
    %v1587 = vsel %vm1557, %v1530, %v1078
    %v1589 = vsel %vm1557, %v1532, %v1080
    %v1591 = vsel %vm1557, %v1508, %v1082
    %v1593 = vsel %vm1557, %v1534, %v1084
    %v1595 = vsel %vm1557, %v1536, %v1086
    %v1597 = vsel %vm1557, %v1538, %v1088
    %v1599 = vsel %vm1557, %v1508, %v1090
    %v1601 = vsel %vm1557, %v1540, %v1092
    %v1603 = vsel %vm1557, %v1542, %v1094
    %v1605 = vsel %vm1557, %v1544, %v1096
    %v1607 = vsel %vm1557, %v1508, %v1098
    %v1609 = vsel %vm1557, %v1546, %v1100
    %v1611 = vsel %vm1557, %v1548, %v1102
    %v1613 = vsel %vm1557, %v1550, %v1104
    %v1615 = vsel %vm1557, %v1508, %v1106
    %v1617 = vsel %vm1557, %v1552, %v1108
    %v1619 = vsel %vm1557, %v1554, %v1110
    %v1621 = vsel %vm1557, %v1556, %v1112
    %vm1622 = vcmask 162816
    %v1624 = vsel %vm1622, %v1559, %v1170
    %v1626 = vsel %vm1622, %v1561, %v1172
    %v1628 = vsel %vm1622, %v1563, %v1174
    %v1630 = vsel %vm1622, %v1565, %v1176
    %v1632 = vsel %vm1622, %v1567, %v1178
    %v1634 = vsel %vm1622, %v1569, %v1180
    %v1636 = vsel %vm1622, %v1571, %v1182
    %v1638 = vsel %vm1622, %v1573, %v1184
    %v1640 = vsel %vm1622, %v1575, %v1186
    %v1642 = vsel %vm1622, %v1577, %v1188
    %v1644 = vsel %vm1622, %v1579, %v1190
    %v1646 = vsel %vm1622, %v1581, %v1192
    %v1648 = vsel %vm1622, %v1583, %v1194
    %v1650 = vsel %vm1622, %v1585, %v1196
    %v1652 = vsel %vm1622, %v1587, %v1198
    %v1654 = vsel %vm1622, %v1589, %v1200
    %v1656 = vsel %vm1622, %v1591, %v1202
    %v1658 = vsel %vm1622, %v1593, %v1204
    %v1660 = vsel %vm1622, %v1595, %v1206
    %v1662 = vsel %vm1622, %v1597, %v1208
    %v1664 = vsel %vm1622, %v1599, %v1210
    %v1666 = vsel %vm1622, %v1601, %v1212
    %v1668 = vsel %vm1622, %v1603, %v1214
    %v1670 = vsel %vm1622, %v1605, %v1216
    %v1672 = vsel %vm1622, %v1607, %v1218
    %v1674 = vsel %vm1622, %v1609, %v1220
    %v1676 = vsel %vm1622, %v1611, %v1222
    %v1678 = vsel %vm1622, %v1613, %v1224
    %v1680 = vsel %vm1622, %v1615, %v1226
    %v1682 = vsel %vm1622, %v1617, %v1228
    %v1684 = vsel %vm1622, %v1619, %v1230
    %v1686 = vsel %vm1622, %v1621, %v1232
    %vm1687 = vcmask 203776
    %v1689 = vsel %vm1687, %v1624, %v1242
    %v1691 = vsel %vm1687, %v1626, %v1244
    %v1693 = vsel %vm1687, %v1628, %v1246
    %v1695 = vsel %vm1687, %v1630, %v1248
    %v1697 = vsel %vm1687, %v1632, %v1250
    %v1699 = vsel %vm1687, %v1634, %v1252
    %v1701 = vsel %vm1687, %v1636, %v1254
    %v1703 = vsel %vm1687, %v1638, %v1256
    %v1705 = vsel %vm1687, %v1640, %v1258
    %v1707 = vsel %vm1687, %v1642, %v1260
    %v1709 = vsel %vm1687, %v1644, %v1262
    %v1711 = vsel %vm1687, %v1646, %v1264
    %v1713 = vsel %vm1687, %v1648, %v1266
    %v1715 = vsel %vm1687, %v1650, %v1268
    %v1717 = vsel %vm1687, %v1652, %v1270
    %v1719 = vsel %vm1687, %v1654, %v1272
    %v1721 = vsel %vm1687, %v1656, %v1274
    %v1723 = vsel %vm1687, %v1658, %v1276
    %v1725 = vsel %vm1687, %v1660, %v1278
    %v1727 = vsel %vm1687, %v1662, %v1280
    %v1729 = vsel %vm1687, %v1664, %v1282
    %v1731 = vsel %vm1687, %v1666, %v1284
    %v1733 = vsel %vm1687, %v1668, %v1286
    %v1735 = vsel %vm1687, %v1670, %v1288
    %v1737 = vsel %vm1687, %v1672, %v1290
    %v1739 = vsel %vm1687, %v1674, %v1292
    %v1741 = vsel %vm1687, %v1676, %v1294
    %v1743 = vsel %vm1687, %v1678, %v1296
    %v1745 = vsel %vm1687, %v1680, %v1298
    %v1747 = vsel %vm1687, %v1682, %v1300
    %v1749 = vsel %vm1687, %v1684, %v1302
    %v1751 = vsel %vm1687, %v1686, %v1304
    %vm1752 = vcmask 244736
    %v1754 = vsel %vm1752, %v1689, %v1306
    %v1756 = vsel %vm1752, %v1691, %v1308
    %v1758 = vsel %vm1752, %v1693, %v1310
    %v1760 = vsel %vm1752, %v1695, %v1312
    %v1762 = vsel %vm1752, %v1697, %v1314
    %v1764 = vsel %vm1752, %v1699, %v1316
    %v1766 = vsel %vm1752, %v1701, %v1318
    %v1767 = vsel %vm1752, %v1703, %v1312
    %v1769 = vsel %vm1752, %v1705, %v1320
    %v1771 = vsel %vm1752, %v1707, %v1322
    %v1773 = vsel %vm1752, %v1709, %v1324
    %v1774 = vsel %vm1752, %v1711, %v1312
    %v1776 = vsel %vm1752, %v1713, %v1326
    %v1778 = vsel %vm1752, %v1715, %v1328
    %v1780 = vsel %vm1752, %v1717, %v1330
    %v1781 = vsel %vm1752, %v1719, %v1312
    %v1783 = vsel %vm1752, %v1721, %v1332
    %v1785 = vsel %vm1752, %v1723, %v1334
    %v1787 = vsel %vm1752, %v1725, %v1336
    %v1788 = vsel %vm1752, %v1727, %v1312
    %v1790 = vsel %vm1752, %v1729, %v1338
    %v1792 = vsel %vm1752, %v1731, %v1340
    %v1794 = vsel %vm1752, %v1733, %v1342
    %v1795 = vsel %vm1752, %v1735, %v1312
    %v1797 = vsel %vm1752, %v1737, %v1344
    %v1799 = vsel %vm1752, %v1739, %v1346
    %v1801 = vsel %vm1752, %v1741, %v1348
    %v1802 = vsel %vm1752, %v1743, %v1312
    %v1804 = vsel %vm1752, %v1745, %v1350
    %v1806 = vsel %vm1752, %v1747, %v1352
    %v1808 = vsel %vm1752, %v1749, %v1354
    %v1809 = vsel %vm1752, %v1751, %v1312
    %vm1810 = vcmask 285696
    %v1812 = vsel %vm1810, %v1754, %v1356
    %v1814 = vsel %vm1810, %v1756, %v1358
    %v1816 = vsel %vm1810, %v1758, %v1360
    %v1818 = vsel %vm1810, %v1760, %v1362
    %v1820 = vsel %vm1810, %v1762, %v1364
    %v1822 = vsel %vm1810, %v1764, %v1366
    %v1824 = vsel %vm1810, %v1766, %v1368
    %v1825 = vsel %vm1810, %v1767, %v1362
    %v1827 = vsel %vm1810, %v1769, %v1370
    %v1829 = vsel %vm1810, %v1771, %v1372
    %v1831 = vsel %vm1810, %v1773, %v1374
    %v1832 = vsel %vm1810, %v1774, %v1362
    %v1834 = vsel %vm1810, %v1776, %v1376
    %v1836 = vsel %vm1810, %v1778, %v1378
    %v1838 = vsel %vm1810, %v1780, %v1380
    %v1839 = vsel %vm1810, %v1781, %v1362
    %v1841 = vsel %vm1810, %v1783, %v1382
    %v1843 = vsel %vm1810, %v1785, %v1384
    %v1845 = vsel %vm1810, %v1787, %v1386
    %v1846 = vsel %vm1810, %v1788, %v1362
    %v1848 = vsel %vm1810, %v1790, %v1388
    %v1850 = vsel %vm1810, %v1792, %v1390
    %v1852 = vsel %vm1810, %v1794, %v1392
    %v1853 = vsel %vm1810, %v1795, %v1362
    %v1855 = vsel %vm1810, %v1797, %v1394
    %v1857 = vsel %vm1810, %v1799, %v1396
    %v1859 = vsel %vm1810, %v1801, %v1398
    %v1860 = vsel %vm1810, %v1802, %v1362
    %v1862 = vsel %vm1810, %v1804, %v1400
    %v1864 = vsel %vm1810, %v1806, %v1402
    %v1866 = vsel %vm1810, %v1808, %v1404
    %v1867 = vsel %vm1810, %v1809, %v1362
    %vm1868 = vcmask 326656
    %v1870 = vsel %vm1868, %v1812, %v1406
    %v1872 = vsel %vm1868, %v1814, %v1408
    %v1874 = vsel %vm1868, %v1816, %v1410
    %v1876 = vsel %vm1868, %v1818, %v1412
    %v1878 = vsel %vm1868, %v1820, %v1414
    %v1880 = vsel %vm1868, %v1822, %v1416
    %v1882 = vsel %vm1868, %v1824, %v1418
    %v1883 = vsel %vm1868, %v1825, %v1412
    %v1885 = vsel %vm1868, %v1827, %v1420
    %v1887 = vsel %vm1868, %v1829, %v1422
    %v1889 = vsel %vm1868, %v1831, %v1424
    %v1890 = vsel %vm1868, %v1832, %v1412
    %v1892 = vsel %vm1868, %v1834, %v1426
    %v1894 = vsel %vm1868, %v1836, %v1428
    %v1896 = vsel %vm1868, %v1838, %v1430
    %v1897 = vsel %vm1868, %v1839, %v1412
    %v1899 = vsel %vm1868, %v1841, %v1432
    %v1901 = vsel %vm1868, %v1843, %v1434
    %v1903 = vsel %vm1868, %v1845, %v1436
    %v1904 = vsel %vm1868, %v1846, %v1412
    %v1906 = vsel %vm1868, %v1848, %v1438
    %v1908 = vsel %vm1868, %v1850, %v1440
    %v1910 = vsel %vm1868, %v1852, %v1442
    %v1911 = vsel %vm1868, %v1853, %v1412
    %v1913 = vsel %vm1868, %v1855, %v1444
    %v1915 = vsel %vm1868, %v1857, %v1446
    %v1917 = vsel %vm1868, %v1859, %v1448
    %v1918 = vsel %vm1868, %v1860, %v1412
    %v1920 = vsel %vm1868, %v1862, %v1450
    %v1922 = vsel %vm1868, %v1864, %v1452
    %v1924 = vsel %vm1868, %v1866, %v1454
    %v1925 = vsel %vm1868, %v1867, %v1412
    %v1926 = vld [vmem:[%s1] sm:$0xf]
    %v1927 = vld [vmem:[%s1 + $0x4] sm:$0xf]
    %v1928 = vld [vmem:[%s1 + $0x8] sm:$0xf]
    %v1929 = vld [vmem:[%s1 + $0xc] sm:$0xf]
    %v1930 = vld [vmem:[%s1 + $0x10] sm:$0xf]
    %v1931 = vld [vmem:[%s1 + $0x14] sm:$0x7]
    %v1932 = vld [vmem:[%s2] sm:$0x1]
    %v1934 = vperm.slane %v1932, 0
    %1936 = vst [vmem:[#allocation1] ss:$4 sm:$0xff] %v1870
    %s1937 = scalar_lea.vmem [#allocation1], 1
    %1938 = vst [vmem:[%s1937] ss:$4 sm:$0xff] %v1872
    %s1939 = scalar_lea.vmem [#allocation1], 2
    %1940 = vst [vmem:[%s1939] ss:$4 sm:$0xff] %v1874
    %s1941 = scalar_lea.vmem [#allocation1], 3
    %1942 = vst [vmem:[%s1941] ss:$4 sm:$0xff] %v1876
    %s1943 = scalar_lea.vmem [#allocation1], 32
    %1944 = vst [vmem:[%s1943] ss:$4 sm:$0xff] %v1878
    %s1945 = scalar_lea.vmem [#allocation1], 33
    %1946 = vst [vmem:[%s1945] ss:$4 sm:$0xff] %v1880
    %s1947 = scalar_lea.vmem [#allocation1], 34
    %1948 = vst [vmem:[%s1947] ss:$4 sm:$0xff] %v1882
    %s1949 = scalar_lea.vmem [#allocation1], 35
    %1950 = vst [vmem:[%s1949] ss:$4 sm:$0xff] %v1883
    %v1951 = vld.sshfl [vmem:[#allocation1] sm:$0xff pattern:$0x73625140]
    %v1952 = vld.sshfl [vmem:[#allocation1 + $0x20] sm:$0xff pattern:$0x73625140]
    %1953 = vst [vmem:[#allocation1] ss:$4 sm:$0xff] %v1885
    %1954 = vst [vmem:[%s1937] ss:$4 sm:$0xff] %v1887
    %1955 = vst [vmem:[%s1939] ss:$4 sm:$0xff] %v1889
    %1956 = vst [vmem:[%s1941] ss:$4 sm:$0xff] %v1890
    %1957 = vst [vmem:[%s1943] ss:$4 sm:$0xff] %v1892
    %1958 = vst [vmem:[%s1945] ss:$4 sm:$0xff] %v1894
    %1959 = vst [vmem:[%s1947] ss:$4 sm:$0xff] %v1896
    %1960 = vst [vmem:[%s1949] ss:$4 sm:$0xff] %v1897
    %v1961 = vld.sshfl [vmem:[#allocation1] sm:$0xff pattern:$0x73625140]
    %v1962 = vld.sshfl [vmem:[#allocation1 + $0x20] sm:$0xff pattern:$0x73625140]
    %1963 = vst [vmem:[#allocation1] ss:$4 sm:$0xff] %v1899
    %1964 = vst [vmem:[%s1937] ss:$4 sm:$0xff] %v1901
    %1965 = vst [vmem:[%s1939] ss:$4 sm:$0xff] %v1903
    %1966 = vst [vmem:[%s1941] ss:$4 sm:$0xff] %v1904
    %1967 = vst [vmem:[%s1943] ss:$4 sm:$0xff] %v1906
    %1968 = vst [vmem:[%s1945] ss:$4 sm:$0xff] %v1908
    %1969 = vst [vmem:[%s1947] ss:$4 sm:$0xff] %v1910
    %1970 = vst [vmem:[%s1949] ss:$4 sm:$0xff] %v1911
    %v1971 = vld.sshfl [vmem:[#allocation1] sm:$0xff pattern:$0x73625140]
    %v1972 = vld.sshfl [vmem:[#allocation1 + $0x20] sm:$0xff pattern:$0x73625140]
    %1973 = vst [vmem:[#allocation1] ss:$4 sm:$0xff] %v1913
    %1974 = vst [vmem:[%s1937] ss:$4 sm:$0xff] %v1915
    %1975 = vst [vmem:[%s1939] ss:$4 sm:$0xff] %v1917
    %1976 = vst [vmem:[%s1941] ss:$4 sm:$0xff] %v1918
    %1977 = vst [vmem:[%s1943] ss:$4 sm:$0xff] %v1920
    %1978 = vst [vmem:[%s1945] ss:$4 sm:$0xff] %v1922
    %1979 = vst [vmem:[%s1947] ss:$4 sm:$0xff] %v1924
    %1980 = vst [vmem:[%s1949] ss:$4 sm:$0xff] %v1925
    %v1981 = vld.sshfl [vmem:[#allocation1] sm:$0xff pattern:$0x73625140]
    %v1982 = vld.sshfl [vmem:[#allocation1 + $0x20] sm:$0xff pattern:$0x73625140]
    %v1989 = vunpack.c.l.b16 %v1926
    %v1990 = vunpack.c.l.b16 %v1927
    %v1991 = vunpack.c.l.b16 %v1928
    %v1992 = vunpack.c.l.b16 %v1929
    %v1993 = vunpack.c.l.b16 %v1930
    %v1994 = vunpack.c.l.b16 %v1931
    %v1995 = vpack.c.b16 %v1990, %v1989
    %v1996 = vpack.c.b16 %v1992, %v1991
    %v1997 = vpack.c.b16 %v1994, %v1993
    %vm2000 = vcmask 367616
    %v2001 = vsel %vm2000, %v1951, 0
    %v2003 = vsel %vm2000, %v1952, 0
    %v2005 = vsel %vm2000, %v1961, 0
    %v2007 = vsel %vm2000, %v1962, 0
    %v2009 = vsel %vm2000, %v1971, 0
    %v2011 = vsel %vm2000, %v1972, 0
    %v2013 = vsel %vm2000, %v1981, 0
    %v2015 = vsel %vm2000, %v1982, 0
    %vm2017 = vcmask 1045504
    %vm2018 = vcmask 1046528
    %v2019 = vsel %vm2017, 4294967295, 65535
    %v2020 = vsel %vm2018, %v2019, 0
    %v2022 = vand.u32 %v1997, %v2020
    %2024 = vmatpush.bf16.msra.mxu0 0
    %2025 = vmatpush.bf16.msra.mxu0 0
    %2026 = vmatpush.bf16.msra.mxu0 0
    %2027 = vmatpush.bf16.msra.mxu0 0
    %2028 = vmatpush.bf16.msra.mxu0 0
    %2029 = vmatpush.bf16.msra.mxu0 %v2022
    %2030 = vmatpush.bf16.msra.mxu0 %v1996
    %2031 = vmatpush.bf16.msra.mxu0 %v1995
    %2032 = vmatmul.bf16.gmra.mxu0 %v2001
    %v2033 = vpop.f32.mrf.mxu0
    %v2034 = vadd.f32 %v1934, %v2033
    %v2035 = vpop.f32.mrf.mxu0
    %v2036 = vadd.f32 %v1934, %v2035
    %2037 = vmatmul.bf16.gmra.mxu0 %v2003
    %v2038 = vpop.f32.mrf.mxu0
    %v2039 = vadd.f32 %v1934, %v2038
    %v2040 = vpop.f32.mrf.mxu0
    %v2041 = vadd.f32 %v1934, %v2040
    %2042 = vmatmul.bf16.gmra.mxu0 %v2005
    %v2043 = vpop.f32.mrf.mxu0
    %v2044 = vadd.f32 %v1934, %v2043
    %v2045 = vpop.f32.mrf.mxu0
    %v2046 = vadd.f32 %v1934, %v2045
    %2047 = vmatmul.bf16.gmra.mxu0 %v2007
    %v2048 = vpop.f32.mrf.mxu0
    %v2049 = vadd.f32 %v1934, %v2048
    %v2050 = vpop.f32.mrf.mxu0
    %v2051 = vadd.f32 %v1934, %v2050
    %2052 = vmatmul.bf16.gmra.mxu0 %v2009
    %v2053 = vpop.f32.mrf.mxu0
    %v2054 = vadd.f32 %v1934, %v2053
    %v2055 = vpop.f32.mrf.mxu0
    %v2056 = vadd.f32 %v1934, %v2055
    %2057 = vmatmul.bf16.gmra.mxu0 %v2011
    %v2058 = vpop.f32.mrf.mxu0
    %v2059 = vadd.f32 %v1934, %v2058
    %v2060 = vpop.f32.mrf.mxu0
    %v2061 = vadd.f32 %v1934, %v2060
    %2062 = vmatmul.bf16.gmra.mxu0 %v2013
    %v2063 = vpop.f32.mrf.mxu0
    %v2064 = vadd.f32 %v1934, %v2063
    %v2065 = vpop.f32.mrf.mxu0
    %v2066 = vadd.f32 %v1934, %v2065
    %2067 = vmatmul.bf16.gmra.mxu0 %v2015
    %v2068 = vpop.f32.mrf.mxu0
    %v2069 = vadd.f32 %v1934, %v2068
    %v2070 = vpop.f32.mrf.mxu0
    %v2071 = vadd.f32 %v1934, %v2070
    %2072 = vdwg.mxu0
    %v2073 = vmax.f32 %v2034, 0.0
    %v2074 = vmax.f32 %v2036, 0.0
    %v2075 = vmax.f32 %v2039, 0.0
    %v2076 = vmax.f32 %v2041, 0.0
    %v2077 = vmax.f32 %v2044, 0.0
    %v2078 = vmax.f32 %v2046, 0.0
    %v2079 = vmax.f32 %v2049, 0.0
    %v2080 = vmax.f32 %v2051, 0.0
    %v2081 = vmax.f32 %v2054, 0.0
    %v2082 = vmax.f32 %v2056, 0.0
    %v2083 = vmax.f32 %v2059, 0.0
    %v2084 = vmax.f32 %v2061, 0.0
    %v2085 = vmax.f32 %v2064, 0.0
    %v2086 = vmax.f32 %v2066, 0.0
    %v2087 = vmax.f32 %v2069, 0.0
    %v2088 = vmax.f32 %v2071, 0.0
    %v2089 = vpack.c.bf16 %v2073, %v2073
    %v2090 = vpack.c.bf16 %v2074, %v2074
    %v2091 = vpack.c.bf16 %v2075, %v2075
    %v2092 = vpack.c.bf16 %v2076, %v2076
    %v2093 = vpack.c.bf16 %v2077, %v2077
    %v2094 = vpack.c.bf16 %v2078, %v2078
    %v2095 = vpack.c.bf16 %v2079, %v2079
    %v2096 = vpack.c.bf16 %v2080, %v2080
    %v2097 = vpack.c.bf16 %v2081, %v2081
    %v2098 = vpack.c.bf16 %v2082, %v2082
    %v2099 = vpack.c.bf16 %v2083, %v2083
    %v2100 = vpack.c.bf16 %v2084, %v2084
    %v2101 = vpack.c.bf16 %v2085, %v2085
    %v2102 = vpack.c.bf16 %v2086, %v2086
    %v2103 = vpack.c.bf16 %v2087, %v2087
    %v2104 = vpack.c.bf16 %v2088, %v2088
    %v2121 = vrot.slane %v2089, 2
    %v2122 = vrot.slane %v2090, 2
    %v2123 = vrot.slane %v2091, 2
    %v2124 = vrot.slane %v2092, 2
    %v2125 = vrot.slane %v2093, 2
    %v2126 = vrot.slane %v2094, 2
    %v2127 = vrot.slane %v2095, 2
    %v2128 = vrot.slane %v2096, 2
    %v2129 = vrot.slane %v2097, 2
    %v2130 = vrot.slane %v2098, 2
    %v2131 = vrot.slane %v2099, 2
    %v2132 = vrot.slane %v2100, 2
    %v2133 = vrot.slane %v2101, 2
    %v2134 = vrot.slane %v2102, 2
    %v2135 = vrot.slane %v2103, 2
    %v2136 = vrot.slane %v2104, 2
    %vm2137 = vcmask 1041408
    %v2140 = vsel %vm2137, %v2089, %v2121
    %vm2141 = vcmask 1043458
    %v2142 = vsel %vm2141, %v2089, %v2121
    %v2144 = vrot.slane %v2142, 2
    %v2147 = vsel %vm2137, %v2090, %v2122
    %v2148 = vsel %vm2141, %v2090, %v2122
    %v2150 = vrot.slane %v2148, 2
    %v2153 = vsel %vm2137, %v2091, %v2123
    %v2154 = vsel %vm2141, %v2091, %v2123
    %v2156 = vrot.slane %v2154, 2
    %v2159 = vsel %vm2137, %v2092, %v2124
    %v2160 = vsel %vm2141, %v2092, %v2124
    %v2162 = vrot.slane %v2160, 2
    %v2165 = vsel %vm2137, %v2093, %v2125
    %v2166 = vsel %vm2141, %v2093, %v2125
    %v2168 = vrot.slane %v2166, 2
    %v2171 = vsel %vm2137, %v2094, %v2126
    %v2172 = vsel %vm2141, %v2094, %v2126
    %v2174 = vrot.slane %v2172, 2
    %v2177 = vsel %vm2137, %v2095, %v2127
    %v2178 = vsel %vm2141, %v2095, %v2127
    %v2180 = vrot.slane %v2178, 2
    %v2183 = vsel %vm2137, %v2096, %v2128
    %v2184 = vsel %vm2141, %v2096, %v2128
    %v2186 = vrot.slane %v2184, 2
    %v2189 = vsel %vm2137, %v2097, %v2129
    %v2190 = vsel %vm2141, %v2097, %v2129
    %v2192 = vrot.slane %v2190, 2
    %v2195 = vsel %vm2137, %v2098, %v2130
    %v2196 = vsel %vm2141, %v2098, %v2130
    %v2198 = vrot.slane %v2196, 2
    %v2201 = vsel %vm2137, %v2099, %v2131
    %v2202 = vsel %vm2141, %v2099, %v2131
    %v2204 = vrot.slane %v2202, 2
    %v2207 = vsel %vm2137, %v2100, %v2132
    %v2208 = vsel %vm2141, %v2100, %v2132
    %v2210 = vrot.slane %v2208, 2
    %v2213 = vsel %vm2137, %v2101, %v2133
    %v2214 = vsel %vm2141, %v2101, %v2133
    %v2216 = vrot.slane %v2214, 2
    %v2219 = vsel %vm2137, %v2102, %v2134
    %v2220 = vsel %vm2141, %v2102, %v2134
    %v2222 = vrot.slane %v2220, 2
    %v2225 = vsel %vm2137, %v2103, %v2135
    %v2226 = vsel %vm2141, %v2103, %v2135
    %v2228 = vrot.slane %v2226, 2
    %v2231 = vsel %vm2137, %v2104, %v2136
    %v2232 = vsel %vm2141, %v2104, %v2136
    %v2234 = vrot.slane %v2232, 2
    %v2235 = vshrl.u32 %v2140, 16
    %v2237 = vrot.slane %v2235, 7
    %v2238 = vshll.u32 %v2140, 16
    %v2240 = vor.u32 %v2237, %v2238
    %v2242 = vshrl.u32 %v2144, 16
    %v2244 = vrot.slane %v2242, 7
    %v2245 = vshll.u32 %v2144, 16
    %v2247 = vor.u32 %v2244, %v2245
    %v2248 = vshrl.u32 %v2147, 16
    %v2250 = vrot.slane %v2248, 7
    %v2251 = vshll.u32 %v2147, 16
    %v2253 = vor.u32 %v2250, %v2251
    %v2255 = vshrl.u32 %v2150, 16
    %v2257 = vrot.slane %v2255, 7
    %v2258 = vshll.u32 %v2150, 16
    %v2260 = vor.u32 %v2257, %v2258
    %v2261 = vshrl.u32 %v2153, 16
    %v2263 = vrot.slane %v2261, 7
    %v2264 = vshll.u32 %v2153, 16
    %v2266 = vor.u32 %v2263, %v2264
    %v2268 = vshrl.u32 %v2156, 16
    %v2270 = vrot.slane %v2268, 7
    %v2271 = vshll.u32 %v2156, 16
    %v2273 = vor.u32 %v2270, %v2271
    %v2274 = vshrl.u32 %v2159, 16
    %v2276 = vrot.slane %v2274, 7
    %v2277 = vshll.u32 %v2159, 16
    %v2279 = vor.u32 %v2276, %v2277
    %v2281 = vshrl.u32 %v2162, 16
    %v2283 = vrot.slane %v2281, 7
    %v2284 = vshll.u32 %v2162, 16
    %v2286 = vor.u32 %v2283, %v2284
    %v2287 = vshrl.u32 %v2165, 16
    %v2289 = vrot.slane %v2287, 7
    %v2290 = vshll.u32 %v2165, 16
    %v2292 = vor.u32 %v2289, %v2290
    %v2294 = vshrl.u32 %v2168, 16
    %v2296 = vrot.slane %v2294, 7
    %v2297 = vshll.u32 %v2168, 16
    %v2299 = vor.u32 %v2296, %v2297
    %v2300 = vshrl.u32 %v2171, 16
    %v2302 = vrot.slane %v2300, 7
    %v2303 = vshll.u32 %v2171, 16
    %v2305 = vor.u32 %v2302, %v2303
    %v2307 = vshrl.u32 %v2174, 16
    %v2309 = vrot.slane %v2307, 7
    %v2310 = vshll.u32 %v2174, 16
    %v2312 = vor.u32 %v2309, %v2310
    %v2313 = vshrl.u32 %v2177, 16
    %v2315 = vrot.slane %v2313, 7
    %v2316 = vshll.u32 %v2177, 16
    %v2318 = vor.u32 %v2315, %v2316
    %v2320 = vshrl.u32 %v2180, 16
    %v2322 = vrot.slane %v2320, 7
    %v2323 = vshll.u32 %v2180, 16
    %v2325 = vor.u32 %v2322, %v2323
    %v2326 = vshrl.u32 %v2183, 16
    %v2328 = vrot.slane %v2326, 7
    %v2329 = vshll.u32 %v2183, 16
    %v2331 = vor.u32 %v2328, %v2329
    %v2333 = vshrl.u32 %v2186, 16
    %v2335 = vrot.slane %v2333, 7
    %v2336 = vshll.u32 %v2186, 16
    %v2338 = vor.u32 %v2335, %v2336
    %v2339 = vshrl.u32 %v2189, 16
    %v2341 = vrot.slane %v2339, 7
    %v2342 = vshll.u32 %v2189, 16
    %v2344 = vor.u32 %v2341, %v2342
    %v2346 = vshrl.u32 %v2192, 16
    %v2348 = vrot.slane %v2346, 7
    %v2349 = vshll.u32 %v2192, 16
    %v2351 = vor.u32 %v2348, %v2349
    %v2352 = vshrl.u32 %v2195, 16
    %v2354 = vrot.slane %v2352, 7
    %v2355 = vshll.u32 %v2195, 16
    %v2357 = vor.u32 %v2354, %v2355
    %v2359 = vshrl.u32 %v2198, 16
    %v2361 = vrot.slane %v2359, 7
    %v2362 = vshll.u32 %v2198, 16
    %v2364 = vor.u32 %v2361, %v2362
    %v2365 = vshrl.u32 %v2201, 16
    %v2367 = vrot.slane %v2365, 7
    %v2368 = vshll.u32 %v2201, 16
    %v2370 = vor.u32 %v2367, %v2368
    %v2372 = vshrl.u32 %v2204, 16
    %v2374 = vrot.slane %v2372, 7
    %v2375 = vshll.u32 %v2204, 16
    %v2377 = vor.u32 %v2374, %v2375
    %v2378 = vshrl.u32 %v2207, 16
    %v2380 = vrot.slane %v2378, 7
    %v2381 = vshll.u32 %v2207, 16
    %v2383 = vor.u32 %v2380, %v2381
    %v2385 = vshrl.u32 %v2210, 16
    %v2387 = vrot.slane %v2385, 7
    %v2388 = vshll.u32 %v2210, 16
    %v2390 = vor.u32 %v2387, %v2388
    %v2391 = vshrl.u32 %v2213, 16
    %v2393 = vrot.slane %v2391, 7
    %v2394 = vshll.u32 %v2213, 16
    %v2396 = vor.u32 %v2393, %v2394
    %v2398 = vshrl.u32 %v2216, 16
    %v2400 = vrot.slane %v2398, 7
    %v2401 = vshll.u32 %v2216, 16
    %v2403 = vor.u32 %v2400, %v2401
    %v2404 = vshrl.u32 %v2219, 16
    %v2406 = vrot.slane %v2404, 7
    %v2407 = vshll.u32 %v2219, 16
    %v2409 = vor.u32 %v2406, %v2407
    %v2411 = vshrl.u32 %v2222, 16
    %v2413 = vrot.slane %v2411, 7
    %v2414 = vshll.u32 %v2222, 16
    %v2416 = vor.u32 %v2413, %v2414
    %v2417 = vshrl.u32 %v2225, 16
    %v2419 = vrot.slane %v2417, 7
    %v2420 = vshll.u32 %v2225, 16
    %v2422 = vor.u32 %v2419, %v2420
    %v2424 = vshrl.u32 %v2228, 16
    %v2426 = vrot.slane %v2424, 7
    %v2427 = vshll.u32 %v2228, 16
    %v2429 = vor.u32 %v2426, %v2427
    %v2430 = vshrl.u32 %v2231, 16
    %v2432 = vrot.slane %v2430, 7
    %v2433 = vshll.u32 %v2231, 16
    %v2435 = vor.u32 %v2432, %v2433
    %v2437 = vshrl.u32 %v2234, 16
    %v2439 = vrot.slane %v2437, 7
    %v2440 = vshll.u32 %v2234, 16
    %v2442 = vor.u32 %v2439, %v2440
    %v2475 = vsel %vm646, 0, %v2240
    %v2476 = vsel %vm646, 0, %v2247
    %v2477 = vsel %vm646, 0, %v2253
    %v2478 = vsel %vm646, 0, %v2260
    %v2479 = vsel %vm646, 0, %v2266
    %v2480 = vsel %vm646, 0, %v2273
    %v2481 = vsel %vm646, 0, %v2279
    %v2482 = vsel %vm646, 0, %v2286
    %v2483 = vsel %vm646, 0, %v2292
    %v2484 = vsel %vm646, 0, %v2299
    %v2485 = vsel %vm646, 0, %v2305
    %v2486 = vsel %vm646, 0, %v2312
    %v2487 = vsel %vm646, 0, %v2318
    %v2488 = vsel %vm646, 0, %v2325
    %v2489 = vsel %vm646, 0, %v2331
    %v2490 = vsel %vm646, 0, %v2338
    %v2491 = vsel %vm646, 0, %v2344
    %v2492 = vsel %vm646, 0, %v2351
    %v2493 = vsel %vm646, 0, %v2357
    %v2494 = vsel %vm646, 0, %v2364
    %v2495 = vsel %vm646, 0, %v2370
    %v2496 = vsel %vm646, 0, %v2377
    %v2497 = vsel %vm646, 0, %v2383
    %v2498 = vsel %vm646, 0, %v2390
    %v2499 = vsel %vm646, 0, %v2396
    %v2500 = vsel %vm646, 0, %v2403
    %v2501 = vsel %vm646, 0, %v2409
    %v2502 = vsel %vm646, 0, %v2416
    %v2503 = vsel %vm646, 0, %v2422
    %v2504 = vsel %vm646, 0, %v2429
    %v2505 = vsel %vm646, 0, %v2435
    %v2506 = vsel %vm646, 0, %v2442
    %v2507 = vsel %vm682, %v2475, 0
    %v2508 = vsel %vm682, %v2476, 0
    %v2509 = vsel %vm682, %v2477, 0
    %v2510 = vsel %vm682, %v2478, 0
    %v2511 = vsel %vm682, %v2479, 0
    %v2512 = vsel %vm682, %v2480, 0
    %v2513 = vsel %vm682, %v2481, 0
    %v2514 = vsel %vm682, %v2482, 0
    %v2515 = vsel %vm682, %v2483, 0
    %v2516 = vsel %vm682, %v2484, 0
    %v2517 = vsel %vm682, %v2485, 0
    %v2518 = vsel %vm682, %v2486, 0
    %v2519 = vsel %vm682, %v2487, 0
    %v2520 = vsel %vm682, %v2488, 0
    %v2521 = vsel %vm682, %v2489, 0
    %v2522 = vsel %vm682, %v2490, 0
    %v2523 = vsel %vm682, %v2491, 0
    %v2524 = vsel %vm682, %v2492, 0
    %v2525 = vsel %vm682, %v2493, 0
    %v2526 = vsel %vm682, %v2494, 0
    %v2527 = vsel %vm682, %v2495, 0
    %v2528 = vsel %vm682, %v2496, 0
    %v2529 = vsel %vm682, %v2497, 0
    %v2530 = vsel %vm682, %v2498, 0
    %v2531 = vsel %vm682, %v2499, 0
    %v2532 = vsel %vm682, %v2500, 0
    %v2533 = vsel %vm682, %v2501, 0
    %v2534 = vsel %vm682, %v2502, 0
    %v2535 = vsel %vm682, %v2503, 0
    %v2536 = vsel %vm682, %v2504, 0
    %v2537 = vsel %vm682, %v2505, 0
    %v2538 = vsel %vm682, %v2506, 0
    %v2540 = vshrl.u32 %v2507, 16
    %v2542 = vshll.u32 %v2507, 16
    %v2544 = vrot.slane %v2542, 1
    %v2545 = vor.u32 %v2540, %v2544
    %v2547 = vshrl.u32 %v2508, 16
    %v2549 = vshll.u32 %v2508, 16
    %v2551 = vrot.slane %v2549, 1
    %v2552 = vor.u32 %v2547, %v2551
    %v2554 = vshrl.u32 %v2509, 16
    %v2556 = vshll.u32 %v2509, 16
    %v2558 = vrot.slane %v2556, 1
    %v2559 = vor.u32 %v2554, %v2558
    %v2561 = vshrl.u32 %v2511, 16
    %v2563 = vshll.u32 %v2511, 16
    %v2565 = vrot.slane %v2563, 1
    %v2566 = vor.u32 %v2561, %v2565
    %v2568 = vshrl.u32 %v2512, 16
    %v2570 = vshll.u32 %v2512, 16
    %v2572 = vrot.slane %v2570, 1
    %v2573 = vor.u32 %v2568, %v2572
    %v2575 = vshrl.u32 %v2513, 16
    %v2577 = vshll.u32 %v2513, 16
    %v2579 = vrot.slane %v2577, 1
    %v2580 = vor.u32 %v2575, %v2579
    %v2582 = vshrl.u32 %v2515, 16
    %v2584 = vshll.u32 %v2515, 16
    %v2586 = vrot.slane %v2584, 1
    %v2587 = vor.u32 %v2582, %v2586
    %v2589 = vshrl.u32 %v2516, 16
    %v2591 = vshll.u32 %v2516, 16
    %v2593 = vrot.slane %v2591, 1
    %v2594 = vor.u32 %v2589, %v2593
    %v2596 = vshrl.u32 %v2517, 16
    %v2598 = vshll.u32 %v2517, 16
    %v2600 = vrot.slane %v2598, 1
    %v2601 = vor.u32 %v2596, %v2600
    %v2603 = vshrl.u32 %v2519, 16
    %v2605 = vshll.u32 %v2519, 16
    %v2607 = vrot.slane %v2605, 1
    %v2608 = vor.u32 %v2603, %v2607
    %v2610 = vshrl.u32 %v2520, 16
    %v2612 = vshll.u32 %v2520, 16
    %v2614 = vrot.slane %v2612, 1
    %v2615 = vor.u32 %v2610, %v2614
    %v2617 = vshrl.u32 %v2521, 16
    %v2619 = vshll.u32 %v2521, 16
    %v2621 = vrot.slane %v2619, 1
    %v2622 = vor.u32 %v2617, %v2621
    %v2624 = vshrl.u32 %v2523, 16
    %v2626 = vshll.u32 %v2523, 16
    %v2628 = vrot.slane %v2626, 1
    %v2629 = vor.u32 %v2624, %v2628
    %v2631 = vshrl.u32 %v2524, 16
    %v2633 = vshll.u32 %v2524, 16
    %v2635 = vrot.slane %v2633, 1
    %v2636 = vor.u32 %v2631, %v2635
    %v2638 = vshrl.u32 %v2525, 16
    %v2640 = vshll.u32 %v2525, 16
    %v2642 = vrot.slane %v2640, 1
    %v2643 = vor.u32 %v2638, %v2642
    %v2645 = vshrl.u32 %v2527, 16
    %v2647 = vshll.u32 %v2527, 16
    %v2649 = vrot.slane %v2647, 1
    %v2650 = vor.u32 %v2645, %v2649
    %v2652 = vshrl.u32 %v2528, 16
    %v2654 = vshll.u32 %v2528, 16
    %v2656 = vrot.slane %v2654, 1
    %v2657 = vor.u32 %v2652, %v2656
    %v2659 = vshrl.u32 %v2529, 16
    %v2661 = vshll.u32 %v2529, 16
    %v2663 = vrot.slane %v2661, 1
    %v2664 = vor.u32 %v2659, %v2663
    %v2666 = vshrl.u32 %v2531, 16
    %v2668 = vshll.u32 %v2531, 16
    %v2670 = vrot.slane %v2668, 1
    %v2671 = vor.u32 %v2666, %v2670
    %v2673 = vshrl.u32 %v2532, 16
    %v2675 = vshll.u32 %v2532, 16
    %v2677 = vrot.slane %v2675, 1
    %v2678 = vor.u32 %v2673, %v2677
    %v2680 = vshrl.u32 %v2533, 16
    %v2682 = vshll.u32 %v2533, 16
    %v2684 = vrot.slane %v2682, 1
    %v2685 = vor.u32 %v2680, %v2684
    %v2687 = vshrl.u32 %v2535, 16
    %v2689 = vshll.u32 %v2535, 16
    %v2691 = vrot.slane %v2689, 1
    %v2692 = vor.u32 %v2687, %v2691
    %v2694 = vshrl.u32 %v2536, 16
    %v2696 = vshll.u32 %v2536, 16
    %v2698 = vrot.slane %v2696, 1
    %v2699 = vor.u32 %v2694, %v2698
    %v2701 = vshrl.u32 %v2537, 16
    %v2703 = vshll.u32 %v2537, 16
    %v2705 = vrot.slane %v2703, 1
    %v2706 = vor.u32 %v2701, %v2705
    %2707 = vrot.lane.b32.xlu0 %v722, 32
    %v2708 = vpop.permute.xlu0 %2707
    %2709 = vrot.lane.b32.xlu0 %v2545, 32
    %v2710 = vpop.permute.xlu0 %2709
    %2711 = vrot.lane.b32.xlu0 %v2552, 32
    %v2712 = vpop.permute.xlu0 %2711
    %2713 = vrot.lane.b32.xlu0 %v2559, 32
    %v2714 = vpop.permute.xlu0 %2713
    %2715 = vrot.lane.b32.xlu0 %v2566, 32
    %v2716 = vpop.permute.xlu0 %2715
    %2717 = vrot.lane.b32.xlu0 %v2573, 32
    %v2718 = vpop.permute.xlu0 %2717
    %2719 = vrot.lane.b32.xlu0 %v2580, 32
    %v2720 = vpop.permute.xlu0 %2719
    %2721 = vrot.lane.b32.xlu0 %v2587, 32
    %v2722 = vpop.permute.xlu0 %2721
    %2723 = vrot.lane.b32.xlu0 %v2594, 32
    %v2724 = vpop.permute.xlu0 %2723
    %2725 = vrot.lane.b32.xlu0 %v2601, 32
    %v2726 = vpop.permute.xlu0 %2725
    %2727 = vrot.lane.b32.xlu0 %v2608, 32
    %v2728 = vpop.permute.xlu0 %2727
    %2729 = vrot.lane.b32.xlu0 %v2615, 32
    %v2730 = vpop.permute.xlu0 %2729
    %2731 = vrot.lane.b32.xlu0 %v2622, 32
    %v2732 = vpop.permute.xlu0 %2731
    %2733 = vrot.lane.b32.xlu0 %v2629, 32
    %v2734 = vpop.permute.xlu0 %2733
    %2735 = vrot.lane.b32.xlu0 %v2636, 32
    %v2736 = vpop.permute.xlu0 %2735
    %2737 = vrot.lane.b32.xlu0 %v2643, 32
    %v2738 = vpop.permute.xlu0 %2737
    %2739 = vrot.lane.b32.xlu0 %v2650, 32
    %v2740 = vpop.permute.xlu0 %2739
    %2741 = vrot.lane.b32.xlu0 %v2657, 32
    %v2742 = vpop.permute.xlu0 %2741
    %2743 = vrot.lane.b32.xlu0 %v2664, 32
    %v2744 = vpop.permute.xlu0 %2743
    %2745 = vrot.lane.b32.xlu0 %v2671, 32
    %v2746 = vpop.permute.xlu0 %2745
    %2747 = vrot.lane.b32.xlu0 %v2678, 32
    %v2748 = vpop.permute.xlu0 %2747
    %2749 = vrot.lane.b32.xlu0 %v2685, 32
    %v2750 = vpop.permute.xlu0 %2749
    %2751 = vrot.lane.b32.xlu0 %v2692, 32
    %v2752 = vpop.permute.xlu0 %2751
    %2753 = vrot.lane.b32.xlu0 %v2699, 32
    %v2754 = vpop.permute.xlu0 %2753
    %2755 = vrot.lane.b32.xlu0 %v2706, 32
    %v2756 = vpop.permute.xlu0 %2755
    %v2781 = vrot.slane %v2507, 1
    %v2782 = vrot.slane %v2508, 1
    %v2783 = vrot.slane %v2509, 1
    %v2784 = vrot.slane %v2511, 1
    %v2785 = vrot.slane %v2512, 1
    %v2786 = vrot.slane %v2513, 1
    %v2787 = vrot.slane %v2515, 1
    %v2788 = vrot.slane %v2516, 1
    %v2789 = vrot.slane %v2517, 1
    %v2790 = vrot.slane %v2519, 1
    %v2791 = vrot.slane %v2520, 1
    %v2792 = vrot.slane %v2521, 1
    %v2793 = vrot.slane %v2523, 1
    %v2794 = vrot.slane %v2524, 1
    %v2795 = vrot.slane %v2525, 1
    %v2796 = vrot.slane %v2527, 1
    %v2797 = vrot.slane %v2528, 1
    %v2798 = vrot.slane %v2529, 1
    %v2799 = vrot.slane %v2531, 1
    %v2800 = vrot.slane %v2532, 1
    %v2801 = vrot.slane %v2533, 1
    %v2802 = vrot.slane %v2535, 1
    %v2803 = vrot.slane %v2536, 1
    %v2804 = vrot.slane %v2537, 1
    %2805 = vrot.lane.b32.xlu0 %v966, 64
    %v2806 = vpop.permute.xlu0 %2805
    %2807 = vrot.lane.b32.xlu0 %v2781, 64
    %v2808 = vpop.permute.xlu0 %2807
    %2809 = vrot.lane.b32.xlu0 %v2782, 64
    %v2810 = vpop.permute.xlu0 %2809
    %2811 = vrot.lane.b32.xlu0 %v2783, 64
    %v2812 = vpop.permute.xlu0 %2811
    %2813 = vrot.lane.b32.xlu0 %v2784, 64
    %v2814 = vpop.permute.xlu0 %2813
    %2815 = vrot.lane.b32.xlu0 %v2785, 64
    %v2816 = vpop.permute.xlu0 %2815
    %2817 = vrot.lane.b32.xlu0 %v2786, 64
    %v2818 = vpop.permute.xlu0 %2817
    %2819 = vrot.lane.b32.xlu0 %v2787, 64
    %v2820 = vpop.permute.xlu0 %2819
    %2821 = vrot.lane.b32.xlu0 %v2788, 64
    %v2822 = vpop.permute.xlu0 %2821
    %2823 = vrot.lane.b32.xlu0 %v2789, 64
    %v2824 = vpop.permute.xlu0 %2823
    %2825 = vrot.lane.b32.xlu0 %v2790, 64
    %v2826 = vpop.permute.xlu0 %2825
    %2827 = vrot.lane.b32.xlu0 %v2791, 64
    %v2828 = vpop.permute.xlu0 %2827
    %2829 = vrot.lane.b32.xlu0 %v2792, 64
    %v2830 = vpop.permute.xlu0 %2829
    %2831 = vrot.lane.b32.xlu0 %v2793, 64
    %v2832 = vpop.permute.xlu0 %2831
    %2833 = vrot.lane.b32.xlu0 %v2794, 64
    %v2834 = vpop.permute.xlu0 %2833
    %2835 = vrot.lane.b32.xlu0 %v2795, 64
    %v2836 = vpop.permute.xlu0 %2835
    %2837 = vrot.lane.b32.xlu0 %v2796, 64
    %v2838 = vpop.permute.xlu0 %2837
    %2839 = vrot.lane.b32.xlu0 %v2797, 64
    %v2840 = vpop.permute.xlu0 %2839
    %2841 = vrot.lane.b32.xlu0 %v2798, 64
    %v2842 = vpop.permute.xlu0 %2841
    %2843 = vrot.lane.b32.xlu0 %v2799, 64
    %v2844 = vpop.permute.xlu0 %2843
    %2845 = vrot.lane.b32.xlu0 %v2800, 64
    %v2846 = vpop.permute.xlu0 %2845
    %2847 = vrot.lane.b32.xlu0 %v2801, 64
    %v2848 = vpop.permute.xlu0 %2847
    %2849 = vrot.lane.b32.xlu0 %v2802, 64
    %v2850 = vpop.permute.xlu0 %2849
    %2851 = vrot.lane.b32.xlu0 %v2803, 64
    %v2852 = vpop.permute.xlu0 %2851
    %2853 = vrot.lane.b32.xlu0 %v2804, 64
    %v2854 = vpop.permute.xlu0 %2853
    %2863 = vrot.lane.b32.xlu0 %v2507, 96
    %v2864 = vpop.permute.xlu0 %2863
    %2865 = vrot.lane.b32.xlu0 %v2508, 96
    %v2866 = vpop.permute.xlu0 %2865
    %2867 = vrot.lane.b32.xlu0 %v2509, 96
    %v2868 = vpop.permute.xlu0 %2867
    %2869 = vrot.lane.b32.xlu0 %v2510, 96
    %v2870 = vpop.permute.xlu0 %2869
    %2871 = vrot.lane.b32.xlu0 %v2511, 96
    %v2872 = vpop.permute.xlu0 %2871
    %2873 = vrot.lane.b32.xlu0 %v2512, 96
    %v2874 = vpop.permute.xlu0 %2873
    %2875 = vrot.lane.b32.xlu0 %v2513, 96
    %v2876 = vpop.permute.xlu0 %2875
    %2877 = vrot.lane.b32.xlu0 %v2514, 96
    %v2878 = vpop.permute.xlu0 %2877
    %2879 = vrot.lane.b32.xlu0 %v2515, 96
    %v2880 = vpop.permute.xlu0 %2879
    %2881 = vrot.lane.b32.xlu0 %v2516, 96
    %v2882 = vpop.permute.xlu0 %2881
    %2883 = vrot.lane.b32.xlu0 %v2517, 96
    %v2884 = vpop.permute.xlu0 %2883
    %2885 = vrot.lane.b32.xlu0 %v2518, 96
    %v2886 = vpop.permute.xlu0 %2885
    %2887 = vrot.lane.b32.xlu0 %v2519, 96
    %v2888 = vpop.permute.xlu0 %2887
    %2889 = vrot.lane.b32.xlu0 %v2520, 96
    %v2890 = vpop.permute.xlu0 %2889
    %2891 = vrot.lane.b32.xlu0 %v2521, 96
    %v2892 = vpop.permute.xlu0 %2891
    %2893 = vrot.lane.b32.xlu0 %v2522, 96
    %v2894 = vpop.permute.xlu0 %2893
    %2895 = vrot.lane.b32.xlu0 %v2523, 96
    %v2896 = vpop.permute.xlu0 %2895
    %2897 = vrot.lane.b32.xlu0 %v2524, 96
    %v2898 = vpop.permute.xlu0 %2897
    %2899 = vrot.lane.b32.xlu0 %v2525, 96
    %v2900 = vpop.permute.xlu0 %2899
    %2901 = vrot.lane.b32.xlu0 %v2526, 96
    %v2902 = vpop.permute.xlu0 %2901
    %2903 = vrot.lane.b32.xlu0 %v2527, 96
    %v2904 = vpop.permute.xlu0 %2903
    %2905 = vrot.lane.b32.xlu0 %v2528, 96
    %v2906 = vpop.permute.xlu0 %2905
    %2907 = vrot.lane.b32.xlu0 %v2529, 96
    %v2908 = vpop.permute.xlu0 %2907
    %2909 = vrot.lane.b32.xlu0 %v2530, 96
    %v2910 = vpop.permute.xlu0 %2909
    %2911 = vrot.lane.b32.xlu0 %v2531, 96
    %v2912 = vpop.permute.xlu0 %2911
    %2913 = vrot.lane.b32.xlu0 %v2532, 96
    %v2914 = vpop.permute.xlu0 %2913
    %2915 = vrot.lane.b32.xlu0 %v2533, 96
    %v2916 = vpop.permute.xlu0 %2915
    %2917 = vrot.lane.b32.xlu0 %v2534, 96
    %v2918 = vpop.permute.xlu0 %2917
    %2919 = vrot.lane.b32.xlu0 %v2535, 96
    %v2920 = vpop.permute.xlu0 %2919
    %2921 = vrot.lane.b32.xlu0 %v2536, 96
    %v2922 = vpop.permute.xlu0 %2921
    %2923 = vrot.lane.b32.xlu0 %v2537, 96
    %v2924 = vpop.permute.xlu0 %2923
    %2925 = vrot.lane.b32.xlu0 %v2538, 96
    %v2926 = vpop.permute.xlu0 %2925
    %v2928 = vshrl.u32 %v2510, 16
    %v2930 = vshll.u32 %v2510, 16
    %v2932 = vrot.slane %v2930, 1
    %v2933 = vor.u32 %v2928, %v2932
    %v2935 = vshrl.u32 %v2514, 16
    %v2937 = vshll.u32 %v2514, 16
    %v2939 = vrot.slane %v2937, 1
    %v2940 = vor.u32 %v2935, %v2939
    %v2942 = vshrl.u32 %v2518, 16
    %v2944 = vshll.u32 %v2518, 16
    %v2946 = vrot.slane %v2944, 1
    %v2947 = vor.u32 %v2942, %v2946
    %v2949 = vshrl.u32 %v2522, 16
    %v2951 = vshll.u32 %v2522, 16
    %v2953 = vrot.slane %v2951, 1
    %v2954 = vor.u32 %v2949, %v2953
    %v2956 = vshrl.u32 %v2526, 16
    %v2958 = vshll.u32 %v2526, 16
    %v2960 = vrot.slane %v2958, 1
    %v2961 = vor.u32 %v2956, %v2960
    %v2963 = vshrl.u32 %v2530, 16
    %v2965 = vshll.u32 %v2530, 16
    %v2967 = vrot.slane %v2965, 1
    %v2968 = vor.u32 %v2963, %v2967
    %v2970 = vshrl.u32 %v2534, 16
    %v2972 = vshll.u32 %v2534, 16
    %v2974 = vrot.slane %v2972, 1
    %v2975 = vor.u32 %v2970, %v2974
    %v2977 = vshrl.u32 %v2538, 16
    %v2979 = vshll.u32 %v2538, 16
    %v2981 = vrot.slane %v2979, 1
    %v2982 = vor.u32 %v2977, %v2981
    %v2983 = vrot.slane %v2510, 1
    %v2984 = vrot.slane %v2514, 1
    %v2985 = vrot.slane %v2518, 1
    %v2986 = vrot.slane %v2522, 1
    %v2987 = vrot.slane %v2526, 1
    %v2988 = vrot.slane %v2530, 1
    %v2989 = vrot.slane %v2534, 1
    %v2990 = vrot.slane %v2538, 1
    %2991 = vrot.lane.b32.xlu0 %v2781, 32
    %v2992 = vpop.permute.xlu0 %2991
    %2993 = vrot.lane.b32.xlu0 %v2782, 32
    %v2994 = vpop.permute.xlu0 %2993
    %2995 = vrot.lane.b32.xlu0 %v2783, 32
    %v2996 = vpop.permute.xlu0 %2995
    %2997 = vrot.lane.b32.xlu0 %v2983, 32
    %v2998 = vpop.permute.xlu0 %2997
    %2999 = vrot.lane.b32.xlu0 %v2784, 32
    %v3000 = vpop.permute.xlu0 %2999
    %3001 = vrot.lane.b32.xlu0 %v2785, 32
    %v3002 = vpop.permute.xlu0 %3001
    %3003 = vrot.lane.b32.xlu0 %v2786, 32
    %v3004 = vpop.permute.xlu0 %3003
    %3005 = vrot.lane.b32.xlu0 %v2984, 32
    %v3006 = vpop.permute.xlu0 %3005
    %3007 = vrot.lane.b32.xlu0 %v2787, 32
    %v3008 = vpop.permute.xlu0 %3007
    %3009 = vrot.lane.b32.xlu0 %v2788, 32
    %v3010 = vpop.permute.xlu0 %3009
    %3011 = vrot.lane.b32.xlu0 %v2789, 32
    %v3012 = vpop.permute.xlu0 %3011
    %3013 = vrot.lane.b32.xlu0 %v2985, 32
    %v3014 = vpop.permute.xlu0 %3013
    %3015 = vrot.lane.b32.xlu0 %v2790, 32
    %v3016 = vpop.permute.xlu0 %3015
    %3017 = vrot.lane.b32.xlu0 %v2791, 32
    %v3018 = vpop.permute.xlu0 %3017
    %3019 = vrot.lane.b32.xlu0 %v2792, 32
    %v3020 = vpop.permute.xlu0 %3019
    %3021 = vrot.lane.b32.xlu0 %v2986, 32
    %v3022 = vpop.permute.xlu0 %3021
    %3023 = vrot.lane.b32.xlu0 %v2793, 32
    %v3024 = vpop.permute.xlu0 %3023
    %3025 = vrot.lane.b32.xlu0 %v2794, 32
    %v3026 = vpop.permute.xlu0 %3025
    %3027 = vrot.lane.b32.xlu0 %v2795, 32
    %v3028 = vpop.permute.xlu0 %3027
    %3029 = vrot.lane.b32.xlu0 %v2987, 32
    %v3030 = vpop.permute.xlu0 %3029
    %3031 = vrot.lane.b32.xlu0 %v2796, 32
    %v3032 = vpop.permute.xlu0 %3031
    %3033 = vrot.lane.b32.xlu0 %v2797, 32
    %v3034 = vpop.permute.xlu0 %3033
    %3035 = vrot.lane.b32.xlu0 %v2798, 32
    %v3036 = vpop.permute.xlu0 %3035
    %3037 = vrot.lane.b32.xlu0 %v2988, 32
    %v3038 = vpop.permute.xlu0 %3037
    %3039 = vrot.lane.b32.xlu0 %v2799, 32
    %v3040 = vpop.permute.xlu0 %3039
    %3041 = vrot.lane.b32.xlu0 %v2800, 32
    %v3042 = vpop.permute.xlu0 %3041
    %3043 = vrot.lane.b32.xlu0 %v2801, 32
    %v3044 = vpop.permute.xlu0 %3043
    %3045 = vrot.lane.b32.xlu0 %v2989, 32
    %v3046 = vpop.permute.xlu0 %3045
    %3047 = vrot.lane.b32.xlu0 %v2802, 32
    %v3048 = vpop.permute.xlu0 %3047
    %3049 = vrot.lane.b32.xlu0 %v2803, 32
    %v3050 = vpop.permute.xlu0 %3049
    %3051 = vrot.lane.b32.xlu0 %v2804, 32
    %v3052 = vpop.permute.xlu0 %3051
    %3053 = vrot.lane.b32.xlu0 %v2990, 32
    %v3054 = vpop.permute.xlu0 %3053
    %3055 = vrot.lane.b32.xlu0 %v2508, 64
    %v3056 = vpop.permute.xlu0 %3055
    %3057 = vrot.lane.b32.xlu0 %v2509, 64
    %v3058 = vpop.permute.xlu0 %3057
    %3059 = vrot.lane.b32.xlu0 %v2510, 64
    %v3060 = vpop.permute.xlu0 %3059
    %3061 = vrot.lane.b32.xlu0 %v683, 64
    %v3062 = vpop.permute.xlu0 %3061
    %3063 = vrot.lane.b32.xlu0 %v2512, 64
    %v3064 = vpop.permute.xlu0 %3063
    %3065 = vrot.lane.b32.xlu0 %v2513, 64
    %v3066 = vpop.permute.xlu0 %3065
    %3067 = vrot.lane.b32.xlu0 %v2514, 64
    %v3068 = vpop.permute.xlu0 %3067
    %3069 = vrot.lane.b32.xlu0 %v2516, 64
    %v3070 = vpop.permute.xlu0 %3069
    %3071 = vrot.lane.b32.xlu0 %v2517, 64
    %v3072 = vpop.permute.xlu0 %3071
    %3073 = vrot.lane.b32.xlu0 %v2518, 64
    %v3074 = vpop.permute.xlu0 %3073
    %3075 = vrot.lane.b32.xlu0 %v2520, 64
    %v3076 = vpop.permute.xlu0 %3075
    %3077 = vrot.lane.b32.xlu0 %v2521, 64
    %v3078 = vpop.permute.xlu0 %3077
    %3079 = vrot.lane.b32.xlu0 %v2522, 64
    %v3080 = vpop.permute.xlu0 %3079
    %3081 = vrot.lane.b32.xlu0 %v2524, 64
    %v3082 = vpop.permute.xlu0 %3081
    %3083 = vrot.lane.b32.xlu0 %v2525, 64
    %v3084 = vpop.permute.xlu0 %3083
    %3085 = vrot.lane.b32.xlu0 %v2526, 64
    %v3086 = vpop.permute.xlu0 %3085
    %3087 = vrot.lane.b32.xlu0 %v2528, 64
    %v3088 = vpop.permute.xlu0 %3087
    %3089 = vrot.lane.b32.xlu0 %v2529, 64
    %v3090 = vpop.permute.xlu0 %3089
    %3091 = vrot.lane.b32.xlu0 %v2530, 64
    %v3092 = vpop.permute.xlu0 %3091
    %3093 = vrot.lane.b32.xlu0 %v2532, 64
    %v3094 = vpop.permute.xlu0 %3093
    %3095 = vrot.lane.b32.xlu0 %v2533, 64
    %v3096 = vpop.permute.xlu0 %3095
    %3097 = vrot.lane.b32.xlu0 %v2534, 64
    %v3098 = vpop.permute.xlu0 %3097
    %3099 = vrot.lane.b32.xlu0 %v2536, 64
    %v3100 = vpop.permute.xlu0 %3099
    %3101 = vrot.lane.b32.xlu0 %v2537, 64
    %v3102 = vpop.permute.xlu0 %3101
    %3103 = vrot.lane.b32.xlu0 %v2538, 64
    %v3104 = vpop.permute.xlu0 %3103
    %3105 = vrot.lane.b32.xlu0 %v2552, 96
    %v3106 = vpop.permute.xlu0 %3105
    %3107 = vrot.lane.b32.xlu0 %v2559, 96
    %v3108 = vpop.permute.xlu0 %3107
    %3109 = vrot.lane.b32.xlu0 %v2933, 96
    %v3110 = vpop.permute.xlu0 %3109
    %3111 = vrot.lane.b32.xlu0 %v722, 96
    %v3112 = vpop.permute.xlu0 %3111
    %3113 = vrot.lane.b32.xlu0 %v2573, 96
    %v3114 = vpop.permute.xlu0 %3113
    %3115 = vrot.lane.b32.xlu0 %v2580, 96
    %v3116 = vpop.permute.xlu0 %3115
    %3117 = vrot.lane.b32.xlu0 %v2940, 96
    %v3118 = vpop.permute.xlu0 %3117
    %3119 = vrot.lane.b32.xlu0 %v2594, 96
    %v3120 = vpop.permute.xlu0 %3119
    %3121 = vrot.lane.b32.xlu0 %v2601, 96
    %v3122 = vpop.permute.xlu0 %3121
    %3123 = vrot.lane.b32.xlu0 %v2947, 96
    %v3124 = vpop.permute.xlu0 %3123
    %3125 = vrot.lane.b32.xlu0 %v2615, 96
    %v3126 = vpop.permute.xlu0 %3125
    %3127 = vrot.lane.b32.xlu0 %v2622, 96
    %v3128 = vpop.permute.xlu0 %3127
    %3129 = vrot.lane.b32.xlu0 %v2954, 96
    %v3130 = vpop.permute.xlu0 %3129
    %3131 = vrot.lane.b32.xlu0 %v2636, 96
    %v3132 = vpop.permute.xlu0 %3131
    %3133 = vrot.lane.b32.xlu0 %v2643, 96
    %v3134 = vpop.permute.xlu0 %3133
    %3135 = vrot.lane.b32.xlu0 %v2961, 96
    %v3136 = vpop.permute.xlu0 %3135
    %3137 = vrot.lane.b32.xlu0 %v2657, 96
    %v3138 = vpop.permute.xlu0 %3137
    %3139 = vrot.lane.b32.xlu0 %v2664, 96
    %v3140 = vpop.permute.xlu0 %3139
    %3141 = vrot.lane.b32.xlu0 %v2968, 96
    %v3142 = vpop.permute.xlu0 %3141
    %3143 = vrot.lane.b32.xlu0 %v2678, 96
    %v3144 = vpop.permute.xlu0 %3143
    %3145 = vrot.lane.b32.xlu0 %v2685, 96
    %v3146 = vpop.permute.xlu0 %3145
    %3147 = vrot.lane.b32.xlu0 %v2975, 96
    %v3148 = vpop.permute.xlu0 %3147
    %3149 = vrot.lane.b32.xlu0 %v2699, 96
    %v3150 = vpop.permute.xlu0 %3149
    %3151 = vrot.lane.b32.xlu0 %v2706, 96
    %v3152 = vpop.permute.xlu0 %3151
    %3153 = vrot.lane.b32.xlu0 %v2982, 96
    %v3154 = vpop.permute.xlu0 %3153
    %vm3155 = vcmask 261120
    %v3157 = vsel %vm3155, %v683, %v2708
    %v3159 = vsel %vm3155, %v2507, %v2710
    %v3161 = vsel %vm3155, %v2508, %v2712
    %v3163 = vsel %vm3155, %v2509, %v2714
    %v3165 = vsel %vm3155, %v2511, %v2716
    %v3167 = vsel %vm3155, %v2512, %v2718
    %v3169 = vsel %vm3155, %v2513, %v2720
    %v3171 = vsel %vm3155, %v2515, %v2722
    %v3173 = vsel %vm3155, %v2516, %v2724
    %v3175 = vsel %vm3155, %v2517, %v2726
    %v3177 = vsel %vm3155, %v2519, %v2728
    %v3179 = vsel %vm3155, %v2520, %v2730
    %v3181 = vsel %vm3155, %v2521, %v2732
    %v3183 = vsel %vm3155, %v2523, %v2734
    %v3185 = vsel %vm3155, %v2524, %v2736
    %v3187 = vsel %vm3155, %v2525, %v2738
    %v3189 = vsel %vm3155, %v2527, %v2740
    %v3191 = vsel %vm3155, %v2528, %v2742
    %v3193 = vsel %vm3155, %v2529, %v2744
    %v3195 = vsel %vm3155, %v2531, %v2746
    %v3197 = vsel %vm3155, %v2532, %v2748
    %v3199 = vsel %vm3155, %v2533, %v2750
    %v3201 = vsel %vm3155, %v2535, %v2752
    %v3203 = vsel %vm3155, %v2536, %v2754
    %v3205 = vsel %vm3155, %v2537, %v2756
    %vm3206 = vcmask 523264
    %v3208 = vsel %vm3206, %v3157, %v2806
    %v3210 = vsel %vm3206, %v3159, %v2808
    %v3212 = vsel %vm3206, %v3161, %v2810
    %v3214 = vsel %vm3206, %v3163, %v2812
    %v3216 = vsel %vm3206, %v3165, %v2814
    %v3218 = vsel %vm3206, %v3167, %v2816
    %v3220 = vsel %vm3206, %v3169, %v2818
    %v3222 = vsel %vm3206, %v3171, %v2820
    %v3224 = vsel %vm3206, %v3173, %v2822
    %v3226 = vsel %vm3206, %v3175, %v2824
    %v3228 = vsel %vm3206, %v3177, %v2826
    %v3230 = vsel %vm3206, %v3179, %v2828
    %v3232 = vsel %vm3206, %v3181, %v2830
    %v3234 = vsel %vm3206, %v3183, %v2832
    %v3236 = vsel %vm3206, %v3185, %v2834
    %v3238 = vsel %vm3206, %v3187, %v2836
    %v3240 = vsel %vm3206, %v3189, %v2838
    %v3242 = vsel %vm3206, %v3191, %v2840
    %v3244 = vsel %vm3206, %v3193, %v2842
    %v3246 = vsel %vm3206, %v3195, %v2844
    %v3248 = vsel %vm3206, %v3197, %v2846
    %v3250 = vsel %vm3206, %v3199, %v2848
    %v3252 = vsel %vm3206, %v3201, %v2850
    %v3254 = vsel %vm3206, %v3203, %v2852
    %v3256 = vsel %vm3206, %v3205, %v2854
    %vm3257 = vcmask 785408
    %v3259 = vsel %vm3257, %v3208, %v2864
    %v3261 = vsel %vm3257, %v3210, %v2866
    %v3263 = vsel %vm3257, %v3212, %v2868
    %v3265 = vsel %vm3257, %v3214, %v2870
    %v3267 = vsel %vm3257, %v3208, %v2872
    %v3269 = vsel %vm3257, %v3216, %v2874
    %v3271 = vsel %vm3257, %v3218, %v2876
    %v3273 = vsel %vm3257, %v3220, %v2878
    %v3275 = vsel %vm3257, %v3208, %v2880
    %v3277 = vsel %vm3257, %v3222, %v2882
    %v3279 = vsel %vm3257, %v3224, %v2884
    %v3281 = vsel %vm3257, %v3226, %v2886
    %v3283 = vsel %vm3257, %v3208, %v2888
    %v3285 = vsel %vm3257, %v3228, %v2890
    %v3287 = vsel %vm3257, %v3230, %v2892
    %v3289 = vsel %vm3257, %v3232, %v2894
    %v3291 = vsel %vm3257, %v3208, %v2896
    %v3293 = vsel %vm3257, %v3234, %v2898
    %v3295 = vsel %vm3257, %v3236, %v2900
    %v3297 = vsel %vm3257, %v3238, %v2902
    %v3299 = vsel %vm3257, %v3208, %v2904
    %v3301 = vsel %vm3257, %v3240, %v2906
    %v3303 = vsel %vm3257, %v3242, %v2908
    %v3305 = vsel %vm3257, %v3244, %v2910
    %v3307 = vsel %vm3257, %v3208, %v2912
    %v3309 = vsel %vm3257, %v3246, %v2914
    %v3311 = vsel %vm3257, %v3248, %v2916
    %v3313 = vsel %vm3257, %v3250, %v2918
    %v3315 = vsel %vm3257, %v3208, %v2920
    %v3317 = vsel %vm3257, %v3252, %v2922
    %v3319 = vsel %vm3257, %v3254, %v2924
    %v3321 = vsel %vm3257, %v3256, %v2926
    %v3324 = vsel %vm3155, %v2545, %v2992
    %v3327 = vsel %vm3155, %v2552, %v2994
    %v3330 = vsel %vm3155, %v2559, %v2996
    %v3333 = vsel %vm3155, %v2933, %v2998
    %v3336 = vsel %vm3155, %v2566, %v3000
    %v3339 = vsel %vm3155, %v2573, %v3002
    %v3342 = vsel %vm3155, %v2580, %v3004
    %v3345 = vsel %vm3155, %v2940, %v3006
    %v3348 = vsel %vm3155, %v2587, %v3008
    %v3351 = vsel %vm3155, %v2594, %v3010
    %v3354 = vsel %vm3155, %v2601, %v3012
    %v3357 = vsel %vm3155, %v2947, %v3014
    %v3360 = vsel %vm3155, %v2608, %v3016
    %v3363 = vsel %vm3155, %v2615, %v3018
    %v3366 = vsel %vm3155, %v2622, %v3020
    %v3369 = vsel %vm3155, %v2954, %v3022
    %v3372 = vsel %vm3155, %v2629, %v3024
    %v3375 = vsel %vm3155, %v2636, %v3026
    %v3378 = vsel %vm3155, %v2643, %v3028
    %v3381 = vsel %vm3155, %v2961, %v3030
    %v3384 = vsel %vm3155, %v2650, %v3032
    %v3387 = vsel %vm3155, %v2657, %v3034
    %v3390 = vsel %vm3155, %v2664, %v3036
    %v3393 = vsel %vm3155, %v2968, %v3038
    %v3396 = vsel %vm3155, %v2671, %v3040
    %v3399 = vsel %vm3155, %v2678, %v3042
    %v3402 = vsel %vm3155, %v2685, %v3044
    %v3405 = vsel %vm3155, %v2975, %v3046
    %v3408 = vsel %vm3155, %v2692, %v3048
    %v3411 = vsel %vm3155, %v2699, %v3050
    %v3414 = vsel %vm3155, %v2706, %v3052
    %v3417 = vsel %vm3155, %v2982, %v3054
    %v3419 = vsel %vm3206, %v3324, %v3056
    %v3421 = vsel %vm3206, %v3327, %v3058
    %v3423 = vsel %vm3206, %v3330, %v3060
    %v3425 = vsel %vm3206, %v3333, %v3062
    %v3427 = vsel %vm3206, %v3336, %v3064
    %v3429 = vsel %vm3206, %v3339, %v3066
    %v3431 = vsel %vm3206, %v3342, %v3068
    %v3432 = vsel %vm3206, %v3345, %v3062
    %v3434 = vsel %vm3206, %v3348, %v3070
    %v3436 = vsel %vm3206, %v3351, %v3072
    %v3438 = vsel %vm3206, %v3354, %v3074
    %v3439 = vsel %vm3206, %v3357, %v3062
    %v3441 = vsel %vm3206, %v3360, %v3076
    %v3443 = vsel %vm3206, %v3363, %v3078
    %v3445 = vsel %vm3206, %v3366, %v3080
    %v3446 = vsel %vm3206, %v3369, %v3062
    %v3448 = vsel %vm3206, %v3372, %v3082
    %v3450 = vsel %vm3206, %v3375, %v3084
    %v3452 = vsel %vm3206, %v3378, %v3086
    %v3453 = vsel %vm3206, %v3381, %v3062
    %v3455 = vsel %vm3206, %v3384, %v3088
    %v3457 = vsel %vm3206, %v3387, %v3090
    %v3459 = vsel %vm3206, %v3390, %v3092
    %v3460 = vsel %vm3206, %v3393, %v3062
    %v3462 = vsel %vm3206, %v3396, %v3094
    %v3464 = vsel %vm3206, %v3399, %v3096
    %v3466 = vsel %vm3206, %v3402, %v3098
    %v3467 = vsel %vm3206, %v3405, %v3062
    %v3469 = vsel %vm3206, %v3408, %v3100
    %v3471 = vsel %vm3206, %v3411, %v3102
    %v3473 = vsel %vm3206, %v3414, %v3104
    %v3474 = vsel %vm3206, %v3417, %v3062
    %v3476 = vsel %vm3257, %v3419, %v3106
    %v3478 = vsel %vm3257, %v3421, %v3108
    %v3480 = vsel %vm3257, %v3423, %v3110
    %v3482 = vsel %vm3257, %v3425, %v3112
    %v3484 = vsel %vm3257, %v3427, %v3114
    %v3486 = vsel %vm3257, %v3429, %v3116
    %v3488 = vsel %vm3257, %v3431, %v3118
    %v3489 = vsel %vm3257, %v3432, %v3112
    %v3491 = vsel %vm3257, %v3434, %v3120
    %v3493 = vsel %vm3257, %v3436, %v3122
    %v3495 = vsel %vm3257, %v3438, %v3124
    %v3496 = vsel %vm3257, %v3439, %v3112
    %v3498 = vsel %vm3257, %v3441, %v3126
    %v3500 = vsel %vm3257, %v3443, %v3128
    %v3502 = vsel %vm3257, %v3445, %v3130
    %v3503 = vsel %vm3257, %v3446, %v3112
    %v3505 = vsel %vm3257, %v3448, %v3132
    %v3507 = vsel %vm3257, %v3450, %v3134
    %v3509 = vsel %vm3257, %v3452, %v3136
    %v3510 = vsel %vm3257, %v3453, %v3112
    %v3512 = vsel %vm3257, %v3455, %v3138
    %v3514 = vsel %vm3257, %v3457, %v3140
    %v3516 = vsel %vm3257, %v3459, %v3142
    %v3517 = vsel %vm3257, %v3460, %v3112
    %v3519 = vsel %vm3257, %v3462, %v3144
    %v3521 = vsel %vm3257, %v3464, %v3146
    %v3523 = vsel %vm3257, %v3466, %v3148
    %v3524 = vsel %vm3257, %v3467, %v3112
    %v3526 = vsel %vm3257, %v3469, %v3150
    %v3528 = vsel %vm3257, %v3471, %v3152
    %v3530 = vsel %vm3257, %v3473, %v3154
    %v3531 = vsel %vm3257, %v3474, %v3112
    %v3564 = vrot.slane %v3476, 6
    %v3565 = vrot.slane %v2782, 4
    %v3566 = vrot.slane %v3478, 6
    %v3567 = vrot.slane %v2783, 4
    %v3568 = vrot.slane %v3480, 6
    %v3569 = vrot.slane %v2983, 4
    %v3570 = vrot.slane %v3482, 6
    %v3571 = vrot.slane %v966, 4
    %v3572 = vrot.slane %v3484, 6
    %v3573 = vrot.slane %v2785, 4
    %v3574 = vrot.slane %v3486, 6
    %v3575 = vrot.slane %v2786, 4
    %v3576 = vrot.slane %v3488, 6
    %v3577 = vrot.slane %v2984, 4
    %v3578 = vrot.slane %v3489, 6
    %v3579 = vrot.slane %v3491, 6
    %v3580 = vrot.slane %v2788, 4
    %v3581 = vrot.slane %v3493, 6
    %v3582 = vrot.slane %v2789, 4
    %v3583 = vrot.slane %v3495, 6
    %v3584 = vrot.slane %v2985, 4
    %v3585 = vrot.slane %v3496, 6
    %v3586 = vrot.slane %v3498, 6
    %v3587 = vrot.slane %v2791, 4
    %v3588 = vrot.slane %v3500, 6
    %v3589 = vrot.slane %v2792, 4
    %v3590 = vrot.slane %v3502, 6
    %v3591 = vrot.slane %v2986, 4
    %v3592 = vrot.slane %v3503, 6
    %v3593 = vrot.slane %v3505, 6
    %v3594 = vrot.slane %v2794, 4
    %v3595 = vrot.slane %v3507, 6
    %v3596 = vrot.slane %v2795, 4
    %v3597 = vrot.slane %v3509, 6
    %v3598 = vrot.slane %v2987, 4
    %v3599 = vrot.slane %v3510, 6
    %v3600 = vrot.slane %v3512, 6
    %v3601 = vrot.slane %v2797, 4
    %v3602 = vrot.slane %v3514, 6
    %v3603 = vrot.slane %v2798, 4
    %v3604 = vrot.slane %v3516, 6
    %v3605 = vrot.slane %v2988, 4
    %v3606 = vrot.slane %v3517, 6
    %v3607 = vrot.slane %v3519, 6
    %v3608 = vrot.slane %v2800, 4
    %v3609 = vrot.slane %v3521, 6
    %v3610 = vrot.slane %v2801, 4
    %v3611 = vrot.slane %v3523, 6
    %v3612 = vrot.slane %v2989, 4
    %v3613 = vrot.slane %v3524, 6
    %v3614 = vrot.slane %v3526, 6
    %v3615 = vrot.slane %v2803, 4
    %v3616 = vrot.slane %v3528, 6
    %v3617 = vrot.slane %v2804, 4
    %v3618 = vrot.slane %v3530, 6
    %v3619 = vrot.slane %v2990, 4
    %v3620 = vrot.slane %v3531, 6
    %v3622 = vsel %vm2137, %v3259, %v3564
    %vm3623 = vcmask 1043456
    %v3625 = vsel %vm3623, %v3622, %v3565
    %v3627 = vsel %vm2137, %v3261, %v3566
    %v3629 = vsel %vm3623, %v3627, %v3567
    %v3631 = vsel %vm2137, %v3263, %v3568
    %v3633 = vsel %vm3623, %v3631, %v3569
    %v3635 = vsel %vm2137, %v3265, %v3570
    %v3637 = vsel %vm3623, %v3635, %v3571
    %v3639 = vsel %vm2137, %v3267, %v3572
    %v3641 = vsel %vm3623, %v3639, %v3573
    %v3643 = vsel %vm2137, %v3269, %v3574
    %v3645 = vsel %vm3623, %v3643, %v3575
    %v3647 = vsel %vm2137, %v3271, %v3576
    %v3649 = vsel %vm3623, %v3647, %v3577
    %v3651 = vsel %vm2137, %v3273, %v3578
    %v3652 = vsel %vm3623, %v3651, %v3571
    %v3654 = vsel %vm2137, %v3275, %v3579
    %v3656 = vsel %vm3623, %v3654, %v3580
    %v3658 = vsel %vm2137, %v3277, %v3581
    %v3660 = vsel %vm3623, %v3658, %v3582
    %v3662 = vsel %vm2137, %v3279, %v3583
    %v3664 = vsel %vm3623, %v3662, %v3584
    %v3666 = vsel %vm2137, %v3281, %v3585
    %v3667 = vsel %vm3623, %v3666, %v3571
    %v3669 = vsel %vm2137, %v3283, %v3586
    %v3671 = vsel %vm3623, %v3669, %v3587
    %v3673 = vsel %vm2137, %v3285, %v3588
    %v3675 = vsel %vm3623, %v3673, %v3589
    %v3677 = vsel %vm2137, %v3287, %v3590
    %v3679 = vsel %vm3623, %v3677, %v3591
    %v3681 = vsel %vm2137, %v3289, %v3592
    %v3682 = vsel %vm3623, %v3681, %v3571
    %v3684 = vsel %vm2137, %v3291, %v3593
    %v3686 = vsel %vm3623, %v3684, %v3594
    %v3688 = vsel %vm2137, %v3293, %v3595
    %v3690 = vsel %vm3623, %v3688, %v3596
    %v3692 = vsel %vm2137, %v3295, %v3597
    %v3694 = vsel %vm3623, %v3692, %v3598
    %v3696 = vsel %vm2137, %v3297, %v3599
    %v3697 = vsel %vm3623, %v3696, %v3571
    %v3699 = vsel %vm2137, %v3299, %v3600
    %v3701 = vsel %vm3623, %v3699, %v3601
    %v3703 = vsel %vm2137, %v3301, %v3602
    %v3705 = vsel %vm3623, %v3703, %v3603
    %v3707 = vsel %vm2137, %v3303, %v3604
    %v3709 = vsel %vm3623, %v3707, %v3605
    %v3711 = vsel %vm2137, %v3305, %v3606
    %v3712 = vsel %vm3623, %v3711, %v3571
    %v3714 = vsel %vm2137, %v3307, %v3607
    %v3716 = vsel %vm3623, %v3714, %v3608
    %v3718 = vsel %vm2137, %v3309, %v3609
    %v3720 = vsel %vm3623, %v3718, %v3610
    %v3722 = vsel %vm2137, %v3311, %v3611
    %v3724 = vsel %vm3623, %v3722, %v3612
    %v3726 = vsel %vm2137, %v3313, %v3613
    %v3727 = vsel %vm3623, %v3726, %v3571
    %v3729 = vsel %vm2137, %v3315, %v3614
    %v3731 = vsel %vm3623, %v3729, %v3615
    %v3733 = vsel %vm2137, %v3317, %v3616
    %v3735 = vsel %vm3623, %v3733, %v3617
    %v3737 = vsel %vm2137, %v3319, %v3618
    %v3739 = vsel %vm3623, %v3737, %v3619
    %v3741 = vsel %vm2137, %v3321, %v3620
    %v3742 = vsel %vm3623, %v3741, %v3571
    %v3743 = vld [vmem:[%s3] sm:$0xf]
    %v3744 = vld [vmem:[%s3 + $0x4] sm:$0xf]
    %v3745 = vld [vmem:[%s3 + $0x8] sm:$0xf]
    %v3746 = vld [vmem:[%s3 + $0xc] sm:$0xf]
    %v3747 = vld [vmem:[%s3 + $0x10] sm:$0xf]
    %v3748 = vld [vmem:[%s3 + $0x14] sm:$0xf]
    %v3749 = vld [vmem:[%s3 + $0x18] sm:$0xf]
    %v3750 = vld [vmem:[%s3 + $0x1c] sm:$0xf]
    %v3751 = vld [vmem:[%s3 + $0x20] sm:$0xf]
    %v3752 = vld [vmem:[%s3 + $0x24] sm:$0xf]
    %v3753 = vld [vmem:[%s3 + $0x28] sm:$0xf]
    %v3754 = vld [vmem:[%s3 + $0x2c] sm:$0xf]
    %v3755 = vld [vmem:[%s3 + $0x30] sm:$0xf]
    %v3756 = vld [vmem:[%s3 + $0x34] sm:$0xf]
    %v3757 = vld [vmem:[%s3 + $0x38] sm:$0xf]
    %v3758 = vld [vmem:[%s3 + $0x3c] sm:$0xf]
    %v3759 = vld [vmem:[%s3 + $0x40] sm:$0xf]
    %v3760 = vld [vmem:[%s3 + $0x44] sm:$0xf]
    %v3761 = vld [vmem:[%s3 + $0x48] sm:$0xf]
    %v3762 = vld [vmem:[%s3 + $0x4c] sm:$0xf]
    %v3763 = vld [vmem:[%s3 + $0x50] sm:$0xf]
    %v3764 = vld [vmem:[%s3 + $0x54] sm:$0xf]
    %v3765 = vld [vmem:[%s3 + $0x58] sm:$0xf]
    %v3766 = vld [vmem:[%s3 + $0x5c] sm:$0xf]
    %v3767 = vld [vmem:[%s3 + $0x60] sm:$0xf]
    %v3768 = vld [vmem:[%s3 + $0x64] sm:$0xf]
    %v3769 = vld [vmem:[%s3 + $0x68] sm:$0xf]
    %v3770 = vld [vmem:[%s3 + $0x6c] sm:$0xf]
    %v3771 = vld [vmem:[%s3 + $0x70] sm:$0xf]
    %v3772 = vld [vmem:[%s3 + $0x74] sm:$0xf]
    %v3773 = vld [vmem:[%s3 + $0x78] sm:$0xf]
    %v3774 = vld [vmem:[%s3 + $0x7c] sm:$0xf]
    %v3775 = vld [vmem:[%s3 + $0x80] sm:$0xf]
    %v3776 = vld [vmem:[%s3 + $0x84] sm:$0xf]
    %v3777 = vld [vmem:[%s3 + $0x88] sm:$0xf]
    %v3778 = vld [vmem:[%s3 + $0x8c] sm:$0xf]
    %v3779 = vld [vmem:[%s4] sm:$0x1]
    %v3781 = vperm.slane %v3779, 0
    %3783 = vst [vmem:[#allocation1] ss:$4 sm:$0xff] %v3625
    %s3784 = scalar_lea.vmem [#allocation1], 1
    %3785 = vst [vmem:[%s3784] ss:$4 sm:$0xff] %v3629
    %s3786 = scalar_lea.vmem [#allocation1], 2
    %3787 = vst [vmem:[%s3786] ss:$4 sm:$0xff] %v3633
    %s3788 = scalar_lea.vmem [#allocation1], 3
    %3789 = vst [vmem:[%s3788] ss:$4 sm:$0xff] %v3637
    %s3790 = scalar_lea.vmem [#allocation1], 32
    %3791 = vst [vmem:[%s3790] ss:$4 sm:$0xff] %v3641
    %s3792 = scalar_lea.vmem [#allocation1], 33
    %3793 = vst [vmem:[%s3792] ss:$4 sm:$0xff] %v3645
    %s3794 = scalar_lea.vmem [#allocation1], 34
    %3795 = vst [vmem:[%s3794] ss:$4 sm:$0xff] %v3649
    %s3796 = scalar_lea.vmem [#allocation1], 35
    %3797 = vst [vmem:[%s3796] ss:$4 sm:$0xff] %v3652
    %v3798 = vld.sshfl [vmem:[#allocation1] sm:$0xff pattern:$0x73625140]
    %v3799 = vld.sshfl [vmem:[#allocation1 + $0x8] sm:$0xff pattern:$0x73625140]
    %v3800 = vld.sshfl [vmem:[#allocation1 + $0x10] sm:$0xff pattern:$0x73625140]
    %v3801 = vld.sshfl [vmem:[#allocation1 + $0x20] sm:$0xff pattern:$0x73625140]
    %v3802 = vld.sshfl [vmem:[#allocation1 + $0x28] sm:$0xff pattern:$0x73625140]
    %v3803 = vld.sshfl [vmem:[#allocation1 + $0x30] sm:$0xff pattern:$0x73625140]
    %3804 = vst [vmem:[#allocation1] ss:$4 sm:$0xff] %v3656
    %3805 = vst [vmem:[%s3784] ss:$4 sm:$0xff] %v3660
    %3806 = vst [vmem:[%s3786] ss:$4 sm:$0xff] %v3664
    %3807 = vst [vmem:[%s3788] ss:$4 sm:$0xff] %v3667
    %3808 = vst [vmem:[%s3790] ss:$4 sm:$0xff] %v3671
    %3809 = vst [vmem:[%s3792] ss:$4 sm:$0xff] %v3675
    %3810 = vst [vmem:[%s3794] ss:$4 sm:$0xff] %v3679
    %3811 = vst [vmem:[%s3796] ss:$4 sm:$0xff] %v3682
    %v3812 = vld.sshfl [vmem:[#allocation1] sm:$0xff pattern:$0x73625140]
    %v3813 = vld.sshfl [vmem:[#allocation1 + $0x8] sm:$0xff pattern:$0x73625140]
    %v3814 = vld.sshfl [vmem:[#allocation1 + $0x10] sm:$0xff pattern:$0x73625140]
    %v3815 = vld.sshfl [vmem:[#allocation1 + $0x20] sm:$0xff pattern:$0x73625140]
    %v3816 = vld.sshfl [vmem:[#allocation1 + $0x28] sm:$0xff pattern:$0x73625140]
    %v3817 = vld.sshfl [vmem:[#allocation1 + $0x30] sm:$0xff pattern:$0x73625140]
    %3818 = vst [vmem:[#allocation1] ss:$4 sm:$0xff] %v3686
    %3819 = vst [vmem:[%s3784] ss:$4 sm:$0xff] %v3690
    %3820 = vst [vmem:[%s3786] ss:$4 sm:$0xff] %v3694
    %3821 = vst [vmem:[%s3788] ss:$4 sm:$0xff] %v3697
    %3822 = vst [vmem:[%s3790] ss:$4 sm:$0xff] %v3701
    %3823 = vst [vmem:[%s3792] ss:$4 sm:$0xff] %v3705
    %3824 = vst [vmem:[%s3794] ss:$4 sm:$0xff] %v3709
    %3825 = vst [vmem:[%s3796] ss:$4 sm:$0xff] %v3712
    %v3826 = vld.sshfl [vmem:[#allocation1] sm:$0xff pattern:$0x73625140]
    %v3827 = vld.sshfl [vmem:[#allocation1 + $0x8] sm:$0xff pattern:$0x73625140]
    %v3828 = vld.sshfl [vmem:[#allocation1 + $0x10] sm:$0xff pattern:$0x73625140]
    %v3829 = vld.sshfl [vmem:[#allocation1 + $0x20] sm:$0xff pattern:$0x73625140]
    %v3830 = vld.sshfl [vmem:[#allocation1 + $0x28] sm:$0xff pattern:$0x73625140]
    %v3831 = vld.sshfl [vmem:[#allocation1 + $0x30] sm:$0xff pattern:$0x73625140]
    %3832 = vst [vmem:[#allocation1] ss:$4 sm:$0xff] %v3716
    %3833 = vst [vmem:[%s3784] ss:$4 sm:$0xff] %v3720
    %3834 = vst [vmem:[%s3786] ss:$4 sm:$0xff] %v3724
    %3835 = vst [vmem:[%s3788] ss:$4 sm:$0xff] %v3727
    %3836 = vst [vmem:[%s3790] ss:$4 sm:$0xff] %v3731
    %3837 = vst [vmem:[%s3792] ss:$4 sm:$0xff] %v3735
    %3838 = vst [vmem:[%s3794] ss:$4 sm:$0xff] %v3739
    %3839 = vst [vmem:[%s3796] ss:$4 sm:$0xff] %v3742
    %v3840 = vld.sshfl [vmem:[#allocation1] sm:$0xff pattern:$0x73625140]
    %v3841 = vld.sshfl [vmem:[#allocation1 + $0x8] sm:$0xff pattern:$0x73625140]
    %v3842 = vld.sshfl [vmem:[#allocation1 + $0x10] sm:$0xff pattern:$0x73625140]
    %v3843 = vld.sshfl [vmem:[#allocation1 + $0x20] sm:$0xff pattern:$0x73625140]
    %v3844 = vld.sshfl [vmem:[#allocation1 + $0x28] sm:$0xff pattern:$0x73625140]
    %v3845 = vld.sshfl [vmem:[#allocation1 + $0x30] sm:$0xff pattern:$0x73625140]
    %v3898 = vunpack.c.l.b16 %v3743
    %v3899 = vunpack.c.l.b16 %v3744
    %v3900 = vunpack.c.l.b16 %v3745
    %v3901 = vunpack.c.l.b16 %v3746
    %v3902 = vunpack.c.l.b16 %v3747
    %v3903 = vunpack.c.l.b16 %v3748
    %v3904 = vunpack.c.l.b16 %v3749
    %v3905 = vunpack.c.l.b16 %v3750
    %v3906 = vunpack.c.l.b16 %v3751
    %v3907 = vunpack.c.l.b16 %v3752
    %v3908 = vunpack.c.l.b16 %v3753
    %v3909 = vunpack.c.l.b16 %v3754
    %v3910 = vunpack.c.l.b16 %v3755
    %v3911 = vunpack.c.l.b16 %v3756
    %v3912 = vunpack.c.l.b16 %v3757
    %v3913 = vunpack.c.l.b16 %v3758
    %v3914 = vunpack.c.l.b16 %v3759
    %v3915 = vunpack.c.l.b16 %v3760
    %v3916 = vunpack.c.l.b16 %v3761
    %v3917 = vunpack.c.l.b16 %v3762
    %v3918 = vunpack.c.l.b16 %v3763
    %v3919 = vunpack.c.l.b16 %v3764
    %v3920 = vunpack.c.l.b16 %v3765
    %v3921 = vunpack.c.l.b16 %v3766
    %v3922 = vunpack.c.l.b16 %v3767
    %v3923 = vunpack.c.l.b16 %v3768
    %v3924 = vunpack.c.l.b16 %v3769
    %v3925 = vunpack.c.l.b16 %v3770
    %v3926 = vunpack.c.l.b16 %v3771
    %v3927 = vunpack.c.l.b16 %v3772
    %v3928 = vunpack.c.l.b16 %v3773
    %v3929 = vunpack.c.l.b16 %v3774
    %v3930 = vunpack.c.l.b16 %v3775
    %v3931 = vunpack.c.l.b16 %v3776
    %v3932 = vunpack.c.l.b16 %v3777
    %v3933 = vunpack.c.l.b16 %v3778
    %v3934 = vpack.c.b16 %v3899, %v3898
    %v3935 = vpack.c.b16 %v3901, %v3900
    %v3936 = vpack.c.b16 %v3903, %v3902
    %v3937 = vpack.c.b16 %v3905, %v3904
    %v3938 = vpack.c.b16 %v3907, %v3906
    %v3939 = vpack.c.b16 %v3909, %v3908
    %v3940 = vpack.c.b16 %v3911, %v3910
    %v3941 = vpack.c.b16 %v3913, %v3912
    %v3942 = vpack.c.b16 %v3915, %v3914
    %v3943 = vpack.c.b16 %v3917, %v3916
    %v3944 = vpack.c.b16 %v3919, %v3918
    %v3945 = vpack.c.b16 %v3921, %v3920
    %v3946 = vpack.c.b16 %v3923, %v3922
    %v3947 = vpack.c.b16 %v3925, %v3924
    %v3948 = vpack.c.b16 %v3927, %v3926
    %v3949 = vpack.c.b16 %v3929, %v3928
    %v3950 = vpack.c.b16 %v3931, %v3930
    %v3951 = vpack.c.b16 %v3933, %v3932
    %v3970 = vsel %vm3155, %v3800, 0
    %v3972 = vsel %vm3155, %v3803, 0
    %v3974 = vsel %vm3155, %v3814, 0
    %v3976 = vsel %vm3155, %v3817, 0
    %v3978 = vsel %vm3155, %v3828, 0
    %v3980 = vsel %vm3155, %v3831, 0
    %v3982 = vsel %vm3155, %v3842, 0
    %v3984 = vsel %vm3155, %v3845, 0
    %3986 = vmatpush.bf16.msra.mxu0 %v3941
    %3987 = vmatpush.bf16.msra.mxu0 %v3940
    %3988 = vmatpush.bf16.msra.mxu0 %v3939
    %3989 = vmatpush.bf16.msra.mxu0 %v3938
    %3990 = vmatpush.bf16.msra.mxu0 %v3937
    %3991 = vmatpush.bf16.msra.mxu0 %v3936
    %3992 = vmatpush.bf16.msra.mxu0 %v3935
    %3993 = vmatpush.bf16.msra.mxu0 %v3934
    %3994 = vmatmul.bf16.gmra.mxu0 %v3798
    %v3995 = vpop.f32.mrf.mxu0
    %v3996 = vadd.f32 %v3781, %v3995
    %v3997 = vpop.f32.mrf.mxu0
    %v3998 = vadd.f32 %v3781, %v3997
    %3999 = vmatmul.bf16.gmra.mxu0 %v3801
    %v4000 = vpop.f32.mrf.mxu0
    %v4001 = vadd.f32 %v3781, %v4000
    %v4002 = vpop.f32.mrf.mxu0
    %v4003 = vadd.f32 %v3781, %v4002
    %4004 = vmatmul.bf16.gmra.mxu0 %v3812
    %v4005 = vpop.f32.mrf.mxu0
    %v4006 = vadd.f32 %v3781, %v4005
    %v4007 = vpop.f32.mrf.mxu0
    %v4008 = vadd.f32 %v3781, %v4007
    %4009 = vmatmul.bf16.gmra.mxu0 %v3815
    %v4010 = vpop.f32.mrf.mxu0
    %v4011 = vadd.f32 %v3781, %v4010
    %v4012 = vpop.f32.mrf.mxu0
    %v4013 = vadd.f32 %v3781, %v4012
    %4014 = vmatmul.bf16.gmra.mxu0 %v3826
    %v4015 = vpop.f32.mrf.mxu0
    %v4016 = vadd.f32 %v3781, %v4015
    %v4017 = vpop.f32.mrf.mxu0
    %v4018 = vadd.f32 %v3781, %v4017
    %4019 = vmatmul.bf16.gmra.mxu0 %v3829
    %v4020 = vpop.f32.mrf.mxu0
    %v4021 = vadd.f32 %v3781, %v4020
    %v4022 = vpop.f32.mrf.mxu0
    %v4023 = vadd.f32 %v3781, %v4022
    %4024 = vmatmul.bf16.gmra.mxu0 %v3840
    %v4025 = vpop.f32.mrf.mxu0
    %v4026 = vadd.f32 %v3781, %v4025
    %v4027 = vpop.f32.mrf.mxu0
    %v4028 = vadd.f32 %v3781, %v4027
    %4029 = vmatmul.bf16.gmra.mxu0 %v3843
    %v4030 = vpop.f32.mrf.mxu0
    %v4031 = vadd.f32 %v3781, %v4030
    %v4032 = vpop.f32.mrf.mxu0
    %v4033 = vadd.f32 %v3781, %v4032
    %4034 = vdwg.mxu0
    %4035 = vmatpush.bf16.msra.mxu0 %v3949
    %4036 = vmatpush.bf16.msra.mxu0 %v3948
    %4037 = vmatpush.bf16.msra.mxu0 %v3947
    %4038 = vmatpush.bf16.msra.mxu0 %v3946
    %4039 = vmatpush.bf16.msra.mxu0 %v3945
    %4040 = vmatpush.bf16.msra.mxu0 %v3944
    %4041 = vmatpush.bf16.msra.mxu0 %v3943
    %4042 = vmatpush.bf16.msra.mxu0 %v3942
    %4043 = vmatmul.bf16.gmra.mxu0 %v3799
    %v4044 = vpop.f32.mrf.mxu0
    %v4045 = vadd.f32 %v3996, %v4044
    %v4046 = vpop.f32.mrf.mxu0
    %v4047 = vadd.f32 %v3998, %v4046
    %4048 = vmatmul.bf16.gmra.mxu0 %v3802
    %v4049 = vpop.f32.mrf.mxu0
    %v4050 = vadd.f32 %v4001, %v4049
    %v4051 = vpop.f32.mrf.mxu0
    %v4052 = vadd.f32 %v4003, %v4051
    %4053 = vmatmul.bf16.gmra.mxu0 %v3813
    %v4054 = vpop.f32.mrf.mxu0
    %v4055 = vadd.f32 %v4006, %v4054
    %v4056 = vpop.f32.mrf.mxu0
    %v4057 = vadd.f32 %v4008, %v4056
    %4058 = vmatmul.bf16.gmra.mxu0 %v3816
    %v4059 = vpop.f32.mrf.mxu0
    %v4060 = vadd.f32 %v4011, %v4059
    %v4061 = vpop.f32.mrf.mxu0
    %v4062 = vadd.f32 %v4013, %v4061
    %4063 = vmatmul.bf16.gmra.mxu0 %v3827
    %v4064 = vpop.f32.mrf.mxu0
    %v4065 = vadd.f32 %v4016, %v4064
    %v4066 = vpop.f32.mrf.mxu0
    %v4067 = vadd.f32 %v4018, %v4066
    %4068 = vmatmul.bf16.gmra.mxu0 %v3830
    %v4069 = vpop.f32.mrf.mxu0
    %v4070 = vadd.f32 %v4021, %v4069
    %v4071 = vpop.f32.mrf.mxu0
    %v4072 = vadd.f32 %v4023, %v4071
    %4073 = vmatmul.bf16.gmra.mxu0 %v3841
    %v4074 = vpop.f32.mrf.mxu0
    %v4075 = vadd.f32 %v4026, %v4074
    %v4076 = vpop.f32.mrf.mxu0
    %v4077 = vadd.f32 %v4028, %v4076
    %4078 = vmatmul.bf16.gmra.mxu0 %v3844
    %v4079 = vpop.f32.mrf.mxu0
    %v4080 = vadd.f32 %v4031, %v4079
    %v4081 = vpop.f32.mrf.mxu0
    %v4082 = vadd.f32 %v4033, %v4081
    %4083 = vdwg.mxu0
    %4084 = vmatpush.bf16.msra.mxu0 0
    %4085 = vmatpush.bf16.msra.mxu0 0
    %4086 = vmatpush.bf16.msra.mxu0 0
    %4087 = vmatpush.bf16.msra.mxu0 0
    %4088 = vmatpush.bf16.msra.mxu0 0
    %4089 = vmatpush.bf16.msra.mxu0 0
    %4090 = vmatpush.bf16.msra.mxu0 %v3951
    %4091 = vmatpush.bf16.msra.mxu0 %v3950
    %4092 = vmatmul.bf16.gmra.mxu0 %v3970
    %v4093 = vpop.f32.mrf.mxu0
    %v4094 = vadd.f32 %v4045, %v4093
    %v4095 = vpop.f32.mrf.mxu0
    %v4096 = vadd.f32 %v4047, %v4095
    %4097 = vmatmul.bf16.gmra.mxu0 %v3972
    %v4098 = vpop.f32.mrf.mxu0
    %v4099 = vadd.f32 %v4050, %v4098
    %v4100 = vpop.f32.mrf.mxu0
    %v4101 = vadd.f32 %v4052, %v4100
    %4102 = vmatmul.bf16.gmra.mxu0 %v3974
    %v4103 = vpop.f32.mrf.mxu0
    %v4104 = vadd.f32 %v4055, %v4103
    %v4105 = vpop.f32.mrf.mxu0
    %v4106 = vadd.f32 %v4057, %v4105
    %4107 = vmatmul.bf16.gmra.mxu0 %v3976
    %v4108 = vpop.f32.mrf.mxu0
    %v4109 = vadd.f32 %v4060, %v4108
    %v4110 = vpop.f32.mrf.mxu0
    %v4111 = vadd.f32 %v4062, %v4110
    %4112 = vmatmul.bf16.gmra.mxu0 %v3978
    %v4113 = vpop.f32.mrf.mxu0
    %v4114 = vadd.f32 %v4065, %v4113
    %v4115 = vpop.f32.mrf.mxu0
    %v4116 = vadd.f32 %v4067, %v4115
    %4117 = vmatmul.bf16.gmra.mxu0 %v3980
    %v4118 = vpop.f32.mrf.mxu0
    %v4119 = vadd.f32 %v4070, %v4118
    %v4120 = vpop.f32.mrf.mxu0
    %v4121 = vadd.f32 %v4072, %v4120
    %4122 = vmatmul.bf16.gmra.mxu0 %v3982
    %v4123 = vpop.f32.mrf.mxu0
    %v4124 = vadd.f32 %v4075, %v4123
    %v4125 = vpop.f32.mrf.mxu0
    %v4126 = vadd.f32 %v4077, %v4125
    %4127 = vmatmul.bf16.gmra.mxu0 %v3984
    %v4128 = vpop.f32.mrf.mxu0
    %v4129 = vadd.f32 %v4080, %v4128
    %v4130 = vpop.f32.mrf.mxu0
    %v4131 = vadd.f32 %v4082, %v4130
    %4132 = vdwg.mxu0
    %v4133 = vmax.f32 %v4094, 0.0
    %v4134 = vmax.f32 %v4096, 0.0
    %v4135 = vmax.f32 %v4099, 0.0
    %v4136 = vmax.f32 %v4101, 0.0
    %v4137 = vmax.f32 %v4104, 0.0
    %v4138 = vmax.f32 %v4106, 0.0
    %v4139 = vmax.f32 %v4109, 0.0
    %v4140 = vmax.f32 %v4111, 0.0
    %v4141 = vmax.f32 %v4114, 0.0
    %v4142 = vmax.f32 %v4116, 0.0
    %v4143 = vmax.f32 %v4119, 0.0
    %v4144 = vmax.f32 %v4121, 0.0
    %v4145 = vmax.f32 %v4124, 0.0
    %v4146 = vmax.f32 %v4126, 0.0
    %v4147 = vmax.f32 %v4129, 0.0
    %v4148 = vmax.f32 %v4131, 0.0
    %v4149 = vpack.c.bf16 %v4133, %v4133
    %v4150 = vpack.c.bf16 %v4134, %v4134
    %v4151 = vpack.c.bf16 %v4135, %v4135
    %v4152 = vpack.c.bf16 %v4136, %v4136
    %v4153 = vpack.c.bf16 %v4137, %v4137
    %v4154 = vpack.c.bf16 %v4138, %v4138
    %v4155 = vpack.c.bf16 %v4139, %v4139
    %v4156 = vpack.c.bf16 %v4140, %v4140
    %v4157 = vpack.c.bf16 %v4141, %v4141
    %v4158 = vpack.c.bf16 %v4142, %v4142
    %v4159 = vpack.c.bf16 %v4143, %v4143
    %v4160 = vpack.c.bf16 %v4144, %v4144
    %v4161 = vpack.c.bf16 %v4145, %v4145
    %v4162 = vpack.c.bf16 %v4146, %v4146
    %v4163 = vpack.c.bf16 %v4147, %v4147
    %v4164 = vpack.c.bf16 %v4148, %v4148
    %v4173 = vunpack.c.l.b16 %v4149
    %v4174 = vunpack.c.l.b16 %v4151
    %v4175 = vunpack.c.l.b16 %v4153
    %v4176 = vunpack.c.l.b16 %v4155
    %v4177 = vunpack.c.l.b16 %v4157
    %v4178 = vunpack.c.l.b16 %v4159
    %v4179 = vunpack.c.l.b16 %v4161
    %v4180 = vunpack.c.l.b16 %v4163
    %v4181 = vpack.c.b16 %v4173, %v4173
    %v4182 = vpack.c.b16 %v4174, %v4174
    %v4183 = vpack.c.b16 %v4175, %v4175
    %v4184 = vpack.c.b16 %v4176, %v4176
    %v4185 = vpack.c.b16 %v4177, %v4177
    %v4186 = vpack.c.b16 %v4178, %v4178
    %v4187 = vpack.c.b16 %v4179, %v4179
    %v4188 = vpack.c.b16 %v4180, %v4180
    %v4189 = vunpack.c.l.b16 %v4181
    %v4190 = vunpack.c.l.b16 %v4182
    %v4191 = vunpack.c.l.b16 %v4183
    %v4192 = vunpack.c.l.b16 %v4184
    %v4193 = vunpack.c.l.b16 %v4185
    %v4194 = vunpack.c.l.b16 %v4186
    %v4195 = vunpack.c.l.b16 %v4187
    %v4196 = vunpack.c.l.b16 %v4188
    %v4197 = vrot.slane %v4190, 7
    %vm4198 = vcmask 1041409
    %v4199 = vsel %vm4198, %v4197, %v4189
    %v4200 = vrot.slane %v4191, 6
    %vm4201 = vcmask 1042434
    %v4202 = vsel %vm4201, %v4200, %v4199
    %v4203 = vrot.slane %v4192, 5
    %vm4204 = vcmask 1043459
    %v4205 = vsel %vm4204, %v4203, %v4202
    %v4206 = vrot.slane %v4193, 4
    %vm4207 = vcmask 1044484
    %v4208 = vsel %vm4207, %v4206, %v4205
    %v4209 = vrot.slane %v4194, 3
    %vm4210 = vcmask 1045509
    %v4211 = vsel %vm4210, %v4209, %v4208
    %v4212 = vrot.slane %v4195, 2
    %vm4213 = vcmask 1046534
    %v4214 = vsel %vm4213, %v4212, %v4211
    %v4215 = vrot.slane %v4196, 1
    %vm4216 = vcmask 1047559
    %v4217 = vsel %vm4216, %v4215, %v4214
    %v4218 = vpack.c.b16 %v4217, %v4217
    %v4219 = vrot.slane %v4189, 1
    %v4220 = vsel %vm4198, %v4190, %v4219
    %v4221 = vrot.slane %v4191, 7
    %v4222 = vsel %vm4201, %v4221, %v4220
    %v4223 = vrot.slane %v4192, 6
    %v4224 = vsel %vm4204, %v4223, %v4222
    %v4225 = vrot.slane %v4193, 5
    %v4226 = vsel %vm4207, %v4225, %v4224
    %v4227 = vrot.slane %v4194, 4
    %v4228 = vsel %vm4210, %v4227, %v4226
    %v4229 = vrot.slane %v4195, 3
    %v4230 = vsel %vm4213, %v4229, %v4228
    %v4231 = vrot.slane %v4196, 2
    %v4232 = vsel %vm4216, %v4231, %v4230
    %v4233 = vpack.c.b16 %v4232, %v4232
    %4234 = vrot.lane.b32.xlu0 %v4233, 64
    %v4235 = vpop.permute.xlu0 %4234
    %v4236 = vrot.slane %v4189, 2
    %v4237 = vrot.slane %v4190, 1
    %v4238 = vsel %vm4198, %v4237, %v4236
    %v4239 = vsel %vm4201, %v4191, %v4238
    %v4240 = vrot.slane %v4192, 7
    %v4241 = vsel %vm4204, %v4240, %v4239
    %v4242 = vrot.slane %v4193, 6
    %v4243 = vsel %vm4207, %v4242, %v4241
    %v4244 = vrot.slane %v4194, 5
    %v4245 = vsel %vm4210, %v4244, %v4243
    %v4246 = vrot.slane %v4195, 4
    %v4247 = vsel %vm4213, %v4246, %v4245
    %v4248 = vrot.slane %v4196, 3
    %v4249 = vsel %vm4216, %v4248, %v4247
    %v4250 = vpack.c.b16 %v4249, %v4249
    %v4251 = vrot.slane %v4189, 3
    %v4252 = vrot.slane %v4190, 2
    %v4253 = vsel %vm4198, %v4252, %v4251
    %v4254 = vrot.slane %v4191, 1
    %v4255 = vsel %vm4201, %v4254, %v4253
    %v4256 = vsel %vm4204, %v4192, %v4255
    %v4257 = vrot.slane %v4193, 7
    %v4258 = vsel %vm4207, %v4257, %v4256
    %v4259 = vrot.slane %v4194, 6
    %v4260 = vsel %vm4210, %v4259, %v4258
    %v4261 = vrot.slane %v4195, 5
    %v4262 = vsel %vm4213, %v4261, %v4260
    %v4263 = vrot.slane %v4196, 4
    %v4264 = vsel %vm4216, %v4263, %v4262
    %v4265 = vpack.c.b16 %v4264, %v4264
    %4266 = vrot.lane.b32.xlu0 %v4265, 64
    %v4267 = vpop.permute.xlu0 %4266
    %v4268 = vrot.slane %v4189, 4
    %v4269 = vrot.slane %v4190, 3
    %v4270 = vsel %vm4198, %v4269, %v4268
    %v4271 = vrot.slane %v4191, 2
    %v4272 = vsel %vm4201, %v4271, %v4270
    %v4273 = vrot.slane %v4192, 1
    %v4274 = vsel %vm4204, %v4273, %v4272
    %v4275 = vsel %vm4207, %v4193, %v4274
    %v4276 = vrot.slane %v4194, 7
    %v4277 = vsel %vm4210, %v4276, %v4275
    %v4278 = vrot.slane %v4195, 6
    %v4279 = vsel %vm4213, %v4278, %v4277
    %v4280 = vrot.slane %v4196, 5
    %v4281 = vsel %vm4216, %v4280, %v4279
    %v4282 = vpack.c.b16 %v4281, %v4281
    %v4283 = vrot.slane %v4189, 5
    %v4284 = vrot.slane %v4190, 4
    %v4285 = vsel %vm4198, %v4284, %v4283
    %v4286 = vrot.slane %v4191, 3
    %v4287 = vsel %vm4201, %v4286, %v4285
    %v4288 = vrot.slane %v4192, 2
    %v4289 = vsel %vm4204, %v4288, %v4287
    %v4290 = vrot.slane %v4193, 1
    %v4291 = vsel %vm4207, %v4290, %v4289
    %v4292 = vsel %vm4210, %v4194, %v4291
    %v4293 = vrot.slane %v4195, 7
    %v4294 = vsel %vm4213, %v4293, %v4292
    %v4295 = vrot.slane %v4196, 6
    %v4296 = vsel %vm4216, %v4295, %v4294
    %v4297 = vpack.c.b16 %v4296, %v4296
    %4298 = vrot.lane.b32.xlu0 %v4297, 64
    %v4299 = vpop.permute.xlu0 %4298
    %v4300 = vrot.slane %v4189, 6
    %v4301 = vrot.slane %v4190, 5
    %v4302 = vsel %vm4198, %v4301, %v4300
    %v4303 = vrot.slane %v4191, 4
    %v4304 = vsel %vm4201, %v4303, %v4302
    %v4305 = vrot.slane %v4192, 3
    %v4306 = vsel %vm4204, %v4305, %v4304
    %v4307 = vrot.slane %v4193, 2
    %v4308 = vsel %vm4207, %v4307, %v4306
    %v4309 = vrot.slane %v4194, 1
    %v4310 = vsel %vm4210, %v4309, %v4308
    %v4311 = vsel %vm4213, %v4195, %v4310
    %v4312 = vrot.slane %v4196, 7
    %v4313 = vsel %vm4216, %v4312, %v4311
    %v4314 = vpack.c.b16 %v4313, %v4313
    %v4315 = vrot.slane %v4189, 7
    %v4316 = vrot.slane %v4190, 6
    %v4317 = vsel %vm4198, %v4316, %v4315
    %v4318 = vrot.slane %v4191, 5
    %v4319 = vsel %vm4201, %v4318, %v4317
    %v4320 = vrot.slane %v4192, 4
    %v4321 = vsel %vm4204, %v4320, %v4319
    %v4322 = vrot.slane %v4193, 3
    %v4323 = vsel %vm4207, %v4322, %v4321
    %v4324 = vrot.slane %v4194, 2
    %v4325 = vsel %vm4210, %v4324, %v4323
    %v4326 = vrot.slane %v4195, 1
    %v4327 = vsel %vm4213, %v4326, %v4325
    %v4328 = vsel %vm4216, %v4196, %v4327
    %v4329 = vpack.c.b16 %v4328, %v4328
    %4330 = vrot.lane.b32.xlu0 %v4329, 64
    %v4331 = vpop.permute.xlu0 %4330
    %v4340 = vunpack.c.l.b16 %v4150
    %v4341 = vunpack.c.l.b16 %v4152
    %v4342 = vunpack.c.l.b16 %v4154
    %v4343 = vunpack.c.l.b16 %v4156
    %v4344 = vunpack.c.l.b16 %v4158
    %v4345 = vunpack.c.l.b16 %v4160
    %v4346 = vunpack.c.l.b16 %v4162
    %v4347 = vunpack.c.l.b16 %v4164
    %v4348 = vpack.c.b16 %v4340, %v4340
    %v4349 = vpack.c.b16 %v4341, %v4341
    %v4350 = vpack.c.b16 %v4342, %v4342
    %v4351 = vpack.c.b16 %v4343, %v4343
    %v4352 = vpack.c.b16 %v4344, %v4344
    %v4353 = vpack.c.b16 %v4345, %v4345
    %v4354 = vpack.c.b16 %v4346, %v4346
    %v4355 = vpack.c.b16 %v4347, %v4347
    %v4356 = vunpack.c.l.b16 %v4348
    %v4357 = vunpack.c.l.b16 %v4349
    %v4358 = vunpack.c.l.b16 %v4350
    %v4359 = vunpack.c.l.b16 %v4351
    %v4360 = vunpack.c.l.b16 %v4352
    %v4361 = vunpack.c.l.b16 %v4353
    %v4362 = vunpack.c.l.b16 %v4354
    %v4363 = vunpack.c.l.b16 %v4355
    %v4364 = vrot.slane %v4357, 7
    %v4365 = vsel %vm4198, %v4364, %v4356
    %v4366 = vrot.slane %v4358, 6
    %v4367 = vsel %vm4201, %v4366, %v4365
    %v4368 = vrot.slane %v4359, 5
    %v4369 = vsel %vm4204, %v4368, %v4367
    %v4370 = vrot.slane %v4360, 4
    %v4371 = vsel %vm4207, %v4370, %v4369
    %v4372 = vrot.slane %v4361, 3
    %v4373 = vsel %vm4210, %v4372, %v4371
    %v4374 = vrot.slane %v4362, 2
    %v4375 = vsel %vm4213, %v4374, %v4373
    %v4376 = vrot.slane %v4363, 1
    %v4377 = vsel %vm4216, %v4376, %v4375
    %v4378 = vpack.c.b16 %v4377, %v4377
    %v4379 = vrot.slane %v4356, 1
    %v4380 = vsel %vm4198, %v4357, %v4379
    %v4381 = vrot.slane %v4358, 7
    %v4382 = vsel %vm4201, %v4381, %v4380
    %v4383 = vrot.slane %v4359, 6
    %v4384 = vsel %vm4204, %v4383, %v4382
    %v4385 = vrot.slane %v4360, 5
    %v4386 = vsel %vm4207, %v4385, %v4384
    %v4387 = vrot.slane %v4361, 4
    %v4388 = vsel %vm4210, %v4387, %v4386
    %v4389 = vrot.slane %v4362, 3
    %v4390 = vsel %vm4213, %v4389, %v4388
    %v4391 = vrot.slane %v4363, 2
    %v4392 = vsel %vm4216, %v4391, %v4390
    %v4393 = vpack.c.b16 %v4392, %v4392
    %4394 = vrot.lane.b32.xlu0 %v4393, 64
    %v4395 = vpop.permute.xlu0 %4394
    %v4396 = vrot.slane %v4356, 2
    %v4397 = vrot.slane %v4357, 1
    %v4398 = vsel %vm4198, %v4397, %v4396
    %v4399 = vsel %vm4201, %v4358, %v4398
    %v4400 = vrot.slane %v4359, 7
    %v4401 = vsel %vm4204, %v4400, %v4399
    %v4402 = vrot.slane %v4360, 6
    %v4403 = vsel %vm4207, %v4402, %v4401
    %v4404 = vrot.slane %v4361, 5
    %v4405 = vsel %vm4210, %v4404, %v4403
    %v4406 = vrot.slane %v4362, 4
    %v4407 = vsel %vm4213, %v4406, %v4405
    %v4408 = vrot.slane %v4363, 3
    %v4409 = vsel %vm4216, %v4408, %v4407
    %v4410 = vpack.c.b16 %v4409, %v4409
    %v4411 = vrot.slane %v4356, 3
    %v4412 = vrot.slane %v4357, 2
    %v4413 = vsel %vm4198, %v4412, %v4411
    %v4414 = vrot.slane %v4358, 1
    %v4415 = vsel %vm4201, %v4414, %v4413
    %v4416 = vsel %vm4204, %v4359, %v4415
    %v4417 = vrot.slane %v4360, 7
    %v4418 = vsel %vm4207, %v4417, %v4416
    %v4419 = vrot.slane %v4361, 6
    %v4420 = vsel %vm4210, %v4419, %v4418
    %v4421 = vrot.slane %v4362, 5
    %v4422 = vsel %vm4213, %v4421, %v4420
    %v4423 = vrot.slane %v4363, 4
    %v4424 = vsel %vm4216, %v4423, %v4422
    %v4425 = vpack.c.b16 %v4424, %v4424
    %4426 = vrot.lane.b32.xlu0 %v4425, 64
    %v4427 = vpop.permute.xlu0 %4426
    %v4428 = vrot.slane %v4356, 4
    %v4429 = vrot.slane %v4357, 3
    %v4430 = vsel %vm4198, %v4429, %v4428
    %v4431 = vrot.slane %v4358, 2
    %v4432 = vsel %vm4201, %v4431, %v4430
    %v4433 = vrot.slane %v4359, 1
    %v4434 = vsel %vm4204, %v4433, %v4432
    %v4435 = vsel %vm4207, %v4360, %v4434
    %v4436 = vrot.slane %v4361, 7
    %v4437 = vsel %vm4210, %v4436, %v4435
    %v4438 = vrot.slane %v4362, 6
    %v4439 = vsel %vm4213, %v4438, %v4437
    %v4440 = vrot.slane %v4363, 5
    %v4441 = vsel %vm4216, %v4440, %v4439
    %v4442 = vpack.c.b16 %v4441, %v4441
    %v4443 = vrot.slane %v4356, 5
    %v4444 = vrot.slane %v4357, 4
    %v4445 = vsel %vm4198, %v4444, %v4443
    %v4446 = vrot.slane %v4358, 3
    %v4447 = vsel %vm4201, %v4446, %v4445
    %v4448 = vrot.slane %v4359, 2
    %v4449 = vsel %vm4204, %v4448, %v4447
    %v4450 = vrot.slane %v4360, 1
    %v4451 = vsel %vm4207, %v4450, %v4449
    %v4452 = vsel %vm4210, %v4361, %v4451
    %v4453 = vrot.slane %v4362, 7
    %v4454 = vsel %vm4213, %v4453, %v4452
    %v4455 = vrot.slane %v4363, 6
    %v4456 = vsel %vm4216, %v4455, %v4454
    %v4457 = vpack.c.b16 %v4456, %v4456
    %4458 = vrot.lane.b32.xlu0 %v4457, 64
    %v4459 = vpop.permute.xlu0 %4458
    %v4460 = vrot.slane %v4356, 6
    %v4461 = vrot.slane %v4357, 5
    %v4462 = vsel %vm4198, %v4461, %v4460
    %v4463 = vrot.slane %v4358, 4
    %v4464 = vsel %vm4201, %v4463, %v4462
    %v4465 = vrot.slane %v4359, 3
    %v4466 = vsel %vm4204, %v4465, %v4464
    %v4467 = vrot.slane %v4360, 2
    %v4468 = vsel %vm4207, %v4467, %v4466
    %v4469 = vrot.slane %v4361, 1
    %v4470 = vsel %vm4210, %v4469, %v4468
    %v4471 = vsel %vm4213, %v4362, %v4470
    %v4472 = vrot.slane %v4363, 7
    %v4473 = vsel %vm4216, %v4472, %v4471
    %v4474 = vpack.c.b16 %v4473, %v4473
    %v4475 = vrot.slane %v4356, 7
    %v4476 = vrot.slane %v4357, 6
    %v4477 = vsel %vm4198, %v4476, %v4475
    %v4478 = vrot.slane %v4358, 5
    %v4479 = vsel %vm4201, %v4478, %v4477
    %v4480 = vrot.slane %v4359, 4
    %v4481 = vsel %vm4204, %v4480, %v4479
    %v4482 = vrot.slane %v4360, 3
    %v4483 = vsel %vm4207, %v4482, %v4481
    %v4484 = vrot.slane %v4361, 2
    %v4485 = vsel %vm4210, %v4484, %v4483
    %v4486 = vrot.slane %v4362, 1
    %v4487 = vsel %vm4213, %v4486, %v4485
    %v4488 = vsel %vm4216, %v4363, %v4487
    %v4489 = vpack.c.b16 %v4488, %v4488
    %4490 = vrot.lane.b32.xlu0 %v4489, 64
    %v4491 = vpop.permute.xlu0 %4490
    %v4494 = vsel %vm3206, %v4218, %v4235
    %v4498 = vsel %vm3206, %v4250, %v4267
    %v4502 = vsel %vm3206, %v4282, %v4299
    %v4506 = vsel %vm3206, %v4314, %v4331
    %v4510 = vsel %vm3206, %v4378, %v4395
    %v4514 = vsel %vm3206, %v4410, %v4427
    %v4518 = vsel %vm3206, %v4442, %v4459
    %v4522 = vsel %vm3206, %v4474, %v4491
    %v4524 = vld [vmem:[#allocation2] sm:$0xff]
    %v4525 = vld [vmem:[#allocation2 + $0x8] sm:$0xff]
    %v4526 = vld [vmem:[#allocation2 + $0x10] sm:$0xff]
    %v4527 = vld [vmem:[#allocation2 + $0x18] sm:$0xff]
    %v4528 = vld [vmem:[#allocation2 + $0x20] sm:$0xff]
    %v4529 = vld [vmem:[#allocation2 + $0x28] sm:$0xff]
    %v4530 = vld [vmem:[#allocation2 + $0x30] sm:$0xff]
    %v4531 = vld [vmem:[#allocation2 + $0x38] sm:$0xff]
    %v4532 = vld [vmem:[#allocation2 + $0x40] sm:$0xff]
    %v4533 = vld [vmem:[#allocation2 + $0x48] sm:$0xff]
    %v4534 = vld [vmem:[#allocation2 + $0x50] sm:$0xff]
    %v4535 = vld [vmem:[#allocation2 + $0x58] sm:$0xff]
    %v4536 = vld [vmem:[#allocation2 + $0x60] sm:$0xff]
    %v4537 = vld [vmem:[#allocation2 + $0x68] sm:$0xff]
    %v4538 = vld [vmem:[#allocation2 + $0x70] sm:$0xff]
    %v4539 = vld [vmem:[#allocation2 + $0x78] sm:$0xff]
    %v4540 = vld [vmem:[#allocation2 + $0x80] sm:$0xff]
    %v4541 = vld [vmem:[#allocation2 + $0x88] sm:$0xff]
    %v4542 = vld [vmem:[#allocation2 + $0x90] sm:$0xff]
    %v4543 = vld [vmem:[#allocation2 + $0x98] sm:$0xff]
    %v4544 = vld [vmem:[#allocation2 + $0xa0] sm:$0xff]
    %v4545 = vld [vmem:[#allocation2 + $0xa8] sm:$0xff]
    %v4546 = vld [vmem:[#allocation2 + $0xb0] sm:$0xff]
    %v4547 = vld [vmem:[#allocation2 + $0xb8] sm:$0xff]
    %v4548 = vld [vmem:[#allocation2 + $0xc0] sm:$0xff]
    %v4549 = vld [vmem:[#allocation2 + $0xc8] sm:$0xff]
    %v4550 = vld [vmem:[#allocation2 + $0xd0] sm:$0xff]
    %v4551 = vld [vmem:[#allocation2 + $0xd8] sm:$0xff]
    %v4552 = vld [vmem:[#allocation2 + $0xe0] sm:$0xff]
    %v4553 = vld [vmem:[#allocation2 + $0xe8] sm:$0xff]
    %v4554 = vld [vmem:[#allocation2 + $0xf0] sm:$0xff]
    %v4555 = vld [vmem:[#allocation2 + $0xf8] sm:$0xff]
    %v4556 = vld [vmem:[#allocation2 + $0x100] sm:$0xff]
    %v4557 = vld [vmem:[#allocation2 + $0x108] sm:$0xff]
    %v4558 = vld [vmem:[#allocation2 + $0x110] sm:$0xff]
    %v4559 = vld [vmem:[#allocation2 + $0x118] sm:$0xff]
    %v4560 = vld [vmem:[#allocation2 + $0x120] sm:$0xff]
    %v4561 = vld [vmem:[#allocation2 + $0x128] sm:$0xff]
    %v4562 = vld [vmem:[#allocation2 + $0x130] sm:$0xff]
    %v4563 = vld [vmem:[#allocation2 + $0x138] sm:$0xff]
    %v4564 = vld [vmem:[#allocation2 + $0x140] sm:$0xff]
    %v4565 = vld [vmem:[#allocation2 + $0x148] sm:$0xff]
    %v4566 = vld [vmem:[#allocation2 + $0x150] sm:$0xff]
    %v4567 = vld [vmem:[#allocation2 + $0x158] sm:$0xff]
    %v4568 = vld [vmem:[#allocation2 + $0x160] sm:$0xff]
    %v4569 = vld [vmem:[#allocation2 + $0x168] sm:$0xff]
    %v4570 = vld [vmem:[#allocation2 + $0x170] sm:$0xff]
    %v4571 = vld [vmem:[#allocation2 + $0x178] sm:$0xff]
    %v4572 = vld [vmem:[#allocation2 + $0x180] sm:$0xff]
    %v4573 = vld [vmem:[#allocation2 + $0x188] sm:$0xff]
    %v4574 = vld [vmem:[#allocation2 + $0x190] sm:$0xff]
    %v4575 = vld [vmem:[#allocation2 + $0x198] sm:$0xff]
    %v4576 = vld [vmem:[#allocation2 + $0x1a0] sm:$0xff]
    %v4577 = vld [vmem:[#allocation2 + $0x1a8] sm:$0xff]
    %v4578 = vld [vmem:[#allocation2 + $0x1b0] sm:$0xff]
    %v4579 = vld [vmem:[#allocation2 + $0x1b8] sm:$0xff]
    %v4580 = vld [vmem:[#allocation2 + $0x1c0] sm:$0xff]
    %v4581 = vld [vmem:[#allocation2 + $0x1c8] sm:$0xff]
    %v4582 = vld [vmem:[#allocation2 + $0x1d0] sm:$0xff]
    %v4583 = vld [vmem:[#allocation2 + $0x1d8] sm:$0xff]
    %v4584 = vld [vmem:[#allocation2 + $0x1e0] sm:$0xff]
    %v4585 = vld [vmem:[#allocation2 + $0x1e8] sm:$0xff]
    %v4586 = vld [vmem:[#allocation2 + $0x1f0] sm:$0xff]
    %v4587 = vld [vmem:[#allocation2 + $0x1f8] sm:$0xff]
    %v4588 = vld [vmem:[#allocation2 + $0x200] sm:$0xff]
    %v4589 = vld [vmem:[#allocation2 + $0x208] sm:$0xff]
    %v4590 = vld [vmem:[#allocation2 + $0x210] sm:$0xff]
    %v4591 = vld [vmem:[#allocation2 + $0x218] sm:$0xff]
    %v4592 = vld [vmem:[#allocation2 + $0x220] sm:$0xff]
    %v4593 = vld [vmem:[#allocation2 + $0x228] sm:$0xff]
    %v4594 = vld [vmem:[#allocation2 + $0x230] sm:$0xff]
    %v4595 = vld [vmem:[#allocation2 + $0x238] sm:$0xff]
    %v4596 = vld [vmem:[#allocation2 + $0x240] sm:$0xff]
    %v4597 = vld [vmem:[#allocation2 + $0x248] sm:$0xff]
    %v4598 = vld [vmem:[#allocation2 + $0x250] sm:$0xff]
    %v4599 = vld [vmem:[#allocation2 + $0x258] sm:$0xff]
    %v4600 = vld [vmem:[#allocation2 + $0x260] sm:$0xff]
    %v4601 = vld [vmem:[#allocation2 + $0x268] sm:$0xff]
    %v4602 = vld [vmem:[#allocation2 + $0x270] sm:$0xff]
    %v4603 = vld [vmem:[#allocation2 + $0x278] sm:$0xff]
    %v4604 = vld [vmem:[#allocation2 + $0x280] sm:$0xff]
    %v4605 = vld [vmem:[#allocation2 + $0x288] sm:$0xff]
    %v4606 = vld [vmem:[#allocation2 + $0x290] sm:$0xff]
    %v4607 = vld [vmem:[#allocation2 + $0x298] sm:$0xff]
    %v4608 = vld [vmem:[#allocation2 + $0x2a0] sm:$0xff]
    %v4609 = vld [vmem:[#allocation2 + $0x2a8] sm:$0xff]
    %v4610 = vld [vmem:[#allocation2 + $0x2b0] sm:$0xff]
    %v4611 = vld [vmem:[#allocation2 + $0x2b8] sm:$0xff]
    %v4612 = vld [vmem:[#allocation2 + $0x2c0] sm:$0xff]
    %v4613 = vld [vmem:[#allocation2 + $0x2c8] sm:$0xff]
    %v4614 = vld [vmem:[#allocation2 + $0x2d0] sm:$0xff]
    %v4615 = vld [vmem:[#allocation2 + $0x2d8] sm:$0xff]
    %v4616 = vld [vmem:[#allocation2 + $0x2e0] sm:$0xff]
    %v4617 = vld [vmem:[#allocation2 + $0x2e8] sm:$0xff]
    %v4618 = vld [vmem:[#allocation2 + $0x2f0] sm:$0xff]
    %v4619 = vld [vmem:[#allocation2 + $0x2f8] sm:$0xff]
    %v4620 = vld [vmem:[#allocation2 + $0x300] sm:$0xff]
    %v4621 = vld [vmem:[#allocation2 + $0x308] sm:$0xff]
    %v4622 = vld [vmem:[#allocation2 + $0x310] sm:$0xff]
    %v4623 = vld [vmem:[#allocation2 + $0x318] sm:$0xff]
    %v4624 = vld [vmem:[#allocation2 + $0x320] sm:$0xff]
    %v4625 = vld [vmem:[#allocation2 + $0x328] sm:$0xff]
    %v4626 = vld [vmem:[#allocation2 + $0x330] sm:$0xff]
    %v4627 = vld [vmem:[#allocation2 + $0x338] sm:$0xff]
    %v4628 = vld [vmem:[#allocation2 + $0x340] sm:$0xff]
    %v4629 = vld [vmem:[#allocation2 + $0x348] sm:$0xff]
    %v4630 = vld [vmem:[#allocation2 + $0x350] sm:$0xff]
    %v4631 = vld [vmem:[#allocation2 + $0x358] sm:$0xff]
    %v4632 = vld [vmem:[#allocation2 + $0x360] sm:$0xff]
    %v4633 = vld [vmem:[#allocation2 + $0x368] sm:$0xff]
    %v4634 = vld [vmem:[#allocation2 + $0x370] sm:$0xff]
    %v4635 = vld [vmem:[#allocation2 + $0x378] sm:$0xff]
    %v4636 = vld [vmem:[#allocation2 + $0x380] sm:$0xff]
    %v4637 = vld [vmem:[#allocation2 + $0x388] sm:$0xff]
    %v4638 = vld [vmem:[#allocation2 + $0x390] sm:$0xff]
    %v4639 = vld [vmem:[#allocation2 + $0x398] sm:$0xff]
    %v4640 = vld [vmem:[#allocation2 + $0x3a0] sm:$0xff]
    %v4641 = vld [vmem:[#allocation2 + $0x3a8] sm:$0xff]
    %v4642 = vld [vmem:[#allocation2 + $0x3b0] sm:$0xff]
    %v4643 = vld [vmem:[#allocation2 + $0x3b8] sm:$0xff]
    %v4644 = vld [vmem:[#allocation2 + $0x3c0] sm:$0xff]
    %v4645 = vld [vmem:[#allocation2 + $0x3c8] sm:$0xff]
    %v4646 = vld [vmem:[#allocation2 + $0x3d0] sm:$0xff]
    %v4647 = vld [vmem:[#allocation2 + $0x3d8] sm:$0xff]
    %v4648 = vld [vmem:[#allocation2 + $0x3e0] sm:$0xff]
    %v4649 = vld [vmem:[#allocation2 + $0x3e8] sm:$0xff]
    %v4650 = vld [vmem:[#allocation2 + $0x3f0] sm:$0xff]
    %v4651 = vld [vmem:[#allocation2 + $0x3f8] sm:$0xff]
    %v4652 = vld [vmem:[%s6] sm:$0x3]
    %v4654 = vperm.slane %v4652, 0
    %v4655 = vperm.slane %v4652, 1
    %v4786 = vunpack.c.l.b16 %v4524
    %v4787 = vunpack.c.h.b16 %v4524
    %v4788 = vunpack.c.l.b16 %v4525
    %v4789 = vunpack.c.h.b16 %v4525
    %v4790 = vunpack.c.l.b16 %v4526
    %v4791 = vunpack.c.h.b16 %v4526
    %v4792 = vunpack.c.l.b16 %v4527
    %v4793 = vunpack.c.h.b16 %v4527
    %v4794 = vunpack.c.l.b16 %v4528
    %v4795 = vunpack.c.h.b16 %v4528
    %v4796 = vunpack.c.l.b16 %v4529
    %v4797 = vunpack.c.h.b16 %v4529
    %v4798 = vunpack.c.l.b16 %v4530
    %v4799 = vunpack.c.h.b16 %v4530
    %v4800 = vunpack.c.l.b16 %v4531
    %v4801 = vunpack.c.h.b16 %v4531
    %v4802 = vunpack.c.l.b16 %v4532
    %v4803 = vunpack.c.h.b16 %v4532
    %v4804 = vunpack.c.l.b16 %v4533
    %v4805 = vunpack.c.h.b16 %v4533
    %v4806 = vunpack.c.l.b16 %v4534
    %v4807 = vunpack.c.h.b16 %v4534
    %v4808 = vunpack.c.l.b16 %v4535
    %v4809 = vunpack.c.h.b16 %v4535
    %v4810 = vunpack.c.l.b16 %v4536
    %v4811 = vunpack.c.h.b16 %v4536
    %v4812 = vunpack.c.l.b16 %v4537
    %v4813 = vunpack.c.h.b16 %v4537
    %v4814 = vunpack.c.l.b16 %v4538
    %v4815 = vunpack.c.h.b16 %v4538
    %v4816 = vunpack.c.l.b16 %v4539
    %v4817 = vunpack.c.h.b16 %v4539
    %v4818 = vunpack.c.l.b16 %v4540
    %v4819 = vunpack.c.h.b16 %v4540
    %v4820 = vunpack.c.l.b16 %v4541
    %v4821 = vunpack.c.h.b16 %v4541
    %v4822 = vunpack.c.l.b16 %v4542
    %v4823 = vunpack.c.h.b16 %v4542
    %v4824 = vunpack.c.l.b16 %v4543
    %v4825 = vunpack.c.h.b16 %v4543
    %v4826 = vunpack.c.l.b16 %v4544
    %v4827 = vunpack.c.h.b16 %v4544
    %v4828 = vunpack.c.l.b16 %v4545
    %v4829 = vunpack.c.h.b16 %v4545
    %v4830 = vunpack.c.l.b16 %v4546
    %v4831 = vunpack.c.h.b16 %v4546
    %v4832 = vunpack.c.l.b16 %v4547
    %v4833 = vunpack.c.h.b16 %v4547
    %v4834 = vunpack.c.l.b16 %v4548
    %v4835 = vunpack.c.h.b16 %v4548
    %v4836 = vunpack.c.l.b16 %v4549
    %v4837 = vunpack.c.h.b16 %v4549
    %v4838 = vunpack.c.l.b16 %v4550
    %v4839 = vunpack.c.h.b16 %v4550
    %v4840 = vunpack.c.l.b16 %v4551
    %v4841 = vunpack.c.h.b16 %v4551
    %v4842 = vunpack.c.l.b16 %v4552
    %v4843 = vunpack.c.h.b16 %v4552
    %v4844 = vunpack.c.l.b16 %v4553
    %v4845 = vunpack.c.h.b16 %v4553
    %v4846 = vunpack.c.l.b16 %v4554
    %v4847 = vunpack.c.h.b16 %v4554
    %v4848 = vunpack.c.l.b16 %v4555
    %v4849 = vunpack.c.h.b16 %v4555
    %v4850 = vunpack.c.l.b16 %v4556
    %v4851 = vunpack.c.h.b16 %v4556
    %v4852 = vunpack.c.l.b16 %v4557
    %v4853 = vunpack.c.h.b16 %v4557
    %v4854 = vunpack.c.l.b16 %v4558
    %v4855 = vunpack.c.h.b16 %v4558
    %v4856 = vunpack.c.l.b16 %v4559
    %v4857 = vunpack.c.h.b16 %v4559
    %v4858 = vunpack.c.l.b16 %v4560
    %v4859 = vunpack.c.h.b16 %v4560
    %v4860 = vunpack.c.l.b16 %v4561
    %v4861 = vunpack.c.h.b16 %v4561
    %v4862 = vunpack.c.l.b16 %v4562
    %v4863 = vunpack.c.h.b16 %v4562
    %v4864 = vunpack.c.l.b16 %v4563
    %v4865 = vunpack.c.h.b16 %v4563
    %v4866 = vunpack.c.l.b16 %v4564
    %v4867 = vunpack.c.h.b16 %v4564
    %v4868 = vunpack.c.l.b16 %v4565
    %v4869 = vunpack.c.h.b16 %v4565
    %v4870 = vunpack.c.l.b16 %v4566
    %v4871 = vunpack.c.h.b16 %v4566
    %v4872 = vunpack.c.l.b16 %v4567
    %v4873 = vunpack.c.h.b16 %v4567
    %v4874 = vunpack.c.l.b16 %v4568
    %v4875 = vunpack.c.h.b16 %v4568
    %v4876 = vunpack.c.l.b16 %v4569
    %v4877 = vunpack.c.h.b16 %v4569
    %v4878 = vunpack.c.l.b16 %v4570
    %v4879 = vunpack.c.h.b16 %v4570
    %v4880 = vunpack.c.l.b16 %v4571
    %v4881 = vunpack.c.h.b16 %v4571
    %v4882 = vunpack.c.l.b16 %v4572
    %v4883 = vunpack.c.h.b16 %v4572
    %v4884 = vunpack.c.l.b16 %v4573
    %v4885 = vunpack.c.h.b16 %v4573
    %v4886 = vunpack.c.l.b16 %v4574
    %v4887 = vunpack.c.h.b16 %v4574
    %v4888 = vunpack.c.l.b16 %v4575
    %v4889 = vunpack.c.h.b16 %v4575
    %v4890 = vunpack.c.l.b16 %v4576
    %v4891 = vunpack.c.h.b16 %v4576
    %v4892 = vunpack.c.l.b16 %v4577
    %v4893 = vunpack.c.h.b16 %v4577
    %v4894 = vunpack.c.l.b16 %v4578
    %v4895 = vunpack.c.h.b16 %v4578
    %v4896 = vunpack.c.l.b16 %v4579
    %v4897 = vunpack.c.h.b16 %v4579
    %v4898 = vunpack.c.l.b16 %v4580
    %v4899 = vunpack.c.h.b16 %v4580
    %v4900 = vunpack.c.l.b16 %v4581
    %v4901 = vunpack.c.h.b16 %v4581
    %v4902 = vunpack.c.l.b16 %v4582
    %v4903 = vunpack.c.h.b16 %v4582
    %v4904 = vunpack.c.l.b16 %v4583
    %v4905 = vunpack.c.h.b16 %v4583
    %v4906 = vunpack.c.l.b16 %v4584
    %v4907 = vunpack.c.h.b16 %v4584
    %v4908 = vunpack.c.l.b16 %v4585
    %v4909 = vunpack.c.h.b16 %v4585
    %v4910 = vunpack.c.l.b16 %v4586
    %v4911 = vunpack.c.h.b16 %v4586
    %v4912 = vunpack.c.l.b16 %v4587
    %v4913 = vunpack.c.h.b16 %v4587
    %v4914 = vunpack.c.l.b16 %v4588
    %v4915 = vunpack.c.h.b16 %v4588
    %v4916 = vunpack.c.l.b16 %v4589
    %v4917 = vunpack.c.h.b16 %v4589
    %v4918 = vunpack.c.l.b16 %v4590
    %v4919 = vunpack.c.h.b16 %v4590
    %v4920 = vunpack.c.l.b16 %v4591
    %v4921 = vunpack.c.h.b16 %v4591
    %v4922 = vunpack.c.l.b16 %v4592
    %v4923 = vunpack.c.h.b16 %v4592
    %v4924 = vunpack.c.l.b16 %v4593
    %v4925 = vunpack.c.h.b16 %v4593
    %v4926 = vunpack.c.l.b16 %v4594
    %v4927 = vunpack.c.h.b16 %v4594
    %v4928 = vunpack.c.l.b16 %v4595
    %v4929 = vunpack.c.h.b16 %v4595
    %v4930 = vunpack.c.l.b16 %v4596
    %v4931 = vunpack.c.h.b16 %v4596
    %v4932 = vunpack.c.l.b16 %v4597
    %v4933 = vunpack.c.h.b16 %v4597
    %v4934 = vunpack.c.l.b16 %v4598
    %v4935 = vunpack.c.h.b16 %v4598
    %v4936 = vunpack.c.l.b16 %v4599
    %v4937 = vunpack.c.h.b16 %v4599
    %v4938 = vunpack.c.l.b16 %v4600
    %v4939 = vunpack.c.h.b16 %v4600
    %v4940 = vunpack.c.l.b16 %v4601
    %v4941 = vunpack.c.h.b16 %v4601
    %v4942 = vunpack.c.l.b16 %v4602
    %v4943 = vunpack.c.h.b16 %v4602
    %v4944 = vunpack.c.l.b16 %v4603
    %v4945 = vunpack.c.h.b16 %v4603
    %v4946 = vunpack.c.l.b16 %v4604
    %v4947 = vunpack.c.h.b16 %v4604
    %v4948 = vunpack.c.l.b16 %v4605
    %v4949 = vunpack.c.h.b16 %v4605
    %v4950 = vunpack.c.l.b16 %v4606
    %v4951 = vunpack.c.h.b16 %v4606
    %v4952 = vunpack.c.l.b16 %v4607
    %v4953 = vunpack.c.h.b16 %v4607
    %v4954 = vunpack.c.l.b16 %v4608
    %v4955 = vunpack.c.h.b16 %v4608
    %v4956 = vunpack.c.l.b16 %v4609
    %v4957 = vunpack.c.h.b16 %v4609
    %v4958 = vunpack.c.l.b16 %v4610
    %v4959 = vunpack.c.h.b16 %v4610
    %v4960 = vunpack.c.l.b16 %v4611
    %v4961 = vunpack.c.h.b16 %v4611
    %v4962 = vunpack.c.l.b16 %v4612
    %v4963 = vunpack.c.h.b16 %v4612
    %v4964 = vunpack.c.l.b16 %v4613
    %v4965 = vunpack.c.h.b16 %v4613
    %v4966 = vunpack.c.l.b16 %v4614
    %v4967 = vunpack.c.h.b16 %v4614
    %v4968 = vunpack.c.l.b16 %v4615
    %v4969 = vunpack.c.h.b16 %v4615
    %v4970 = vunpack.c.l.b16 %v4616
    %v4971 = vunpack.c.h.b16 %v4616
    %v4972 = vunpack.c.l.b16 %v4617
    %v4973 = vunpack.c.h.b16 %v4617
    %v4974 = vunpack.c.l.b16 %v4618
    %v4975 = vunpack.c.h.b16 %v4618
    %v4976 = vunpack.c.l.b16 %v4619
    %v4977 = vunpack.c.h.b16 %v4619
    %v4978 = vunpack.c.l.b16 %v4620
    %v4979 = vunpack.c.h.b16 %v4620
    %v4980 = vunpack.c.l.b16 %v4621
    %v4981 = vunpack.c.h.b16 %v4621
    %v4982 = vunpack.c.l.b16 %v4622
    %v4983 = vunpack.c.h.b16 %v4622
    %v4984 = vunpack.c.l.b16 %v4623
    %v4985 = vunpack.c.h.b16 %v4623
    %v4986 = vunpack.c.l.b16 %v4624
    %v4987 = vunpack.c.h.b16 %v4624
    %v4988 = vunpack.c.l.b16 %v4625
    %v4989 = vunpack.c.h.b16 %v4625
    %v4990 = vunpack.c.l.b16 %v4626
    %v4991 = vunpack.c.h.b16 %v4626
    %v4992 = vunpack.c.l.b16 %v4627
    %v4993 = vunpack.c.h.b16 %v4627
    %v4994 = vunpack.c.l.b16 %v4628
    %v4995 = vunpack.c.h.b16 %v4628
    %v4996 = vunpack.c.l.b16 %v4629
    %v4997 = vunpack.c.h.b16 %v4629
    %v4998 = vunpack.c.l.b16 %v4630
    %v4999 = vunpack.c.h.b16 %v4630
    %v5000 = vunpack.c.l.b16 %v4631
    %v5001 = vunpack.c.h.b16 %v4631
    %v5002 = vunpack.c.l.b16 %v4632
    %v5003 = vunpack.c.h.b16 %v4632
    %v5004 = vunpack.c.l.b16 %v4633
    %v5005 = vunpack.c.h.b16 %v4633
    %v5006 = vunpack.c.l.b16 %v4634
    %v5007 = vunpack.c.h.b16 %v4634
    %v5008 = vunpack.c.l.b16 %v4635
    %v5009 = vunpack.c.h.b16 %v4635
    %v5010 = vunpack.c.l.b16 %v4636
    %v5011 = vunpack.c.h.b16 %v4636
    %v5012 = vunpack.c.l.b16 %v4637
    %v5013 = vunpack.c.h.b16 %v4637
    %v5014 = vunpack.c.l.b16 %v4638
    %v5015 = vunpack.c.h.b16 %v4638
    %v5016 = vunpack.c.l.b16 %v4639
    %v5017 = vunpack.c.h.b16 %v4639
    %v5018 = vunpack.c.l.b16 %v4640
    %v5019 = vunpack.c.h.b16 %v4640
    %v5020 = vunpack.c.l.b16 %v4641
    %v5021 = vunpack.c.h.b16 %v4641
    %v5022 = vunpack.c.l.b16 %v4642
    %v5023 = vunpack.c.h.b16 %v4642
    %v5024 = vunpack.c.l.b16 %v4643
    %v5025 = vunpack.c.h.b16 %v4643
    %v5026 = vunpack.c.l.b16 %v4644
    %v5027 = vunpack.c.h.b16 %v4644
    %v5028 = vunpack.c.l.b16 %v4645
    %v5029 = vunpack.c.h.b16 %v4645
    %v5030 = vunpack.c.l.b16 %v4646
    %v5031 = vunpack.c.h.b16 %v4646
    %v5032 = vunpack.c.l.b16 %v4647
    %v5033 = vunpack.c.h.b16 %v4647
    %v5034 = vunpack.c.l.b16 %v4648
    %v5035 = vunpack.c.h.b16 %v4648
    %v5036 = vunpack.c.l.b16 %v4649
    %v5037 = vunpack.c.h.b16 %v4649
    %v5038 = vunpack.c.l.b16 %v4650
    %v5039 = vunpack.c.h.b16 %v4650
    %v5040 = vunpack.c.l.b16 %v4651
    %v5041 = vunpack.c.h.b16 %v4651
    %v5042 = vpack.c.b16 %v4788, %v4786
    %v5043 = vpack.c.b16 %v4789, %v4787
    %v5044 = vpack.c.b16 %v4792, %v4790
    %v5045 = vpack.c.b16 %v4793, %v4791
    %v5046 = vpack.c.b16 %v4796, %v4794
    %v5047 = vpack.c.b16 %v4797, %v4795
    %v5048 = vpack.c.b16 %v4800, %v4798
    %v5049 = vpack.c.b16 %v4801, %v4799
    %v5050 = vpack.c.b16 %v4804, %v4802
    %v5051 = vpack.c.b16 %v4805, %v4803
    %v5052 = vpack.c.b16 %v4808, %v4806
    %v5053 = vpack.c.b16 %v4809, %v4807
    %v5054 = vpack.c.b16 %v4812, %v4810
    %v5055 = vpack.c.b16 %v4813, %v4811
    %v5056 = vpack.c.b16 %v4816, %v4814
    %v5057 = vpack.c.b16 %v4817, %v4815
    %v5058 = vpack.c.b16 %v4820, %v4818
    %v5059 = vpack.c.b16 %v4821, %v4819
    %v5060 = vpack.c.b16 %v4824, %v4822
    %v5061 = vpack.c.b16 %v4825, %v4823
    %v5062 = vpack.c.b16 %v4828, %v4826
    %v5063 = vpack.c.b16 %v4829, %v4827
    %v5064 = vpack.c.b16 %v4832, %v4830
    %v5065 = vpack.c.b16 %v4833, %v4831
    %v5066 = vpack.c.b16 %v4836, %v4834
    %v5067 = vpack.c.b16 %v4837, %v4835
    %v5068 = vpack.c.b16 %v4840, %v4838
    %v5069 = vpack.c.b16 %v4841, %v4839
    %v5070 = vpack.c.b16 %v4844, %v4842
    %v5071 = vpack.c.b16 %v4845, %v4843
    %v5072 = vpack.c.b16 %v4848, %v4846
    %v5073 = vpack.c.b16 %v4849, %v4847
    %v5074 = vpack.c.b16 %v4852, %v4850
    %v5075 = vpack.c.b16 %v4853, %v4851
    %v5076 = vpack.c.b16 %v4856, %v4854
    %v5077 = vpack.c.b16 %v4857, %v4855
    %v5078 = vpack.c.b16 %v4860, %v4858
    %v5079 = vpack.c.b16 %v4861, %v4859
    %v5080 = vpack.c.b16 %v4864, %v4862
    %v5081 = vpack.c.b16 %v4865, %v4863
    %v5082 = vpack.c.b16 %v4868, %v4866
    %v5083 = vpack.c.b16 %v4869, %v4867
    %v5084 = vpack.c.b16 %v4872, %v4870
    %v5085 = vpack.c.b16 %v4873, %v4871
    %v5086 = vpack.c.b16 %v4876, %v4874
    %v5087 = vpack.c.b16 %v4877, %v4875
    %v5088 = vpack.c.b16 %v4880, %v4878
    %v5089 = vpack.c.b16 %v4881, %v4879
    %v5090 = vpack.c.b16 %v4884, %v4882
    %v5091 = vpack.c.b16 %v4885, %v4883
    %v5092 = vpack.c.b16 %v4888, %v4886
    %v5093 = vpack.c.b16 %v4889, %v4887
    %v5094 = vpack.c.b16 %v4892, %v4890
    %v5095 = vpack.c.b16 %v4893, %v4891
    %v5096 = vpack.c.b16 %v4896, %v4894
    %v5097 = vpack.c.b16 %v4897, %v4895
    %v5098 = vpack.c.b16 %v4900, %v4898
    %v5099 = vpack.c.b16 %v4901, %v4899
    %v5100 = vpack.c.b16 %v4904, %v4902
    %v5101 = vpack.c.b16 %v4905, %v4903
    %v5102 = vpack.c.b16 %v4908, %v4906
    %v5103 = vpack.c.b16 %v4909, %v4907
    %v5104 = vpack.c.b16 %v4912, %v4910
    %v5105 = vpack.c.b16 %v4913, %v4911
    %v5106 = vpack.c.b16 %v4916, %v4914
    %v5107 = vpack.c.b16 %v4917, %v4915
    %v5108 = vpack.c.b16 %v4920, %v4918
    %v5109 = vpack.c.b16 %v4921, %v4919
    %v5110 = vpack.c.b16 %v4924, %v4922
    %v5111 = vpack.c.b16 %v4925, %v4923
    %v5112 = vpack.c.b16 %v4928, %v4926
    %v5113 = vpack.c.b16 %v4929, %v4927
    %v5114 = vpack.c.b16 %v4932, %v4930
    %v5115 = vpack.c.b16 %v4933, %v4931
    %v5116 = vpack.c.b16 %v4936, %v4934
    %v5117 = vpack.c.b16 %v4937, %v4935
    %v5118 = vpack.c.b16 %v4940, %v4938
    %v5119 = vpack.c.b16 %v4941, %v4939
    %v5120 = vpack.c.b16 %v4944, %v4942
    %v5121 = vpack.c.b16 %v4945, %v4943
    %v5122 = vpack.c.b16 %v4948, %v4946
    %v5123 = vpack.c.b16 %v4949, %v4947
    %v5124 = vpack.c.b16 %v4952, %v4950
    %v5125 = vpack.c.b16 %v4953, %v4951
    %v5126 = vpack.c.b16 %v4956, %v4954
    %v5127 = vpack.c.b16 %v4957, %v4955
    %v5128 = vpack.c.b16 %v4960, %v4958
    %v5129 = vpack.c.b16 %v4961, %v4959
    %v5130 = vpack.c.b16 %v4964, %v4962
    %v5131 = vpack.c.b16 %v4965, %v4963
    %v5132 = vpack.c.b16 %v4968, %v4966
    %v5133 = vpack.c.b16 %v4969, %v4967
    %v5134 = vpack.c.b16 %v4972, %v4970
    %v5135 = vpack.c.b16 %v4973, %v4971
    %v5136 = vpack.c.b16 %v4976, %v4974
    %v5137 = vpack.c.b16 %v4977, %v4975
    %v5138 = vpack.c.b16 %v4980, %v4978
    %v5139 = vpack.c.b16 %v4981, %v4979
    %v5140 = vpack.c.b16 %v4984, %v4982
    %v5141 = vpack.c.b16 %v4985, %v4983
    %v5142 = vpack.c.b16 %v4988, %v4986
    %v5143 = vpack.c.b16 %v4989, %v4987
    %v5144 = vpack.c.b16 %v4992, %v4990
    %v5145 = vpack.c.b16 %v4993, %v4991
    %v5146 = vpack.c.b16 %v4996, %v4994
    %v5147 = vpack.c.b16 %v4997, %v4995
    %v5148 = vpack.c.b16 %v5000, %v4998
    %v5149 = vpack.c.b16 %v5001, %v4999
    %v5150 = vpack.c.b16 %v5004, %v5002
    %v5151 = vpack.c.b16 %v5005, %v5003
    %v5152 = vpack.c.b16 %v5008, %v5006
    %v5153 = vpack.c.b16 %v5009, %v5007
    %v5154 = vpack.c.b16 %v5012, %v5010
    %v5155 = vpack.c.b16 %v5013, %v5011
    %v5156 = vpack.c.b16 %v5016, %v5014
    %v5157 = vpack.c.b16 %v5017, %v5015
    %v5158 = vpack.c.b16 %v5020, %v5018
    %v5159 = vpack.c.b16 %v5021, %v5019
    %v5160 = vpack.c.b16 %v5024, %v5022
    %v5161 = vpack.c.b16 %v5025, %v5023
    %v5162 = vpack.c.b16 %v5028, %v5026
    %v5163 = vpack.c.b16 %v5029, %v5027
    %v5164 = vpack.c.b16 %v5032, %v5030
    %v5165 = vpack.c.b16 %v5033, %v5031
    %v5166 = vpack.c.b16 %v5036, %v5034
    %v5167 = vpack.c.b16 %v5037, %v5035
    %v5168 = vpack.c.b16 %v5040, %v5038
    %v5169 = vpack.c.b16 %v5041, %v5039
    %5298 = vmatpush.bf16.msra.mxu0 %v5056
    %5299 = vmatpush.bf16.msra.mxu0 %v5054
    %5300 = vmatpush.bf16.msra.mxu0 %v5052
    %5301 = vmatpush.bf16.msra.mxu0 %v5050
    %5302 = vmatpush.bf16.msra.mxu0 %v5048
    %5303 = vmatpush.bf16.msra.mxu0 %v5046
    %5304 = vmatpush.bf16.msra.mxu0 %v5044
    %5305 = vmatpush.bf16.msra.mxu0 %v5042
    %5306 = vmatmul.bf16.gmra.mxu0 %v4494
    %v5307 = vpop.f32.mrf.mxu0
    %v5308 = vadd.f32 %v4654, %v5307
    %v5309 = vpop.f32.mrf.mxu0
    %5310 = vdwg.mxu0
    %5311 = vmatpush.bf16.msra.mxu0 %v5072
    %5312 = vmatpush.bf16.msra.mxu0 %v5070
    %5313 = vmatpush.bf16.msra.mxu0 %v5068
    %5314 = vmatpush.bf16.msra.mxu0 %v5066
    %5315 = vmatpush.bf16.msra.mxu0 %v5064
    %5316 = vmatpush.bf16.msra.mxu0 %v5062
    %5317 = vmatpush.bf16.msra.mxu0 %v5060
    %5318 = vmatpush.bf16.msra.mxu0 %v5058
    %5319 = vmatmul.bf16.gmra.mxu0 %v4498
    %v5320 = vpop.f32.mrf.mxu0
    %v5321 = vadd.f32 %v5308, %v5320
    %v5322 = vpop.f32.mrf.mxu0
    %5323 = vdwg.mxu0
    %5324 = vmatpush.bf16.msra.mxu0 %v5088
    %5325 = vmatpush.bf16.msra.mxu0 %v5086
    %5326 = vmatpush.bf16.msra.mxu0 %v5084
    %5327 = vmatpush.bf16.msra.mxu0 %v5082
    %5328 = vmatpush.bf16.msra.mxu0 %v5080
    %5329 = vmatpush.bf16.msra.mxu0 %v5078
    %5330 = vmatpush.bf16.msra.mxu0 %v5076
    %5331 = vmatpush.bf16.msra.mxu0 %v5074
    %5332 = vmatmul.bf16.gmra.mxu0 %v4502
    %v5333 = vpop.f32.mrf.mxu0
    %v5334 = vadd.f32 %v5321, %v5333
    %v5335 = vpop.f32.mrf.mxu0
    %5336 = vdwg.mxu0
    %5337 = vmatpush.bf16.msra.mxu0 %v5104
    %5338 = vmatpush.bf16.msra.mxu0 %v5102
    %5339 = vmatpush.bf16.msra.mxu0 %v5100
    %5340 = vmatpush.bf16.msra.mxu0 %v5098
    %5341 = vmatpush.bf16.msra.mxu0 %v5096
    %5342 = vmatpush.bf16.msra.mxu0 %v5094
    %5343 = vmatpush.bf16.msra.mxu0 %v5092
    %5344 = vmatpush.bf16.msra.mxu0 %v5090
    %5345 = vmatmul.bf16.gmra.mxu0 %v4506
    %v5346 = vpop.f32.mrf.mxu0
    %v5347 = vadd.f32 %v5334, %v5346
    %v5348 = vpop.f32.mrf.mxu0
    %5349 = vdwg.mxu0
    %5350 = vmatpush.bf16.msra.mxu0 %v5120
    %5351 = vmatpush.bf16.msra.mxu0 %v5118
    %5352 = vmatpush.bf16.msra.mxu0 %v5116
    %5353 = vmatpush.bf16.msra.mxu0 %v5114
    %5354 = vmatpush.bf16.msra.mxu0 %v5112
    %5355 = vmatpush.bf16.msra.mxu0 %v5110
    %5356 = vmatpush.bf16.msra.mxu0 %v5108
    %5357 = vmatpush.bf16.msra.mxu0 %v5106
    %5358 = vmatmul.bf16.gmra.mxu0 %v4510
    %v5359 = vpop.f32.mrf.mxu0
    %v5360 = vadd.f32 %v5347, %v5359
    %v5361 = vpop.f32.mrf.mxu0
    %5362 = vdwg.mxu0
    %5363 = vmatpush.bf16.msra.mxu0 %v5136
    %5364 = vmatpush.bf16.msra.mxu0 %v5134
    %5365 = vmatpush.bf16.msra.mxu0 %v5132
    %5366 = vmatpush.bf16.msra.mxu0 %v5130
    %5367 = vmatpush.bf16.msra.mxu0 %v5128
    %5368 = vmatpush.bf16.msra.mxu0 %v5126
    %5369 = vmatpush.bf16.msra.mxu0 %v5124
    %5370 = vmatpush.bf16.msra.mxu0 %v5122
    %5371 = vmatmul.bf16.gmra.mxu0 %v4514
    %v5372 = vpop.f32.mrf.mxu0
    %v5373 = vadd.f32 %v5360, %v5372
    %v5374 = vpop.f32.mrf.mxu0
    %5375 = vdwg.mxu0
    %5376 = vmatpush.bf16.msra.mxu0 %v5152
    %5377 = vmatpush.bf16.msra.mxu0 %v5150
    %5378 = vmatpush.bf16.msra.mxu0 %v5148
    %5379 = vmatpush.bf16.msra.mxu0 %v5146
    %5380 = vmatpush.bf16.msra.mxu0 %v5144
    %5381 = vmatpush.bf16.msra.mxu0 %v5142
    %5382 = vmatpush.bf16.msra.mxu0 %v5140
    %5383 = vmatpush.bf16.msra.mxu0 %v5138
    %5384 = vmatmul.bf16.gmra.mxu0 %v4518
    %v5385 = vpop.f32.mrf.mxu0
    %v5386 = vadd.f32 %v5373, %v5385
    %v5387 = vpop.f32.mrf.mxu0
    %5388 = vdwg.mxu0
    %5389 = vmatpush.bf16.msra.mxu0 %v5168
    %5390 = vmatpush.bf16.msra.mxu0 %v5166
    %5391 = vmatpush.bf16.msra.mxu0 %v5164
    %5392 = vmatpush.bf16.msra.mxu0 %v5162
    %5393 = vmatpush.bf16.msra.mxu0 %v5160
    %5394 = vmatpush.bf16.msra.mxu0 %v5158
    %5395 = vmatpush.bf16.msra.mxu0 %v5156
    %5396 = vmatpush.bf16.msra.mxu0 %v5154
    %5397 = vmatmul.bf16.gmra.mxu0 %v4522
    %v5398 = vpop.f32.mrf.mxu0
    %v5399 = vadd.f32 %v5386, %v5398
    %v5400 = vpop.f32.mrf.mxu0
    %5401 = vdwg.mxu0
    %5402 = vmatpush.bf16.msra.mxu0 %v5057
    %5403 = vmatpush.bf16.msra.mxu0 %v5055
    %5404 = vmatpush.bf16.msra.mxu0 %v5053
    %5405 = vmatpush.bf16.msra.mxu0 %v5051
    %5406 = vmatpush.bf16.msra.mxu0 %v5049
    %5407 = vmatpush.bf16.msra.mxu0 %v5047
    %5408 = vmatpush.bf16.msra.mxu0 %v5045
    %5409 = vmatpush.bf16.msra.mxu0 %v5043
    %5410 = vmatmul.bf16.gmra.mxu0 %v4494
    %v5411 = vpop.f32.mrf.mxu0
    %v5412 = vadd.f32 %v4655, %v5411
    %v5413 = vpop.f32.mrf.mxu0
    %5414 = vdwg.mxu0
    %5415 = vmatpush.bf16.msra.mxu0 %v5073
    %5416 = vmatpush.bf16.msra.mxu0 %v5071
    %5417 = vmatpush.bf16.msra.mxu0 %v5069
    %5418 = vmatpush.bf16.msra.mxu0 %v5067
    %5419 = vmatpush.bf16.msra.mxu0 %v5065
    %5420 = vmatpush.bf16.msra.mxu0 %v5063
    %5421 = vmatpush.bf16.msra.mxu0 %v5061
    %5422 = vmatpush.bf16.msra.mxu0 %v5059
    %5423 = vmatmul.bf16.gmra.mxu0 %v4498
    %v5424 = vpop.f32.mrf.mxu0
    %v5425 = vadd.f32 %v5412, %v5424
    %v5426 = vpop.f32.mrf.mxu0
    %5427 = vdwg.mxu0
    %5428 = vmatpush.bf16.msra.mxu0 %v5089
    %5429 = vmatpush.bf16.msra.mxu0 %v5087
    %5430 = vmatpush.bf16.msra.mxu0 %v5085
    %5431 = vmatpush.bf16.msra.mxu0 %v5083
    %5432 = vmatpush.bf16.msra.mxu0 %v5081
    %5433 = vmatpush.bf16.msra.mxu0 %v5079
    %5434 = vmatpush.bf16.msra.mxu0 %v5077
    %5435 = vmatpush.bf16.msra.mxu0 %v5075
    %5436 = vmatmul.bf16.gmra.mxu0 %v4502
    %v5437 = vpop.f32.mrf.mxu0
    %v5438 = vadd.f32 %v5425, %v5437
    %v5439 = vpop.f32.mrf.mxu0
    %5440 = vdwg.mxu0
    %5441 = vmatpush.bf16.msra.mxu0 %v5105
    %5442 = vmatpush.bf16.msra.mxu0 %v5103
    %5443 = vmatpush.bf16.msra.mxu0 %v5101
    %5444 = vmatpush.bf16.msra.mxu0 %v5099
    %5445 = vmatpush.bf16.msra.mxu0 %v5097
    %5446 = vmatpush.bf16.msra.mxu0 %v5095
    %5447 = vmatpush.bf16.msra.mxu0 %v5093
    %5448 = vmatpush.bf16.msra.mxu0 %v5091
    %5449 = vmatmul.bf16.gmra.mxu0 %v4506
    %v5450 = vpop.f32.mrf.mxu0
    %v5451 = vadd.f32 %v5438, %v5450
    %v5452 = vpop.f32.mrf.mxu0
    %5453 = vdwg.mxu0
    %5454 = vmatpush.bf16.msra.mxu0 %v5121
    %5455 = vmatpush.bf16.msra.mxu0 %v5119
    %5456 = vmatpush.bf16.msra.mxu0 %v5117
    %5457 = vmatpush.bf16.msra.mxu0 %v5115
    %5458 = vmatpush.bf16.msra.mxu0 %v5113
    %5459 = vmatpush.bf16.msra.mxu0 %v5111
    %5460 = vmatpush.bf16.msra.mxu0 %v5109
    %5461 = vmatpush.bf16.msra.mxu0 %v5107
    %5462 = vmatmul.bf16.gmra.mxu0 %v4510
    %v5463 = vpop.f32.mrf.mxu0
    %v5464 = vadd.f32 %v5451, %v5463
    %v5465 = vpop.f32.mrf.mxu0
    %5466 = vdwg.mxu0
    %5467 = vmatpush.bf16.msra.mxu0 %v5137
    %5468 = vmatpush.bf16.msra.mxu0 %v5135
    %5469 = vmatpush.bf16.msra.mxu0 %v5133
    %5470 = vmatpush.bf16.msra.mxu0 %v5131
    %5471 = vmatpush.bf16.msra.mxu0 %v5129
    %5472 = vmatpush.bf16.msra.mxu0 %v5127
    %5473 = vmatpush.bf16.msra.mxu0 %v5125
    %5474 = vmatpush.bf16.msra.mxu0 %v5123
    %5475 = vmatmul.bf16.gmra.mxu0 %v4514
    %v5476 = vpop.f32.mrf.mxu0
    %v5477 = vadd.f32 %v5464, %v5476
    %v5478 = vpop.f32.mrf.mxu0
    %5479 = vdwg.mxu0
    %5480 = vmatpush.bf16.msra.mxu0 %v5153
    %5481 = vmatpush.bf16.msra.mxu0 %v5151
    %5482 = vmatpush.bf16.msra.mxu0 %v5149
    %5483 = vmatpush.bf16.msra.mxu0 %v5147
    %5484 = vmatpush.bf16.msra.mxu0 %v5145
    %5485 = vmatpush.bf16.msra.mxu0 %v5143
    %5486 = vmatpush.bf16.msra.mxu0 %v5141
    %5487 = vmatpush.bf16.msra.mxu0 %v5139
    %5488 = vmatmul.bf16.gmra.mxu0 %v4518
    %v5489 = vpop.f32.mrf.mxu0
    %v5490 = vadd.f32 %v5477, %v5489
    %v5491 = vpop.f32.mrf.mxu0
    %5492 = vdwg.mxu0
    %5493 = vmatpush.bf16.msra.mxu0 %v5169
    %5494 = vmatpush.bf16.msra.mxu0 %v5167
    %5495 = vmatpush.bf16.msra.mxu0 %v5165
    %5496 = vmatpush.bf16.msra.mxu0 %v5163
    %5497 = vmatpush.bf16.msra.mxu0 %v5161
    %5498 = vmatpush.bf16.msra.mxu0 %v5159
    %5499 = vmatpush.bf16.msra.mxu0 %v5157
    %5500 = vmatpush.bf16.msra.mxu0 %v5155
    %5501 = vmatmul.bf16.gmra.mxu0 %v4522
    %v5502 = vpop.f32.mrf.mxu0
    %v5503 = vadd.f32 %v5490, %v5502
    %v5504 = vpop.f32.mrf.mxu0
    %5505 = vdwg.mxu0
    %v5506 = vmax.f32 %v5399, 0.0
    %v5507 = vmax.f32 %v5503, 0.0
    %v5508 = vpack.c.bf16 %v5506, %v5506
    %v5509 = vpack.c.bf16 %v5507, %v5507
    %v5510 = vld [vmem:[%s7] sm:$0xf]
    %v5511 = vld [vmem:[%s7 + $0x4] sm:$0xf]
    %v5512 = vld [vmem:[%s7 + $0x8] sm:$0xf]
    %v5513 = vld [vmem:[%s7 + $0xc] sm:$0xf]
    %v5514 = vld [vmem:[%s7 + $0x10] sm:$0xf]
    %v5515 = vld [vmem:[%s7 + $0x14] sm:$0xf]
    %v5516 = vld [vmem:[%s7 + $0x18] sm:$0xf]
    %v5517 = vld [vmem:[%s7 + $0x1c] sm:$0xf]
    %v5518 = vld [vmem:[%s7 + $0x20] sm:$0xf]
    %v5519 = vld [vmem:[%s7 + $0x24] sm:$0xf]
    %v5520 = vld [vmem:[%s7 + $0x28] sm:$0xf]
    %v5521 = vld [vmem:[%s7 + $0x2c] sm:$0xf]
    %v5522 = vld [vmem:[%s7 + $0x30] sm:$0xf]
    %v5523 = vld [vmem:[%s7 + $0x34] sm:$0xf]
    %v5524 = vld [vmem:[%s7 + $0x38] sm:$0xf]
    %v5525 = vld [vmem:[%s7 + $0x3c] sm:$0xf]
    %v5526 = vld [vmem:[%s7 + $0x40] sm:$0xf]
    %v5527 = vld [vmem:[%s7 + $0x44] sm:$0xf]
    %v5528 = vld [vmem:[%s7 + $0x48] sm:$0xf]
    %v5529 = vld [vmem:[%s7 + $0x4c] sm:$0xf]
    %v5530 = vld [vmem:[%s7 + $0x50] sm:$0xf]
    %v5531 = vld [vmem:[%s7 + $0x54] sm:$0xf]
    %v5532 = vld [vmem:[%s7 + $0x58] sm:$0xf]
    %v5533 = vld [vmem:[%s7 + $0x5c] sm:$0xf]
    %v5534 = vld [vmem:[%s7 + $0x60] sm:$0xf]
    %v5535 = vld [vmem:[%s7 + $0x64] sm:$0xf]
    %v5536 = vld [vmem:[%s7 + $0x68] sm:$0xf]
    %v5537 = vld [vmem:[%s7 + $0x6c] sm:$0xf]
    %v5538 = vld [vmem:[%s7 + $0x70] sm:$0xf]
    %v5539 = vld [vmem:[%s7 + $0x74] sm:$0xf]
    %v5540 = vld [vmem:[%s7 + $0x78] sm:$0xf]
    %v5541 = vld [vmem:[%s7 + $0x7c] sm:$0xf]
    %v5542 = vld [vmem:[%s8] sm:$0x1]
    %v5544 = vperm.slane %v5542, 0
    %v5578 = vunpack.c.l.b16 %v5510
    %v5579 = vunpack.c.l.b16 %v5511
    %v5580 = vunpack.c.l.b16 %v5512
    %v5581 = vunpack.c.l.b16 %v5513
    %v5582 = vunpack.c.l.b16 %v5514
    %v5583 = vunpack.c.l.b16 %v5515
    %v5584 = vunpack.c.l.b16 %v5516
    %v5585 = vunpack.c.l.b16 %v5517
    %v5586 = vunpack.c.l.b16 %v5518
    %v5587 = vunpack.c.l.b16 %v5519
    %v5588 = vunpack.c.l.b16 %v5520
    %v5589 = vunpack.c.l.b16 %v5521
    %v5590 = vunpack.c.l.b16 %v5522
    %v5591 = vunpack.c.l.b16 %v5523
    %v5592 = vunpack.c.l.b16 %v5524
    %v5593 = vunpack.c.l.b16 %v5525
    %v5594 = vunpack.c.l.b16 %v5526
    %v5595 = vunpack.c.l.b16 %v5527
    %v5596 = vunpack.c.l.b16 %v5528
    %v5597 = vunpack.c.l.b16 %v5529
    %v5598 = vunpack.c.l.b16 %v5530
    %v5599 = vunpack.c.l.b16 %v5531
    %v5600 = vunpack.c.l.b16 %v5532
    %v5601 = vunpack.c.l.b16 %v5533
    %v5602 = vunpack.c.l.b16 %v5534
    %v5603 = vunpack.c.l.b16 %v5535
    %v5604 = vunpack.c.l.b16 %v5536
    %v5605 = vunpack.c.l.b16 %v5537
    %v5606 = vunpack.c.l.b16 %v5538
    %v5607 = vunpack.c.l.b16 %v5539
    %v5608 = vunpack.c.l.b16 %v5540
    %v5609 = vunpack.c.l.b16 %v5541
    %v5610 = vpack.c.b16 %v5579, %v5578
    %v5611 = vpack.c.b16 %v5581, %v5580
    %v5612 = vpack.c.b16 %v5583, %v5582
    %v5613 = vpack.c.b16 %v5585, %v5584
    %v5614 = vpack.c.b16 %v5587, %v5586
    %v5615 = vpack.c.b16 %v5589, %v5588
    %v5616 = vpack.c.b16 %v5591, %v5590
    %v5617 = vpack.c.b16 %v5593, %v5592
    %v5618 = vpack.c.b16 %v5595, %v5594
    %v5619 = vpack.c.b16 %v5597, %v5596
    %v5620 = vpack.c.b16 %v5599, %v5598
    %v5621 = vpack.c.b16 %v5601, %v5600
    %v5622 = vpack.c.b16 %v5603, %v5602
    %v5623 = vpack.c.b16 %v5605, %v5604
    %v5624 = vpack.c.b16 %v5607, %v5606
    %v5625 = vpack.c.b16 %v5609, %v5608
    %5642 = vmatpush.bf16.msra.mxu0 %v5617
    %5643 = vmatpush.bf16.msra.mxu0 %v5616
    %5644 = vmatpush.bf16.msra.mxu0 %v5615
    %5645 = vmatpush.bf16.msra.mxu0 %v5614
    %5646 = vmatpush.bf16.msra.mxu0 %v5613
    %5647 = vmatpush.bf16.msra.mxu0 %v5612
    %5648 = vmatpush.bf16.msra.mxu0 %v5611
    %5649 = vmatpush.bf16.msra.mxu0 %v5610
    %5650 = vmatmul.bf16.gmra.mxu0 %v5508
    %v5651 = vpop.f32.mrf.mxu0
    %v5652 = vadd.f32 %v5544, %v5651
    %v5653 = vpop.f32.mrf.mxu0
    %5654 = vdwg.mxu0
    %5655 = vmatpush.bf16.msra.mxu0 %v5625
    %5656 = vmatpush.bf16.msra.mxu0 %v5624
    %5657 = vmatpush.bf16.msra.mxu0 %v5623
    %5658 = vmatpush.bf16.msra.mxu0 %v5622
    %5659 = vmatpush.bf16.msra.mxu0 %v5621
    %5660 = vmatpush.bf16.msra.mxu0 %v5620
    %5661 = vmatpush.bf16.msra.mxu0 %v5619
    %5662 = vmatpush.bf16.msra.mxu0 %v5618
    %5663 = vmatmul.bf16.gmra.mxu0 %v5509
    %v5664 = vpop.f32.mrf.mxu0
    %v5665 = vadd.f32 %v5652, %v5664
    %v5666 = vpop.f32.mrf.mxu0
    %5667 = vdwg.mxu0
    %5668 = vst [vmem:[#allocation5] sm:$0xff] %v5665
    // Predicated region
    $region42: #{tpu_custom_call.1} parent=1 // pred_check
      _
    $region43: #{tpu_custom_call.1} parent=1 // pred_check_branch
      %5670 = sbr.rel (0) target = $region45
    $region44: #{tpu_custom_call.1} parent=1 // pred_region
      %5672 = vsyncadd [#allocation4], 0
      %s5674 = sshll.u32 [#allocation5], 4
      %s5675 = int_to_ptr.vmem [resolvable:$true] %s5674
      %s5676 = sshll.u32 %s9, 4
      %s5677 = int_to_ptr.hbm [resolvable:$true] %s5676
      %5679 = dma.vmem_to_hbm [thread:$0]  %s5675, 128, %s5677, [#allocation4]
    $region45: #{tpu_custom_call.1} parent=1 // pred_fallthru
      _
    // Predicated region
    $region46: #{tpu_custom_call.1} parent=1 // pred_check
      _
    $region47: #{tpu_custom_call.1} parent=1 // pred_check_branch
      %5681 = sbr.rel (0) target = $region49
    $region48: #{tpu_custom_call.1} parent=1 // pred_region
      %5683 = dma.done [#allocation4], 128
    $region49: #{tpu_custom_call.1} parent=1 // pred_fallthru
      _
    %5684 = vsyncpa [#allocation3], 1
    %5685 = vsyncpa [#allocation4], 1

</llo_original>
